<compile_context>
chip_gen: v7x
topology: tpu7x:2x2x1
jax: 0.10.0
libtpu: 0.0.40
codegen_flags: <defaults>
</compile_context>

<pallas_src>
import jax
import jax.numpy as jnp
from jax.experimental import pallas as pl
from jax.experimental.pallas import tpu as pltpu


def _phase1_kernel(adj_ref, x2s_ref, x1_ref, wf_ref, bf_ref, y1_ref, acc_ref):
    """y1 row block = x1 + adj @ (x2 @ Wf) + bf, accumulated over the k axis."""
    k = pl.program_id(1)

    @pl.when(k == 0)
    def _():
        acc_ref[...] = jnp.zeros_like(acc_ref)

    # (tk, D) @ (D, D): bf16 MXU, f32 accumulate, re-narrow so the big
    # adjacency matmul also runs at the bf16 MXU rate.
    h = jnp.dot(x2s_ref[...].astype(jnp.bfloat16), wf_ref[...],
                preferred_element_type=jnp.float32).astype(jnp.bfloat16)
    acc_ref[...] += jnp.dot(adj_ref[...], h, preferred_element_type=jnp.float32)

    @pl.when(k == pl.num_programs(1) - 1)
    def _():
        y1_ref[...] = (x1_ref[...] + acc_ref[...] + bf_ref[...]).astype(y1_ref.dtype)


def _phase2_kernel(adj_ref, y1s_ref, y1_ref, x2_ref, wg_ref, bg_ref, y_ref, acc_ref):
    """Final (tm, 2D) block = [ y1 | x2 + adj @ (y1 @ Wg) + bg ] (in-kernel concat)."""
    k = pl.program_id(1)
    d = y1_ref.shape[1]

    @pl.when(k == 0)
    def _():
        acc_ref[...] = jnp.zeros_like(acc_ref)

    h = jnp.dot(y1s_ref[...].astype(jnp.bfloat16), wg_ref[...],
                preferred_element_type=jnp.float32).astype(jnp.bfloat16)
    acc_ref[...] += jnp.dot(adj_ref[...], h, preferred_element_type=jnp.float32)

    @pl.when(k == pl.num_programs(1) - 1)
    def _():
        y_ref[:, :d] = y1_ref[...].astype(y_ref.dtype)
        y_ref[:, d:] = (x2_ref[...] + acc_ref[...] + bg_ref[...]).astype(y_ref.dtype)


def additive_coupling_forward(x, adj, wf, bf, wg, bg, *, tm=256, tk=256):
    """Forward pass of AdditiveCoupling with GCN-style Fm / Gm."""
    n, two_d = x.shape
    d = two_d // 2
    tm = min(tm, n)
    tk = min(tk, n)
    assert n % tm == 0 and n % tk == 0, "node count must be divisible by the tiles"
    assert d % 128 == 0, "per-half feature dim should be lane-dense (multiple of 128)"
    grid = (n // tm, n // tk)

    # bf16 MXU operands (the N^2 adjacency stream dominates HBM traffic);
    # residuals / biases / accumulation stay f32.
    adj_b = adj.astype(jnp.bfloat16)
    wf_b = wf.astype(jnp.bfloat16)
    wg_b = wg.astype(jnp.bfloat16)
    bf = bf.astype(jnp.float32)
    bg = bg.astype(jnp.float32)

    cparams = pltpu.CompilerParams(
        dimension_semantics=("parallel", "arbitrary"),
        vmem_limit_bytes=32 * 1024 * 1024,
    )

    adj_spec = pl.BlockSpec((tm, tk), lambda i, k: (i, k))
    w_spec = pl.BlockSpec((d, d), lambda i, k: (0, 0))      # pinned, DMA'd once
    b_spec = pl.BlockSpec((1, d), lambda i, k: (0, 0))      # pinned, DMA'd once

    flops_adj = 2 * n * n * d                       # adjacency matmul
    flops_xw = 2 * (n // tm) * n * d * d            # recomputed (src @ W) per row block

    # ---------------- Phase 1: y1 = x1 + adj @ (x2 @ Wf) + bf ----------------
    y1 = pl.pallas_call(
        _phase1_kernel,
        out_shape=jax.ShapeDtypeStruct((n, d), jnp.float32),
        grid=grid,
        in_specs=[
            adj_spec,
            pl.BlockSpec((tk, d), lambda i, k: (k, 1)),   # x2, streamed over rows k
            pl.BlockSpec((tm, d), lambda i, k: (i, 0)),   # x1, residual base
            w_spec,
            b_spec,
        ],
        out_specs=pl.BlockSpec((tm, d), lambda i, k: (i, 0)),
        scratch_shapes=[pltpu.VMEM((tm, d), jnp.float32)],
        compiler_params=cparams,
        cost_estimate=pl.CostEstimate(
            flops=flops_adj + flops_xw,
            transcendentals=0,
            bytes_accessed=adj_b.size * 2 + x.size * 4 + n * d * 4 + 2 * d * d + 4 * d,
        ),
    )(adj_b, x, x, wf_b, bf)

    # ------------- Phase 2: y = [ y1 | x2 + adj @ (y1 @ Wg) + bg ] -----------
    y = pl.pallas_call(
        _phase2_kernel,
        out_shape=jax.ShapeDtypeStruct((n, two_d), x.dtype),
        grid=grid,
        in_specs=[
            adj_spec,
            pl.BlockSpec((tk, d), lambda i, k: (k, 0)),   # y1, streamed over rows k
            pl.BlockSpec((tm, d), lambda i, k: (i, 0)),   # y1, pass-through (left half)
            pl.BlockSpec((tm, d), lambda i, k: (i, 1)),   # x2, residual base
            w_spec,
            b_spec,
        ],
        out_specs=pl.BlockSpec((tm, two_d), lambda i, k: (i, 0)),
        scratch_shapes=[pltpu.VMEM((tm, d), jnp.float32)],
        compiler_params=cparams,
        cost_estimate=pl.CostEstimate(
            flops=flops_adj + flops_xw,
            transcendentals=0,
            bytes_accessed=adj_b.size * 2 + 3 * n * d * 4 + n * two_d * 4 + 2 * d * d + 4 * d,
        ),
    )(adj_b, y1, y1, x, wg_b, bg)

    return y


def _reference_forward(x, adj, wf, bf, wg, bg):
    """Pure-JAX reference mirroring the kernel's mixed precision (bf16 MXU, f32 acc)."""
    n, two_d = x.shape
    d = two_d // 2
    x1, x2 = x[:, :d], x[:, d:]
    adj_b = adj.astype(jnp.bfloat16)
    h_f = jnp.dot(x2.astype(jnp.bfloat16), wf.astype(jnp.bfloat16),
                  preferred_element_type=jnp.float32).astype(jnp.bfloat16)
    y1 = x1 + jnp.dot(adj_b, h_f, preferred_element_type=jnp.float32) + bf
    h_g = jnp.dot(y1.astype(jnp.bfloat16), wg.astype(jnp.bfloat16),
                  preferred_element_type=jnp.float32).astype(jnp.bfloat16)
    y2 = x2 + jnp.dot(adj_b, h_g, preferred_element_type=jnp.float32) + bg
    return jnp.concatenate([y1, y2], axis=-1)


def _make_normalized_adj(key, n):
    # random symmetric graph with self-loops, sym-normalized: D^-1/2 A D^-1/2
    a = (jax.random.uniform(key, (n, n)) > 0.7).astype(jnp.float32)
    a = jnp.maximum(a, a.T)
    a = a + jnp.eye(n, dtype=jnp.float32)
    deg = a.sum(axis=1)
    dinv = 1.0 / jnp.sqrt(deg)
    return a * dinv[:, None] * dinv[None, :]


if __name__ == "__main__":
    key = jax.random.PRNGKey(0)
    k_x, k_adj, k_wf, k_bf, k_wg, k_bg = jax.random.split(key, 6)

    # Small but MXU-meaningful sizes: 128-aligned everywhere, 2 x 2 grid per phase.
    N = 512      # graph nodes (multiple of the 256 row / reduction tiles)
    D = 128      # per-half feature dim -> x has 2*D = 256 lane-dense features

    x = jax.random.normal(k_x, (N, 2 * D), dtype=jnp.float32)
    adj = _make_normalized_adj(k_adj, N)

    # Deterministic synthetic parameters for Fm / Gm (GCN-style linear layers).
    wf = jax.random.normal(k_wf, (D, D), dtype=jnp.float32) * (1.0 / jnp.sqrt(D))
    bf = jax.random.normal(k_bf, (1, D), dtype=jnp.float32) * 0.1
    wg = jax.random.normal(k_wg, (D, D), dtype=jnp.float32) * (1.0 / jnp.sqrt(D))
    bg = jax.random.normal(k_bg, (1, D), dtype=jnp.float32) * 0.1

    fwd = jax.jit(additive_coupling_forward)
    out = jax.block_until_ready(fwd(x, adj, wf, bf, wg, bg))

    ref = _reference_forward(x, adj, wf, bf, wg, bg)
    assert out.shape == (N, 2 * D)
    assert jnp.allclose(out, ref, atol=5e-3, rtol=5e-3), float(
        jnp.max(jnp.abs(out - ref)))

    print("KERNEL_OK")
</pallas_src>

<mosaic_0001>
module attributes {stable_mosaic.version = 11 : i64} {
  func.func @_phase1_kernel(%arg0: i32, %arg1: i32, %arg2: memref<256x256xbf16, #tpu.memory_space<vmem>>, %arg3: memref<256x128xf32, #tpu.memory_space<vmem>>, %arg4: memref<256x128xf32, #tpu.memory_space<vmem>>, %arg5: memref<128x128xbf16, #tpu.memory_space<vmem>>, %arg6: memref<1x128xf32, #tpu.memory_space<vmem>>, %arg7: memref<256x128xf32, #tpu.memory_space<vmem>>, %arg8: memref<256x128xf32, #tpu.memory_space<vmem>>) attributes {dimension_semantics = [#tpu.dimension_semantics<parallel>, #tpu.dimension_semantics<arbitrary>], iteration_bounds = array<i64: 2, 2>, scalar_prefetch = 0 : i64, scratch_operands = 1 : i64, tpu.core_type = #tpu.core_type<tc>, window_params = [{transform_indices = @transform_0, window_bounds = array<i64: 256, 256>}, {transform_indices = @transform_1, window_bounds = array<i64: 256, 128>}, {transform_indices = @transform_2, window_bounds = array<i64: 256, 128>}, {pipeline_mode = #tpu.pipeline_mode<synchronous>, transform_indices = @transform_3, window_bounds = array<i64: 128, 128>}, {pipeline_mode = #tpu.pipeline_mode<synchronous>, transform_indices = @transform_4, window_bounds = array<i64: 1, 128>}, {transform_indices = @transform_5, window_bounds = array<i64: 256, 128>}]} {
    %c0_i32 = arith.constant 0 : i32
    %0 = arith.cmpi eq, %arg1, %c0_i32 : i32
    %1 = arith.extui %0 : i1 to i32
    %c0_i32_0 = arith.constant 0 : i32
    %2 = arith.cmpi ne, %1, %c0_i32_0 : i32
    scf.if %2 {
      %cst_12 = arith.constant 0.000000e+00 : f32
      %16 = vector.broadcast %cst_12 : f32 to vector<256x128xf32>
      %c0_13 = arith.constant 0 : index
      %c0_14 = arith.constant 0 : index
      %17 = vector.load %arg8[%c0_13, %c0_14] : memref<256x128xf32, #tpu.memory_space<vmem>>, vector<256x128xf32>
      tpu.vector_store %arg8[%c0_13, %c0_14], %16 {strides = array<i32>} : memref<256x128xf32, #tpu.memory_space<vmem>>, vector<256x128xf32>,
    } else {
    }
    %c0 = arith.constant 0 : index
    %c0_1 = arith.constant 0 : index
    %3 = vector.load %arg3[%c0, %c0_1] : memref<256x128xf32, #tpu.memory_space<vmem>>, vector<256x128xf32>
    %4 = arith.truncf %3 : vector<256x128xf32> to vector<256x128xbf16>
    %c0_2 = arith.constant 0 : index
    %c0_3 = arith.constant 0 : index
    %5 = vector.load %arg5[%c0_2, %c0_3] : memref<128x128xbf16, #tpu.memory_space<vmem>>, vector<128x128xbf16>
    %cst = arith.constant dense<0.000000e+00> : vector<256x128xf32>
    %6 = tpu.matmul %4, %5, %cst {dimension_numbers = #tpu.dot_dimension_numbers<[1], [0], [0], [1], [0, 0, 1, 1], [], []>} : vector<256x128xbf16>, vector<128x128xbf16>, vector<256x128xf32> -> vector<256x128xf32>
    %7 = arith.truncf %6 : vector<256x128xf32> to vector<256x128xbf16>
    %c0_4 = arith.constant 0 : index
    %c0_5 = arith.constant 0 : index
    %8 = vector.load %arg8[%c0_4, %c0_5] : memref<256x128xf32, #tpu.memory_space<vmem>>, vector<256x128xf32>
    %c0_6 = arith.constant 0 : index
    %c0_7 = arith.constant 0 : index
    %9 = vector.load %arg2[%c0_6, %c0_7] : memref<256x256xbf16, #tpu.memory_space<vmem>>, vector<256x256xbf16>
    %cst_8 = arith.constant dense<0.000000e+00> : vector<256x128xf32>
    %10 = tpu.matmul %9, %7, %cst_8 {dimension_numbers = #tpu.dot_dimension_numbers<[1], [0], [0], [1], [0, 0, 1, 1], [], []>} : vector<256x256xbf16>, vector<256x128xbf16>, vector<256x128xf32> -> vector<256x128xf32>
    %11 = arith.addf %8, %10 : vector<256x128xf32>
    %c0_9 = arith.constant 0 : index
    %c0_10 = arith.constant 0 : index
    %12 = vector.load %arg8[%c0_9, %c0_10] : memref<256x128xf32, #tpu.memory_space<vmem>>, vector<256x128xf32>
    tpu.vector_store %arg8[%c0_9, %c0_10], %11 {strides = array<i32>} : memref<256x128xf32, #tpu.memory_space<vmem>>, vector<256x128xf32>,
    %c1_i32 = arith.constant 1 : i32
    %13 = arith.cmpi eq, %arg1, %c1_i32 : i32
    %14 = arith.extui %13 : i1 to i32
    %c0_i32_11 = arith.constant 0 : i32
    %15 = arith.cmpi ne, %14, %c0_i32_11 : i32
    scf.if %15 {
      %c0_12 = arith.constant 0 : index
      %c0_13 = arith.constant 0 : index
      %16 = vector.load %arg4[%c0_12, %c0_13] : memref<256x128xf32, #tpu.memory_space<vmem>>, vector<256x128xf32>
      %c0_14 = arith.constant 0 : index
      %c0_15 = arith.constant 0 : index
      %17 = vector.load %arg8[%c0_14, %c0_15] : memref<256x128xf32, #tpu.memory_space<vmem>>, vector<256x128xf32>
      %18 = arith.addf %16, %17 : vector<256x128xf32>
      %c0_16 = arith.constant 0 : index
      %c0_17 = arith.constant 0 : index
      %19 = vector.load %arg6[%c0_16, %c0_17] : memref<1x128xf32, #tpu.memory_space<vmem>>, vector<1x128xf32>
      %20 = vector.broadcast %19 : vector<1x128xf32> to vector<256x128xf32>
      %21 = arith.addf %18, %20 : vector<256x128xf32>
      %c0_18 = arith.constant 0 : index
      %c0_19 = arith.constant 0 : index
      %22 = vector.load %arg7[%c0_18, %c0_19] : memref<256x128xf32, #tpu.memory_space<vmem>>, vector<256x128xf32>
      tpu.vector_store %arg7[%c0_18, %c0_19], %21 {strides = array<i32>} : memref<256x128xf32, #tpu.memory_space<vmem>>, vector<256x128xf32>,
    } else {
    }
    return
  }
  func.func @transform_0(%arg0: i32, %arg1: i32) -> (i32, i32) {
    %c0_i32 = arith.constant 0 : i32
    return %arg0, %arg1 : i32, i32
  }
  func.func @transform_1(%arg0: i32, %arg1: i32) -> (i32, i32) {
    %c1_i32 = arith.constant 1 : i32
    %c0_i32 = arith.constant 0 : i32
    return %arg1, %c1_i32 : i32, i32
  }
  func.func @transform_2(%arg0: i32, %arg1: i32) -> (i32, i32) {
    %c0_i32 = arith.constant 0 : i32
    %c0_i32_0 = arith.constant 0 : i32
    return %arg0, %c0_i32 : i32, i32
  }
  func.func @transform_3(%arg0: i32, %arg1: i32) -> (i32, i32) {
    %c0_i32 = arith.constant 0 : i32
    %c0_i32_0 = arith.constant 0 : i32
    %c0_i32_1 = arith.constant 0 : i32
    return %c0_i32, %c0_i32_0 : i32, i32
  }
  func.func @transform_4(%arg0: i32, %arg1: i32) -> (i32, i32) {
    %c0_i32 = arith.constant 0 : i32
    %c0_i32_0 = arith.constant 0 : i32
    %c0_i32_1 = arith.constant 0 : i32
    return %c0_i32, %c0_i32_0 : i32, i32
  }
  func.func @transform_5(%arg0: i32, %arg1: i32) -> (i32, i32) {
    %c0_i32 = arith.constant 0 : i32
    %c0_i32_0 = arith.constant 0 : i32
    return %arg0, %c0_i32 : i32, i32
  }
}

module attributes {stable_mosaic.version = 11 : i64} {
  func.func @_phase2_kernel(%arg0: i32, %arg1: i32, %arg2: memref<256x256xbf16, #tpu.memory_space<vmem>>, %arg3: memref<256x128xf32, #tpu.memory_space<vmem>>, %arg4: memref<256x128xf32, #tpu.memory_space<vmem>>, %arg5: memref<256x128xf32, #tpu.memory_space<vmem>>, %arg6: memref<128x128xbf16, #tpu.memory_space<vmem>>, %arg7: memref<1x128xf32, #tpu.memory_space<vmem>>, %arg8: memref<256x256xf32, #tpu.memory_space<vmem>>, %arg9: memref<256x128xf32, #tpu.memory_space<vmem>>) attributes {dimension_semantics = [#tpu.dimension_semantics<parallel>, #tpu.dimension_semantics<arbitrary>], iteration_bounds = array<i64: 2, 2>, scalar_prefetch = 0 : i64, scratch_operands = 1 : i64, tpu.core_type = #tpu.core_type<tc>, window_params = [{transform_indices = @transform_0, window_bounds = array<i64: 256, 256>}, {transform_indices = @transform_1, window_bounds = array<i64: 256, 128>}, {transform_indices = @transform_2, window_bounds = array<i64: 256, 128>}, {transform_indices = @transform_3, window_bounds = array<i64: 256, 128>}, {pipeline_mode = #tpu.pipeline_mode<synchronous>, transform_indices = @transform_4, window_bounds = array<i64: 128, 128>}, {pipeline_mode = #tpu.pipeline_mode<synchronous>, transform_indices = @transform_5, window_bounds = array<i64: 1, 128>}, {transform_indices = @transform_6, window_bounds = array<i64: 256, 256>}]} {
    %c0_i32 = arith.constant 0 : i32
    %0 = arith.cmpi eq, %arg1, %c0_i32 : i32
    %1 = arith.extui %0 : i1 to i32
    %c0_i32_0 = arith.constant 0 : i32
    %2 = arith.cmpi ne, %1, %c0_i32_0 : i32
    scf.if %2 {
      %cst_12 = arith.constant 0.000000e+00 : f32
      %16 = vector.broadcast %cst_12 : f32 to vector<256x128xf32>
      %c0_13 = arith.constant 0 : index
      %c0_14 = arith.constant 0 : index
      %17 = vector.load %arg9[%c0_13, %c0_14] : memref<256x128xf32, #tpu.memory_space<vmem>>, vector<256x128xf32>
      tpu.vector_store %arg9[%c0_13, %c0_14], %16 {strides = array<i32>} : memref<256x128xf32, #tpu.memory_space<vmem>>, vector<256x128xf32>,
    } else {
    }
    %c0 = arith.constant 0 : index
    %c0_1 = arith.constant 0 : index
    %3 = vector.load %arg3[%c0, %c0_1] : memref<256x128xf32, #tpu.memory_space<vmem>>, vector<256x128xf32>
    %4 = arith.truncf %3 : vector<256x128xf32> to vector<256x128xbf16>
    %c0_2 = arith.constant 0 : index
    %c0_3 = arith.constant 0 : index
    %5 = vector.load %arg6[%c0_2, %c0_3] : memref<128x128xbf16, #tpu.memory_space<vmem>>, vector<128x128xbf16>
    %cst = arith.constant dense<0.000000e+00> : vector<256x128xf32>
    %6 = tpu.matmul %4, %5, %cst {dimension_numbers = #tpu.dot_dimension_numbers<[1], [0], [0], [1], [0, 0, 1, 1], [], []>} : vector<256x128xbf16>, vector<128x128xbf16>, vector<256x128xf32> -> vector<256x128xf32>
    %7 = arith.truncf %6 : vector<256x128xf32> to vector<256x128xbf16>
    %c0_4 = arith.constant 0 : index
    %c0_5 = arith.constant 0 : index
    %8 = vector.load %arg9[%c0_4, %c0_5] : memref<256x128xf32, #tpu.memory_space<vmem>>, vector<256x128xf32>
    %c0_6 = arith.constant 0 : index
    %c0_7 = arith.constant 0 : index
    %9 = vector.load %arg2[%c0_6, %c0_7] : memref<256x256xbf16, #tpu.memory_space<vmem>>, vector<256x256xbf16>
    %cst_8 = arith.constant dense<0.000000e+00> : vector<256x128xf32>
    %10 = tpu.matmul %9, %7, %cst_8 {dimension_numbers = #tpu.dot_dimension_numbers<[1], [0], [0], [1], [0, 0, 1, 1], [], []>} : vector<256x256xbf16>, vector<256x128xbf16>, vector<256x128xf32> -> vector<256x128xf32>
    %11 = arith.addf %8, %10 : vector<256x128xf32>
    %c0_9 = arith.constant 0 : index
    %c0_10 = arith.constant 0 : index
    %12 = vector.load %arg9[%c0_9, %c0_10] : memref<256x128xf32, #tpu.memory_space<vmem>>, vector<256x128xf32>
    tpu.vector_store %arg9[%c0_9, %c0_10], %11 {strides = array<i32>} : memref<256x128xf32, #tpu.memory_space<vmem>>, vector<256x128xf32>,
    %c1_i32 = arith.constant 1 : i32
    %13 = arith.cmpi eq, %arg1, %c1_i32 : i32
    %14 = arith.extui %13 : i1 to i32
    %c0_i32_11 = arith.constant 0 : i32
    %15 = arith.cmpi ne, %14, %c0_i32_11 : i32
    scf.if %15 {
      %c0_12 = arith.constant 0 : index
      %c0_13 = arith.constant 0 : index
      %16 = vector.load %arg4[%c0_12, %c0_13] : memref<256x128xf32, #tpu.memory_space<vmem>>, vector<256x128xf32>
      %c0_14 = arith.constant 0 : index
      %c0_15 = arith.constant 0 : index
      %17 = vector.load %arg8[%c0_14, %c0_15] : memref<256x256xf32, #tpu.memory_space<vmem>>, vector<256x128xf32>
      tpu.vector_store %arg8[%c0_14, %c0_15], %16 {strides = array<i32>} : memref<256x256xf32, #tpu.memory_space<vmem>>, vector<256x128xf32>,
      %c0_16 = arith.constant 0 : index
      %c0_17 = arith.constant 0 : index
      %18 = vector.load %arg5[%c0_16, %c0_17] : memref<256x128xf32, #tpu.memory_space<vmem>>, vector<256x128xf32>
      %c0_18 = arith.constant 0 : index
      %c0_19 = arith.constant 0 : index
      %19 = vector.load %arg9[%c0_18, %c0_19] : memref<256x128xf32, #tpu.memory_space<vmem>>, vector<256x128xf32>
      %20 = arith.addf %18, %19 : vector<256x128xf32>
      %c0_20 = arith.constant 0 : index
      %c0_21 = arith.constant 0 : index
      %21 = vector.load %arg7[%c0_20, %c0_21] : memref<1x128xf32, #tpu.memory_space<vmem>>, vector<1x128xf32>
      %22 = vector.broadcast %21 : vector<1x128xf32> to vector<256x128xf32>
      %23 = arith.addf %20, %22 : vector<256x128xf32>
      %c0_22 = arith.constant 0 : index
      %c128 = arith.constant 128 : index
      %24 = vector.load %arg8[%c0_22, %c128] : memref<256x256xf32, #tpu.memory_space<vmem>>, vector<256x128xf32>
      tpu.vector_store %arg8[%c0_22, %c128], %23 {strides = array<i32>} : memref<256x256xf32, #tpu.memory_space<vmem>>, vector<256x128xf32>,
    } else {
    }
    return
  }
  func.func @transform_0(%arg0: i32, %arg1: i32) -> (i32, i32) {
    %c0_i32 = arith.constant 0 : i32
    return %arg0, %arg1 : i32, i32
  }
  func.func @transform_1(%arg0: i32, %arg1: i32) -> (i32, i32) {
    %c0_i32 = arith.constant 0 : i32
    %c0_i32_0 = arith.constant 0 : i32
    return %arg1, %c0_i32 : i32, i32
  }
  func.func @transform_2(%arg0: i32, %arg1: i32) -> (i32, i32) {
    %c0_i32 = arith.constant 0 : i32
    %c0_i32_0 = arith.constant 0 : i32
    return %arg0, %c0_i32 : i32, i32
  }
  func.func @transform_3(%arg0: i32, %arg1: i32) -> (i32, i32) {
    %c1_i32 = arith.constant 1 : i32
    %c0_i32 = arith.constant 0 : i32
    return %arg0, %c1_i32 : i32, i32
  }
  func.func @transform_4(%arg0: i32, %arg1: i32) -> (i32, i32) {
    %c0_i32 = arith.constant 0 : i32
    %c0_i32_0 = arith.constant 0 : i32
    %c0_i32_1 = arith.constant 0 : i32
    return %c0_i32, %c0_i32_0 : i32, i32
  }
  func.func @transform_5(%arg0: i32, %arg1: i32) -> (i32, i32) {
    %c0_i32 = arith.constant 0 : i32
    %c0_i32_0 = arith.constant 0 : i32
    %c0_i32_1 = arith.constant 0 : i32
    return %c0_i32, %c0_i32_0 : i32, i32
  }
  func.func @transform_6(%arg0: i32, %arg1: i32) -> (i32, i32) {
    %c0_i32 = arith.constant 0 : i32
    %c0_i32_0 = arith.constant 0 : i32
    return %arg0, %c0_i32 : i32, i32
  }
}

</mosaic_0001>

<llo_original>
// kernel: additive_coupling_forward.2
$region0: #{additive_coupling_forward.2}
  #allocation0 [shape = 'u32[]', space=smem, size = 0x4, offset = 0x4, fixed_abs, tag = 'smem constant byte address 0x4 - core index']
  #allocation1 [shape = 'u32[144,128]{1,0:T(1,128)}', space=vmem, size = 0x12000, scoped, tag = 'internal scratch']
  #allocation2 [shape = 'f32[256,128]{1,0:T(8,128)}', space=vmem, size = 0x20000, scoped, tag = 'scratch operand']
  %s0 = inlined_call_operand.vmem [shape: bf16[512,512], index: 0, kind: input, shape index: {}]
  %s1 = inlined_call_operand.vmem [shape: f32[512,256], index: 1, kind: input, shape index: {}, may-alias: {1,2}]
  %s2 = inlined_call_operand.vmem [shape: f32[512,256], index: 2, kind: input, shape index: {}, may-alias: {1,2}]
  %s3 = inlined_call_operand.vmem [shape: bf16[128,128], index: 3, kind: input, shape index: {}]
  %s4 = inlined_call_operand.vmem [shape: f32[1,128], index: 4, kind: input, shape index: {}]
  %s5 = inlined_call_operand.vmem [shape: f32[512,128], index: 5, kind: output, shape index: {}]
  %s6 = sld [smem:[#allocation0]]
  $region175: #{additive_coupling_forward.2} parent=0
    _
  %s8 = ssub.s32 1, %s6
  %s9 = scalar_select 0, %s8, %s6
  $region1: #{additive_coupling_forward.2} parent=0
    #allocation3 [shape = 'u8[262144]{0}', space=vmem, size = 0x40000, scoped, tag = 'input window, operand 0']
    #allocation4 [shape = 'u8[262144]{0}', space=vmem, size = 0x40000, scoped, tag = 'input window, operand 1']
    #allocation5 [shape = 'u8[262144]{0}', space=vmem, size = 0x40000, scoped, tag = 'input window, operand 2']
    loop: start=0, step=1, limit=6
    $region2: #{additive_coupling_forward.2} parent=1 // loop_pre_header
      _
    $region3: #{additive_coupling_forward.2} parent=1 // loop_header
      %s11 = sphi 0, %s15
      %p12 = scmp.ge.s32.totalorder %s11, 6
      %s18 = sphi 0, %s30
      %s19 = sphi 0, %s26
      %s20 = sphi 0, %s18
      %s21 = sphi 0, %s19
      %s22 = sphi 0, %s20
      %s23 = sphi 0, %s21
      %s35 = sphi 0, %s37
      %s38 = sphi 0, %s35
      %s39 = sphi 0, %s38
      %s55 = sphi 0, %s39
      %s61 = sphi 0, %s63
      %s64 = sphi 0, %s61
      %s65 = sphi 0, %s64
      %s81 = sphi 0, %s65
      %s87 = sphi 0, %s89
      %s90 = sphi 0, %s87
      %s91 = sphi 0, %s90
      %s107 = sphi 0, %s91
      %s111 = sphi 0, %s111
      %s113 = sphi 0, %s111
      %s114 = sphi 0, %s113
      %s128 = sphi 0, %s114
      %s132 = sphi 0, %s132
      %s134 = sphi 0, %s132
      %s135 = sphi 0, %s134
      %s149 = sphi 0, %s135
      %s155 = sphi 0, %s157
      %s158 = sphi 0, %s155
      %s159 = sphi 0, %s158
      %s175 = sphi 0, %s159
    $region4: #{additive_coupling_forward.2} parent=1 // loop_header_branch
      %14 = sbr.rel (%p12) target = $region8
    $region5: #{additive_coupling_forward.2} parent=1 // loop_body
      %s16 = ssub.s32 %s11, 1
      %s17 = ssub.s32 %s11, 2
      %s24 = sadd.s32 1, %s19
      %p25 = scmp.ge.s32.totalorder %s24, 2
      %s26 = scalar_select %p25, 0, %s24
      %s27 = sadd.s32 1, %s18
      %s28 = scalar_select %p25, %s27, %s18
      %p29 = scmp.ge.s32.totalorder %s28, 2
      %s30 = scalar_select %p29, 0, %s28
      %s31 = ssub.s32 %s18, %s30
      %s32 = ssub.s32 %s19, %s26
      %s33 = sor.u32 %s31, %s32
      %p34 = scmp.eq.s32.totalorder %s33, 0
      %s36 = sadd.s32 %s35, 1
      %s37 = scalar_select %p34, %s35, %s36
      %p40 = pneg %p34
      %p41 = scmp.eq.s32.totalorder %s11, 3
      %p42 = por %p40, %p41
      %p43 = scmp.ne.s32.totalorder %s35, %s38
      %p44 = scmp.eq.s32.totalorder %s11, 0
      %p45 = por %p43, %p44
      %p46 = scmp.ne.s32.totalorder %s35, %s38
      %p47 = scmp.eq.s32.totalorder %s16, 3
      %p48 = por %p46, %p47
      %p49 = scmp.ne.s32.totalorder %s38, %s39
      %p50 = scmp.eq.s32.totalorder %s16, 0
      %p51 = por %p49, %p50
      %p52 = scmp.ne.s32.totalorder %s38, %s39
      %p53 = scmp.eq.s32.totalorder %s17, 3
      %p54 = por %p52, %p53
      %p56 = scmp.ne.s32.totalorder %s39, %s55
      %p57 = scmp.eq.s32.totalorder %s17, 0
      %p58 = por %p56, %p57
      %s59 = ssub.s32 %s19, %s26
      %p60 = scmp.eq.s32.totalorder %s59, 0
      %s62 = sadd.s32 %s61, 1
      %s63 = scalar_select %p60, %s61, %s62
      %p66 = pneg %p60
      %p67 = scmp.eq.s32.totalorder %s11, 3
      %p68 = por %p66, %p67
      %p69 = scmp.ne.s32.totalorder %s61, %s64
      %p70 = scmp.eq.s32.totalorder %s11, 0
      %p71 = por %p69, %p70
      %p72 = scmp.ne.s32.totalorder %s61, %s64
      %p73 = scmp.eq.s32.totalorder %s16, 3
      %p74 = por %p72, %p73
      %p75 = scmp.ne.s32.totalorder %s64, %s65
      %p76 = scmp.eq.s32.totalorder %s16, 0
      %p77 = por %p75, %p76
      %p78 = scmp.ne.s32.totalorder %s64, %s65
      %p79 = scmp.eq.s32.totalorder %s17, 3
      %p80 = por %p78, %p79
      %p82 = scmp.ne.s32.totalorder %s65, %s81
      %p83 = scmp.eq.s32.totalorder %s17, 0
      %p84 = por %p82, %p83
      %s85 = ssub.s32 %s18, %s30
      %p86 = scmp.eq.s32.totalorder %s85, 0
      %s88 = sadd.s32 %s87, 1
      %s89 = scalar_select %p86, %s87, %s88
      %p92 = pneg %p86
      %p93 = scmp.eq.s32.totalorder %s11, 3
      %p94 = por %p92, %p93
      %p95 = scmp.ne.s32.totalorder %s87, %s90
      %p96 = scmp.eq.s32.totalorder %s11, 0
      %p97 = por %p95, %p96
      %p98 = scmp.ne.s32.totalorder %s87, %s90
      %p99 = scmp.eq.s32.totalorder %s16, 3
      %p100 = por %p98, %p99
      %p101 = scmp.ne.s32.totalorder %s90, %s91
      %p102 = scmp.eq.s32.totalorder %s16, 0
      %p103 = por %p101, %p102
      %p104 = scmp.ne.s32.totalorder %s90, %s91
      %p105 = scmp.eq.s32.totalorder %s17, 3
      %p106 = por %p104, %p105
      %p108 = scmp.ne.s32.totalorder %s91, %s107
      %p109 = scmp.eq.s32.totalorder %s17, 0
      %p110 = por %p108, %p109
      %s112 = sadd.s32 %s111, 1
      %p115 = scmp.eq.s32.totalorder %s11, 3
      %p116 = scmp.ne.s32.totalorder %s111, %s113
      %p117 = scmp.eq.s32.totalorder %s11, 0
      %p118 = por %p116, %p117
      %p119 = scmp.ne.s32.totalorder %s111, %s113
      %p120 = scmp.eq.s32.totalorder %s16, 3
      %p121 = por %p119, %p120
      %p122 = scmp.ne.s32.totalorder %s113, %s114
      %p123 = scmp.eq.s32.totalorder %s16, 0
      %p124 = por %p122, %p123
      %p125 = scmp.ne.s32.totalorder %s113, %s114
      %p126 = scmp.eq.s32.totalorder %s17, 3
      %p127 = por %p125, %p126
      %p129 = scmp.ne.s32.totalorder %s114, %s128
      %p130 = scmp.eq.s32.totalorder %s17, 0
      %p131 = por %p129, %p130
      %s133 = sadd.s32 %s132, 1
      %p136 = scmp.eq.s32.totalorder %s11, 3
      %p137 = scmp.ne.s32.totalorder %s132, %s134
      %p138 = scmp.eq.s32.totalorder %s11, 0
      %p139 = por %p137, %p138
      %p140 = scmp.ne.s32.totalorder %s132, %s134
      %p141 = scmp.eq.s32.totalorder %s16, 3
      %p142 = por %p140, %p141
      %p143 = scmp.ne.s32.totalorder %s134, %s135
      %p144 = scmp.eq.s32.totalorder %s16, 0
      %p145 = por %p143, %p144
      %p146 = scmp.ne.s32.totalorder %s134, %s135
      %p147 = scmp.eq.s32.totalorder %s17, 3
      %p148 = por %p146, %p147
      %p150 = scmp.ne.s32.totalorder %s135, %s149
      %p151 = scmp.eq.s32.totalorder %s17, 0
      %p152 = por %p150, %p151
      %s153 = ssub.s32 %s18, %s30
      %p154 = scmp.eq.s32.totalorder %s153, 0
      %s156 = sadd.s32 %s155, 1
      %s157 = scalar_select %p154, %s155, %s156
      %p160 = pneg %p154
      %p161 = scmp.eq.s32.totalorder %s11, 3
      %p162 = por %p160, %p161
      %p163 = scmp.ne.s32.totalorder %s155, %s158
      %p164 = scmp.eq.s32.totalorder %s11, 0
      %p165 = por %p163, %p164
      %p166 = scmp.ne.s32.totalorder %s155, %s158
      %p167 = scmp.eq.s32.totalorder %s16, 3
      %p168 = por %p166, %p167
      %p169 = scmp.ne.s32.totalorder %s158, %s159
      %p170 = scmp.eq.s32.totalorder %s16, 0
      %p171 = por %p169, %p170
      %p172 = scmp.ne.s32.totalorder %s158, %s159
      %p173 = scmp.eq.s32.totalorder %s17, 3
      %p174 = por %p172, %p173
      %p176 = scmp.ne.s32.totalorder %s159, %s175
      %p177 = scmp.eq.s32.totalorder %s17, 0
      %p178 = por %p176, %p177
      %p179 = scmp.le.s32.totalorder 1, %s11
      %p180 = scmp.lt.s32.totalorder %s11, 5
      %p181 = pnand %p179, %p180
      %p182 = pneg %p181
      // Predicated region
      $region9: #{additive_coupling_forward.2} parent=5 // pred_check
        _
      $region10: #{additive_coupling_forward.2} parent=5 // pred_check_branch
        %184 = sbr.rel (%p181) target = $region12
      $region11: #{additive_coupling_forward.2} parent=5 // pred_region
        %s185 = ssub.s32 %s11, 1
        // Predicated region
        $region13: #{additive_coupling_forward.2} parent=11 // pred_check
          %p186 = pneg %p124
        $region14: #{additive_coupling_forward.2} parent=11 // pred_check_branch
          %188 = sbr.rel (%p186) target = $region16
        $region15: #{additive_coupling_forward.2} parent=11 // pred_region
          _
        $region16: #{additive_coupling_forward.2} parent=11 // pred_fallthru
          _
        // Predicated region
        $region17: #{additive_coupling_forward.2} parent=11 // pred_check
          %p189 = pneg %p145
        $region18: #{additive_coupling_forward.2} parent=11 // pred_check_branch
          %191 = sbr.rel (%p189) target = $region20
        $region19: #{additive_coupling_forward.2} parent=11 // pred_region
          _
        $region20: #{additive_coupling_forward.2} parent=11 // pred_fallthru
          _
      $region12: #{additive_coupling_forward.2} parent=5 // pred_fallthru
        _
      %p192 = scmp.lt.s32.totalorder %s11, 4
      // Predicated region
      $region21: #{additive_coupling_forward.2} parent=5 // pred_check
        %p193 = pneg %p192
      $region22: #{additive_coupling_forward.2} parent=5 // pred_check_branch
        %195 = sbr.rel (%p193) target = $region24
      $region23: #{additive_coupling_forward.2} parent=5 // pred_region
        // Predicated region
        $region25: #{additive_coupling_forward.2} parent=23 // pred_check
          %p196 = pneg %p45
        $region26: #{additive_coupling_forward.2} parent=23 // pred_check_branch
          %198 = sbr.rel (%p196) target = $region28
        $region27: #{additive_coupling_forward.2} parent=23 // pred_region
          %s199 = sand.u32 %s35, 1
          %s200 = sand.u32 %s35, 1
          %s201 = smul.addr %s200, 256
          %s202 = scalar_lea.vmem [#allocation3], %s201
          %s203 = smul.u32 32, %s18
          %s204 = smul.u32 2, %s19
          %s205 = smul.addr %s203, 4
          %s206 = sadd.s32 %s204, %s205
          %s207 = smul.addr %s206, 4
          %s208 = scalar_lea.vmem %s0, %s207
          // Predicated region
          $region29: #{additive_coupling_forward.2} parent=27 // pred_check
            _
          $region30: #{additive_coupling_forward.2} parent=27 // pred_check_branch
            %210 = sbr.rel (0) target = $region32
          $region31: #{additive_coupling_forward.2} parent=27 // pred_region
            // Predicated region
            $region33: #{additive_coupling_forward.2} parent=31 // pred_check
              _
            $region34: #{additive_coupling_forward.2} parent=31 // pred_check_branch
              %212 = sbr.rel (0) target = $region36
            $region35: #{additive_coupling_forward.2} parent=31 // pred_region
              // Predicated region
              $region48: #{additive_coupling_forward.2} parent=35 // pred_check
                _
              $region49: #{additive_coupling_forward.2} parent=35 // pred_check_branch
                %289 = sbr.rel (0) target = $region51
              $region50: #{additive_coupling_forward.2} parent=35 // pred_region
                loop: start=0, step=1, limit=1
                $region52: #{additive_coupling_forward.2} parent=50 // loop_pre_header
                  _
                $region53: #{additive_coupling_forward.2} parent=50 // loop_header
                  %s291 = sphi 0, %s295
                  %p292 = scmp.ge.s32.totalorder %s291, 1
                  %s296 = sphi %s208, %s208
                  %s297 = sphi %s202, %s202
                $region54: #{additive_coupling_forward.2} parent=50 // loop_header_branch
                  %294 = sbr.rel (%p292) target = $region58
                $region55: #{additive_coupling_forward.2} parent=50 // loop_body
                  %v298 = vld [vmem:[%s296] sm:$0xff]
                  %299 = vst [vmem:[%s297] sm:$0xff] %v298
                  %v300 = vld [vmem:[%s296 + $0x10] sm:$0xff]
                  %301 = vst [vmem:[%s297 + $0x8] sm:$0xff] %v300
                  %v302 = vld [vmem:[%s296 + $0x20] sm:$0xff]
                  %303 = vst [vmem:[%s297 + $0x10] sm:$0xff] %v302
                  %v304 = vld [vmem:[%s296 + $0x30] sm:$0xff]
                  %305 = vst [vmem:[%s297 + $0x18] sm:$0xff] %v304
                  %v306 = vld [vmem:[%s296 + $0x40] sm:$0xff]
                  %307 = vst [vmem:[%s297 + $0x20] sm:$0xff] %v306
                  %v308 = vld [vmem:[%s296 + $0x50] sm:$0xff]
                  %309 = vst [vmem:[%s297 + $0x28] sm:$0xff] %v308
                  %v310 = vld [vmem:[%s296 + $0x60] sm:$0xff]
                  %311 = vst [vmem:[%s297 + $0x30] sm:$0xff] %v310
                  %v312 = vld [vmem:[%s296 + $0x70] sm:$0xff]
                  %313 = vst [vmem:[%s297 + $0x38] sm:$0xff] %v312
                  %v314 = vld [vmem:[%s296 + $0x80] sm:$0xff]
                  %315 = vst [vmem:[%s297 + $0x40] sm:$0xff] %v314
                  %v316 = vld [vmem:[%s296 + $0x90] sm:$0xff]
                  %317 = vst [vmem:[%s297 + $0x48] sm:$0xff] %v316
                  %v318 = vld [vmem:[%s296 + $0xa0] sm:$0xff]
                  %319 = vst [vmem:[%s297 + $0x50] sm:$0xff] %v318
                  %v320 = vld [vmem:[%s296 + $0xb0] sm:$0xff]
                  %321 = vst [vmem:[%s297 + $0x58] sm:$0xff] %v320
                  %v322 = vld [vmem:[%s296 + $0xc0] sm:$0xff]
                  %323 = vst [vmem:[%s297 + $0x60] sm:$0xff] %v322
                  %v324 = vld [vmem:[%s296 + $0xd0] sm:$0xff]
                  %325 = vst [vmem:[%s297 + $0x68] sm:$0xff] %v324
                  %v326 = vld [vmem:[%s296 + $0xe0] sm:$0xff]
                  %327 = vst [vmem:[%s297 + $0x70] sm:$0xff] %v326
                  %v328 = vld [vmem:[%s296 + $0xf0] sm:$0xff]
                  %329 = vst [vmem:[%s297 + $0x78] sm:$0xff] %v328
                  %v330 = vld [vmem:[%s296 + $0x100] sm:$0xff]
                  %331 = vst [vmem:[%s297 + $0x80] sm:$0xff] %v330
                  %v332 = vld [vmem:[%s296 + $0x110] sm:$0xff]
                  %333 = vst [vmem:[%s297 + $0x88] sm:$0xff] %v332
                  %v334 = vld [vmem:[%s296 + $0x120] sm:$0xff]
                  %335 = vst [vmem:[%s297 + $0x90] sm:$0xff] %v334
                  %v336 = vld [vmem:[%s296 + $0x130] sm:$0xff]
                  %337 = vst [vmem:[%s297 + $0x98] sm:$0xff] %v336
                  %v338 = vld [vmem:[%s296 + $0x140] sm:$0xff]
                  %339 = vst [vmem:[%s297 + $0xa0] sm:$0xff] %v338
                  %v340 = vld [vmem:[%s296 + $0x150] sm:$0xff]
                  %341 = vst [vmem:[%s297 + $0xa8] sm:$0xff] %v340
                  %v342 = vld [vmem:[%s296 + $0x160] sm:$0xff]
                  %343 = vst [vmem:[%s297 + $0xb0] sm:$0xff] %v342
                  %v344 = vld [vmem:[%s296 + $0x170] sm:$0xff]
                  %345 = vst [vmem:[%s297 + $0xb8] sm:$0xff] %v344
                  %v346 = vld [vmem:[%s296 + $0x180] sm:$0xff]
                  %347 = vst [vmem:[%s297 + $0xc0] sm:$0xff] %v346
                  %v348 = vld [vmem:[%s296 + $0x190] sm:$0xff]
                  %349 = vst [vmem:[%s297 + $0xc8] sm:$0xff] %v348
                  %v350 = vld [vmem:[%s296 + $0x1a0] sm:$0xff]
                  %351 = vst [vmem:[%s297 + $0xd0] sm:$0xff] %v350
                  %v352 = vld [vmem:[%s296 + $0x1b0] sm:$0xff]
                  %353 = vst [vmem:[%s297 + $0xd8] sm:$0xff] %v352
                  %v354 = vld [vmem:[%s296 + $0x1c0] sm:$0xff]
                  %355 = vst [vmem:[%s297 + $0xe0] sm:$0xff] %v354
                  %v356 = vld [vmem:[%s296 + $0x1d0] sm:$0xff]
                  %357 = vst [vmem:[%s297 + $0xe8] sm:$0xff] %v356
                  %v358 = vld [vmem:[%s296 + $0x1e0] sm:$0xff]
                  %359 = vst [vmem:[%s297 + $0xf0] sm:$0xff] %v358
                  %v360 = vld [vmem:[%s296 + $0x1f0] sm:$0xff]
                  %361 = vst [vmem:[%s297 + $0xf8] sm:$0xff] %v360
                $region56: #{additive_coupling_forward.2} parent=50 // loop_footer
                  %s295 = sadd.s32 1, %s291
                $region57: #{additive_coupling_forward.2} parent=50 // loop_footer_branch
                  %290 = sbr.rel target = $region53
                $region58: #{additive_coupling_forward.2} parent=50 // loop_exit
                  _
              $region51: #{additive_coupling_forward.2} parent=35 // pred_fallthru
                _
              // Predicated region
              $region59: #{additive_coupling_forward.2} parent=35 // pred_check
                _
              $region60: #{additive_coupling_forward.2} parent=35 // pred_check_branch
                %363 = sbr.rel target = $region62
              $region61: #{additive_coupling_forward.2} parent=35 // pred_region
                _
              $region62: #{additive_coupling_forward.2} parent=35 // pred_fallthru
                _
            $region36: #{additive_coupling_forward.2} parent=31 // pred_fallthru
              _
            // Predicated region
            $region37: #{additive_coupling_forward.2} parent=31 // pred_check
              _
            $region38: #{additive_coupling_forward.2} parent=31 // pred_check_branch
              %214 = sbr.rel target = $region40
            $region39: #{additive_coupling_forward.2} parent=31 // pred_region
              loop: start=0, step=1, limit=1
              $region41: #{additive_coupling_forward.2} parent=39 // loop_pre_header
                _
              $region42: #{additive_coupling_forward.2} parent=39 // loop_header
                %s217 = sphi 0, %s221
                %p218 = scmp.ge.s32.totalorder %s217, 1
                %s222 = sphi %s208, %s208
                %s223 = sphi %s202, %s202
              $region43: #{additive_coupling_forward.2} parent=39 // loop_header_branch
                %220 = sbr.rel (%p218) target = $region47
              $region44: #{additive_coupling_forward.2} parent=39 // loop_body
                %v224 = vld [vmem:[%s222] sm:$0xff]
                %225 = vst [vmem:[%s223] sm:$0xff] %v224
                %v226 = vld [vmem:[%s222 + $0x10] sm:$0xff]
                %227 = vst [vmem:[%s223 + $0x8] sm:$0xff] %v226
                %v228 = vld [vmem:[%s222 + $0x20] sm:$0xff]
                %229 = vst [vmem:[%s223 + $0x10] sm:$0xff] %v228
                %v230 = vld [vmem:[%s222 + $0x30] sm:$0xff]
                %231 = vst [vmem:[%s223 + $0x18] sm:$0xff] %v230
                %v232 = vld [vmem:[%s222 + $0x40] sm:$0xff]
                %233 = vst [vmem:[%s223 + $0x20] sm:$0xff] %v232
                %v234 = vld [vmem:[%s222 + $0x50] sm:$0xff]
                %235 = vst [vmem:[%s223 + $0x28] sm:$0xff] %v234
                %v236 = vld [vmem:[%s222 + $0x60] sm:$0xff]
                %237 = vst [vmem:[%s223 + $0x30] sm:$0xff] %v236
                %v238 = vld [vmem:[%s222 + $0x70] sm:$0xff]
                %239 = vst [vmem:[%s223 + $0x38] sm:$0xff] %v238
                %v240 = vld [vmem:[%s222 + $0x80] sm:$0xff]
                %241 = vst [vmem:[%s223 + $0x40] sm:$0xff] %v240
                %v242 = vld [vmem:[%s222 + $0x90] sm:$0xff]
                %243 = vst [vmem:[%s223 + $0x48] sm:$0xff] %v242
                %v244 = vld [vmem:[%s222 + $0xa0] sm:$0xff]
                %245 = vst [vmem:[%s223 + $0x50] sm:$0xff] %v244
                %v246 = vld [vmem:[%s222 + $0xb0] sm:$0xff]
                %247 = vst [vmem:[%s223 + $0x58] sm:$0xff] %v246
                %v248 = vld [vmem:[%s222 + $0xc0] sm:$0xff]
                %249 = vst [vmem:[%s223 + $0x60] sm:$0xff] %v248
                %v250 = vld [vmem:[%s222 + $0xd0] sm:$0xff]
                %251 = vst [vmem:[%s223 + $0x68] sm:$0xff] %v250
                %v252 = vld [vmem:[%s222 + $0xe0] sm:$0xff]
                %253 = vst [vmem:[%s223 + $0x70] sm:$0xff] %v252
                %v254 = vld [vmem:[%s222 + $0xf0] sm:$0xff]
                %255 = vst [vmem:[%s223 + $0x78] sm:$0xff] %v254
                %v256 = vld [vmem:[%s222 + $0x100] sm:$0xff]
                %257 = vst [vmem:[%s223 + $0x80] sm:$0xff] %v256
                %v258 = vld [vmem:[%s222 + $0x110] sm:$0xff]
                %259 = vst [vmem:[%s223 + $0x88] sm:$0xff] %v258
                %v260 = vld [vmem:[%s222 + $0x120] sm:$0xff]
                %261 = vst [vmem:[%s223 + $0x90] sm:$0xff] %v260
                %v262 = vld [vmem:[%s222 + $0x130] sm:$0xff]
                %263 = vst [vmem:[%s223 + $0x98] sm:$0xff] %v262
                %v264 = vld [vmem:[%s222 + $0x140] sm:$0xff]
                %265 = vst [vmem:[%s223 + $0xa0] sm:$0xff] %v264
                %v266 = vld [vmem:[%s222 + $0x150] sm:$0xff]
                %267 = vst [vmem:[%s223 + $0xa8] sm:$0xff] %v266
                %v268 = vld [vmem:[%s222 + $0x160] sm:$0xff]
                %269 = vst [vmem:[%s223 + $0xb0] sm:$0xff] %v268
                %v270 = vld [vmem:[%s222 + $0x170] sm:$0xff]
                %271 = vst [vmem:[%s223 + $0xb8] sm:$0xff] %v270
                %v272 = vld [vmem:[%s222 + $0x180] sm:$0xff]
                %273 = vst [vmem:[%s223 + $0xc0] sm:$0xff] %v272
                %v274 = vld [vmem:[%s222 + $0x190] sm:$0xff]
                %275 = vst [vmem:[%s223 + $0xc8] sm:$0xff] %v274
                %v276 = vld [vmem:[%s222 + $0x1a0] sm:$0xff]
                %277 = vst [vmem:[%s223 + $0xd0] sm:$0xff] %v276
                %v278 = vld [vmem:[%s222 + $0x1b0] sm:$0xff]
                %279 = vst [vmem:[%s223 + $0xd8] sm:$0xff] %v278
                %v280 = vld [vmem:[%s222 + $0x1c0] sm:$0xff]
                %281 = vst [vmem:[%s223 + $0xe0] sm:$0xff] %v280
                %v282 = vld [vmem:[%s222 + $0x1d0] sm:$0xff]
                %283 = vst [vmem:[%s223 + $0xe8] sm:$0xff] %v282
                %v284 = vld [vmem:[%s222 + $0x1e0] sm:$0xff]
                %285 = vst [vmem:[%s223 + $0xf0] sm:$0xff] %v284
                %v286 = vld [vmem:[%s222 + $0x1f0] sm:$0xff]
                %287 = vst [vmem:[%s223 + $0xf8] sm:$0xff] %v286
              $region45: #{additive_coupling_forward.2} parent=39 // loop_footer
                %s221 = sadd.s32 1, %s217
              $region46: #{additive_coupling_forward.2} parent=39 // loop_footer_branch
                %216 = sbr.rel target = $region42
              $region47: #{additive_coupling_forward.2} parent=39 // loop_exit
                _
            $region40: #{additive_coupling_forward.2} parent=31 // pred_fallthru
              _
          $region32: #{additive_coupling_forward.2} parent=27 // pred_fallthru
            _
          %364 = vnop
        $region28: #{additive_coupling_forward.2} parent=23 // pred_fallthru
          _
        // Predicated region
        $region63: #{additive_coupling_forward.2} parent=23 // pred_check
          %p365 = pneg %p71
        $region64: #{additive_coupling_forward.2} parent=23 // pred_check_branch
          %367 = sbr.rel (%p365) target = $region66
        $region65: #{additive_coupling_forward.2} parent=23 // pred_region
          %s368 = sand.u32 %s61, 1
          %s369 = sand.u32 %s61, 1
          %s370 = smul.addr %s369, 256
          %s371 = scalar_lea.vmem [#allocation4], %s370
          %s372 = smul.u32 32, %s19
          %s373 = smul.addr %s372, 2
          %s374 = sadd.s32 1, %s373
          %s375 = smul.addr %s374, 8
          %s376 = scalar_lea.vmem %s1, %s375
          // Predicated region
          $region67: #{additive_coupling_forward.2} parent=65 // pred_check
            _
          $region68: #{additive_coupling_forward.2} parent=65 // pred_check_branch
            %378 = sbr.rel (0) target = $region70
          $region69: #{additive_coupling_forward.2} parent=65 // pred_region
            // Predicated region
            $region71: #{additive_coupling_forward.2} parent=69 // pred_check
              _
            $region72: #{additive_coupling_forward.2} parent=69 // pred_check_branch
              %380 = sbr.rel (0) target = $region74
            $region73: #{additive_coupling_forward.2} parent=69 // pred_region
              // Predicated region
              $region86: #{additive_coupling_forward.2} parent=73 // pred_check
                _
              $region87: #{additive_coupling_forward.2} parent=73 // pred_check_branch
                %457 = sbr.rel (0) target = $region89
              $region88: #{additive_coupling_forward.2} parent=73 // pred_region
                loop: start=0, step=1, limit=1
                $region90: #{additive_coupling_forward.2} parent=88 // loop_pre_header
                  _
                $region91: #{additive_coupling_forward.2} parent=88 // loop_header
                  %s459 = sphi 0, %s463
                  %p460 = scmp.ge.s32.totalorder %s459, 1
                  %s464 = sphi %s376, %s376
                  %s465 = sphi %s371, %s371
                $region92: #{additive_coupling_forward.2} parent=88 // loop_header_branch
                  %462 = sbr.rel (%p460) target = $region96
                $region93: #{additive_coupling_forward.2} parent=88 // loop_body
                  %v466 = vld [vmem:[%s464] sm:$0xff]
                  %467 = vst [vmem:[%s465] sm:$0xff] %v466
                  %v468 = vld [vmem:[%s464 + $0x10] sm:$0xff]
                  %469 = vst [vmem:[%s465 + $0x8] sm:$0xff] %v468
                  %v470 = vld [vmem:[%s464 + $0x20] sm:$0xff]
                  %471 = vst [vmem:[%s465 + $0x10] sm:$0xff] %v470
                  %v472 = vld [vmem:[%s464 + $0x30] sm:$0xff]
                  %473 = vst [vmem:[%s465 + $0x18] sm:$0xff] %v472
                  %v474 = vld [vmem:[%s464 + $0x40] sm:$0xff]
                  %475 = vst [vmem:[%s465 + $0x20] sm:$0xff] %v474
                  %v476 = vld [vmem:[%s464 + $0x50] sm:$0xff]
                  %477 = vst [vmem:[%s465 + $0x28] sm:$0xff] %v476
                  %v478 = vld [vmem:[%s464 + $0x60] sm:$0xff]
                  %479 = vst [vmem:[%s465 + $0x30] sm:$0xff] %v478
                  %v480 = vld [vmem:[%s464 + $0x70] sm:$0xff]
                  %481 = vst [vmem:[%s465 + $0x38] sm:$0xff] %v480
                  %v482 = vld [vmem:[%s464 + $0x80] sm:$0xff]
                  %483 = vst [vmem:[%s465 + $0x40] sm:$0xff] %v482
                  %v484 = vld [vmem:[%s464 + $0x90] sm:$0xff]
                  %485 = vst [vmem:[%s465 + $0x48] sm:$0xff] %v484
                  %v486 = vld [vmem:[%s464 + $0xa0] sm:$0xff]
                  %487 = vst [vmem:[%s465 + $0x50] sm:$0xff] %v486
                  %v488 = vld [vmem:[%s464 + $0xb0] sm:$0xff]
                  %489 = vst [vmem:[%s465 + $0x58] sm:$0xff] %v488
                  %v490 = vld [vmem:[%s464 + $0xc0] sm:$0xff]
                  %491 = vst [vmem:[%s465 + $0x60] sm:$0xff] %v490
                  %v492 = vld [vmem:[%s464 + $0xd0] sm:$0xff]
                  %493 = vst [vmem:[%s465 + $0x68] sm:$0xff] %v492
                  %v494 = vld [vmem:[%s464 + $0xe0] sm:$0xff]
                  %495 = vst [vmem:[%s465 + $0x70] sm:$0xff] %v494
                  %v496 = vld [vmem:[%s464 + $0xf0] sm:$0xff]
                  %497 = vst [vmem:[%s465 + $0x78] sm:$0xff] %v496
                  %v498 = vld [vmem:[%s464 + $0x100] sm:$0xff]
                  %499 = vst [vmem:[%s465 + $0x80] sm:$0xff] %v498
                  %v500 = vld [vmem:[%s464 + $0x110] sm:$0xff]
                  %501 = vst [vmem:[%s465 + $0x88] sm:$0xff] %v500
                  %v502 = vld [vmem:[%s464 + $0x120] sm:$0xff]
                  %503 = vst [vmem:[%s465 + $0x90] sm:$0xff] %v502
                  %v504 = vld [vmem:[%s464 + $0x130] sm:$0xff]
                  %505 = vst [vmem:[%s465 + $0x98] sm:$0xff] %v504
                  %v506 = vld [vmem:[%s464 + $0x140] sm:$0xff]
                  %507 = vst [vmem:[%s465 + $0xa0] sm:$0xff] %v506
                  %v508 = vld [vmem:[%s464 + $0x150] sm:$0xff]
                  %509 = vst [vmem:[%s465 + $0xa8] sm:$0xff] %v508
                  %v510 = vld [vmem:[%s464 + $0x160] sm:$0xff]
                  %511 = vst [vmem:[%s465 + $0xb0] sm:$0xff] %v510
                  %v512 = vld [vmem:[%s464 + $0x170] sm:$0xff]
                  %513 = vst [vmem:[%s465 + $0xb8] sm:$0xff] %v512
                  %v514 = vld [vmem:[%s464 + $0x180] sm:$0xff]
                  %515 = vst [vmem:[%s465 + $0xc0] sm:$0xff] %v514
                  %v516 = vld [vmem:[%s464 + $0x190] sm:$0xff]
                  %517 = vst [vmem:[%s465 + $0xc8] sm:$0xff] %v516
                  %v518 = vld [vmem:[%s464 + $0x1a0] sm:$0xff]
                  %519 = vst [vmem:[%s465 + $0xd0] sm:$0xff] %v518
                  %v520 = vld [vmem:[%s464 + $0x1b0] sm:$0xff]
                  %521 = vst [vmem:[%s465 + $0xd8] sm:$0xff] %v520
                  %v522 = vld [vmem:[%s464 + $0x1c0] sm:$0xff]
                  %523 = vst [vmem:[%s465 + $0xe0] sm:$0xff] %v522
                  %v524 = vld [vmem:[%s464 + $0x1d0] sm:$0xff]
                  %525 = vst [vmem:[%s465 + $0xe8] sm:$0xff] %v524
                  %v526 = vld [vmem:[%s464 + $0x1e0] sm:$0xff]
                  %527 = vst [vmem:[%s465 + $0xf0] sm:$0xff] %v526
                  %v528 = vld [vmem:[%s464 + $0x1f0] sm:$0xff]
                  %529 = vst [vmem:[%s465 + $0xf8] sm:$0xff] %v528
                $region94: #{additive_coupling_forward.2} parent=88 // loop_footer
                  %s463 = sadd.s32 1, %s459
                $region95: #{additive_coupling_forward.2} parent=88 // loop_footer_branch
                  %458 = sbr.rel target = $region91
                $region96: #{additive_coupling_forward.2} parent=88 // loop_exit
                  _
              $region89: #{additive_coupling_forward.2} parent=73 // pred_fallthru
                _
              // Predicated region
              $region97: #{additive_coupling_forward.2} parent=73 // pred_check
                _
              $region98: #{additive_coupling_forward.2} parent=73 // pred_check_branch
                %531 = sbr.rel target = $region100
              $region99: #{additive_coupling_forward.2} parent=73 // pred_region
                _
              $region100: #{additive_coupling_forward.2} parent=73 // pred_fallthru
                _
            $region74: #{additive_coupling_forward.2} parent=69 // pred_fallthru
              _
            // Predicated region
            $region75: #{additive_coupling_forward.2} parent=69 // pred_check
              _
            $region76: #{additive_coupling_forward.2} parent=69 // pred_check_branch
              %382 = sbr.rel target = $region78
            $region77: #{additive_coupling_forward.2} parent=69 // pred_region
              loop: start=0, step=1, limit=1
              $region79: #{additive_coupling_forward.2} parent=77 // loop_pre_header
                _
              $region80: #{additive_coupling_forward.2} parent=77 // loop_header
                %s385 = sphi 0, %s389
                %p386 = scmp.ge.s32.totalorder %s385, 1
                %s390 = sphi %s376, %s376
                %s391 = sphi %s371, %s371
              $region81: #{additive_coupling_forward.2} parent=77 // loop_header_branch
                %388 = sbr.rel (%p386) target = $region85
              $region82: #{additive_coupling_forward.2} parent=77 // loop_body
                %v392 = vld [vmem:[%s390] sm:$0xff]
                %393 = vst [vmem:[%s391] sm:$0xff] %v392
                %v394 = vld [vmem:[%s390 + $0x10] sm:$0xff]
                %395 = vst [vmem:[%s391 + $0x8] sm:$0xff] %v394
                %v396 = vld [vmem:[%s390 + $0x20] sm:$0xff]
                %397 = vst [vmem:[%s391 + $0x10] sm:$0xff] %v396
                %v398 = vld [vmem:[%s390 + $0x30] sm:$0xff]
                %399 = vst [vmem:[%s391 + $0x18] sm:$0xff] %v398
                %v400 = vld [vmem:[%s390 + $0x40] sm:$0xff]
                %401 = vst [vmem:[%s391 + $0x20] sm:$0xff] %v400
                %v402 = vld [vmem:[%s390 + $0x50] sm:$0xff]
                %403 = vst [vmem:[%s391 + $0x28] sm:$0xff] %v402
                %v404 = vld [vmem:[%s390 + $0x60] sm:$0xff]
                %405 = vst [vmem:[%s391 + $0x30] sm:$0xff] %v404
                %v406 = vld [vmem:[%s390 + $0x70] sm:$0xff]
                %407 = vst [vmem:[%s391 + $0x38] sm:$0xff] %v406
                %v408 = vld [vmem:[%s390 + $0x80] sm:$0xff]
                %409 = vst [vmem:[%s391 + $0x40] sm:$0xff] %v408
                %v410 = vld [vmem:[%s390 + $0x90] sm:$0xff]
                %411 = vst [vmem:[%s391 + $0x48] sm:$0xff] %v410
                %v412 = vld [vmem:[%s390 + $0xa0] sm:$0xff]
                %413 = vst [vmem:[%s391 + $0x50] sm:$0xff] %v412
                %v414 = vld [vmem:[%s390 + $0xb0] sm:$0xff]
                %415 = vst [vmem:[%s391 + $0x58] sm:$0xff] %v414
                %v416 = vld [vmem:[%s390 + $0xc0] sm:$0xff]
                %417 = vst [vmem:[%s391 + $0x60] sm:$0xff] %v416
                %v418 = vld [vmem:[%s390 + $0xd0] sm:$0xff]
                %419 = vst [vmem:[%s391 + $0x68] sm:$0xff] %v418
                %v420 = vld [vmem:[%s390 + $0xe0] sm:$0xff]
                %421 = vst [vmem:[%s391 + $0x70] sm:$0xff] %v420
                %v422 = vld [vmem:[%s390 + $0xf0] sm:$0xff]
                %423 = vst [vmem:[%s391 + $0x78] sm:$0xff] %v422
                %v424 = vld [vmem:[%s390 + $0x100] sm:$0xff]
                %425 = vst [vmem:[%s391 + $0x80] sm:$0xff] %v424
                %v426 = vld [vmem:[%s390 + $0x110] sm:$0xff]
                %427 = vst [vmem:[%s391 + $0x88] sm:$0xff] %v426
                %v428 = vld [vmem:[%s390 + $0x120] sm:$0xff]
                %429 = vst [vmem:[%s391 + $0x90] sm:$0xff] %v428
                %v430 = vld [vmem:[%s390 + $0x130] sm:$0xff]
                %431 = vst [vmem:[%s391 + $0x98] sm:$0xff] %v430
                %v432 = vld [vmem:[%s390 + $0x140] sm:$0xff]
                %433 = vst [vmem:[%s391 + $0xa0] sm:$0xff] %v432
                %v434 = vld [vmem:[%s390 + $0x150] sm:$0xff]
                %435 = vst [vmem:[%s391 + $0xa8] sm:$0xff] %v434
                %v436 = vld [vmem:[%s390 + $0x160] sm:$0xff]
                %437 = vst [vmem:[%s391 + $0xb0] sm:$0xff] %v436
                %v438 = vld [vmem:[%s390 + $0x170] sm:$0xff]
                %439 = vst [vmem:[%s391 + $0xb8] sm:$0xff] %v438
                %v440 = vld [vmem:[%s390 + $0x180] sm:$0xff]
                %441 = vst [vmem:[%s391 + $0xc0] sm:$0xff] %v440
                %v442 = vld [vmem:[%s390 + $0x190] sm:$0xff]
                %443 = vst [vmem:[%s391 + $0xc8] sm:$0xff] %v442
                %v444 = vld [vmem:[%s390 + $0x1a0] sm:$0xff]
                %445 = vst [vmem:[%s391 + $0xd0] sm:$0xff] %v444
                %v446 = vld [vmem:[%s390 + $0x1b0] sm:$0xff]
                %447 = vst [vmem:[%s391 + $0xd8] sm:$0xff] %v446
                %v448 = vld [vmem:[%s390 + $0x1c0] sm:$0xff]
                %449 = vst [vmem:[%s391 + $0xe0] sm:$0xff] %v448
                %v450 = vld [vmem:[%s390 + $0x1d0] sm:$0xff]
                %451 = vst [vmem:[%s391 + $0xe8] sm:$0xff] %v450
                %v452 = vld [vmem:[%s390 + $0x1e0] sm:$0xff]
                %453 = vst [vmem:[%s391 + $0xf0] sm:$0xff] %v452
                %v454 = vld [vmem:[%s390 + $0x1f0] sm:$0xff]
                %455 = vst [vmem:[%s391 + $0xf8] sm:$0xff] %v454
              $region83: #{additive_coupling_forward.2} parent=77 // loop_footer
                %s389 = sadd.s32 1, %s385
              $region84: #{additive_coupling_forward.2} parent=77 // loop_footer_branch
                %384 = sbr.rel target = $region80
              $region85: #{additive_coupling_forward.2} parent=77 // loop_exit
                _
            $region78: #{additive_coupling_forward.2} parent=69 // pred_fallthru
              _
          $region70: #{additive_coupling_forward.2} parent=65 // pred_fallthru
            _
          %532 = vnop
        $region66: #{additive_coupling_forward.2} parent=23 // pred_fallthru
          _
        // Predicated region
        $region101: #{additive_coupling_forward.2} parent=23 // pred_check
          %p533 = pneg %p97
        $region102: #{additive_coupling_forward.2} parent=23 // pred_check_branch
          %535 = sbr.rel (%p533) target = $region104
        $region103: #{additive_coupling_forward.2} parent=23 // pred_region
          %s536 = sand.u32 %s87, 1
          %s537 = sand.u32 %s87, 1
          %s538 = smul.addr %s537, 256
          %s539 = scalar_lea.vmem [#allocation5], %s538
          %s540 = smul.u32 32, %s18
          %s541 = smul.addr %s540, 2
          %s542 = smul.addr %s541, 8
          %s543 = scalar_lea.vmem %s2, %s542
          // Predicated region
          $region105: #{additive_coupling_forward.2} parent=103 // pred_check
            _
          $region106: #{additive_coupling_forward.2} parent=103 // pred_check_branch
            %545 = sbr.rel (0) target = $region108
          $region107: #{additive_coupling_forward.2} parent=103 // pred_region
            // Predicated region
            $region109: #{additive_coupling_forward.2} parent=107 // pred_check
              _
            $region110: #{additive_coupling_forward.2} parent=107 // pred_check_branch
              %547 = sbr.rel (0) target = $region112
            $region111: #{additive_coupling_forward.2} parent=107 // pred_region
              // Predicated region
              $region124: #{additive_coupling_forward.2} parent=111 // pred_check
                _
              $region125: #{additive_coupling_forward.2} parent=111 // pred_check_branch
                %624 = sbr.rel (0) target = $region127
              $region126: #{additive_coupling_forward.2} parent=111 // pred_region
                loop: start=0, step=1, limit=1
                $region128: #{additive_coupling_forward.2} parent=126 // loop_pre_header
                  _
                $region129: #{additive_coupling_forward.2} parent=126 // loop_header
                  %s626 = sphi 0, %s630
                  %p627 = scmp.ge.s32.totalorder %s626, 1
                  %s631 = sphi %s543, %s543
                  %s632 = sphi %s539, %s539
                $region130: #{additive_coupling_forward.2} parent=126 // loop_header_branch
                  %629 = sbr.rel (%p627) target = $region134
                $region131: #{additive_coupling_forward.2} parent=126 // loop_body
                  %v633 = vld [vmem:[%s631] sm:$0xff]
                  %634 = vst [vmem:[%s632] sm:$0xff] %v633
                  %v635 = vld [vmem:[%s631 + $0x10] sm:$0xff]
                  %636 = vst [vmem:[%s632 + $0x8] sm:$0xff] %v635
                  %v637 = vld [vmem:[%s631 + $0x20] sm:$0xff]
                  %638 = vst [vmem:[%s632 + $0x10] sm:$0xff] %v637
                  %v639 = vld [vmem:[%s631 + $0x30] sm:$0xff]
                  %640 = vst [vmem:[%s632 + $0x18] sm:$0xff] %v639
                  %v641 = vld [vmem:[%s631 + $0x40] sm:$0xff]
                  %642 = vst [vmem:[%s632 + $0x20] sm:$0xff] %v641
                  %v643 = vld [vmem:[%s631 + $0x50] sm:$0xff]
                  %644 = vst [vmem:[%s632 + $0x28] sm:$0xff] %v643
                  %v645 = vld [vmem:[%s631 + $0x60] sm:$0xff]
                  %646 = vst [vmem:[%s632 + $0x30] sm:$0xff] %v645
                  %v647 = vld [vmem:[%s631 + $0x70] sm:$0xff]
                  %648 = vst [vmem:[%s632 + $0x38] sm:$0xff] %v647
                  %v649 = vld [vmem:[%s631 + $0x80] sm:$0xff]
                  %650 = vst [vmem:[%s632 + $0x40] sm:$0xff] %v649
                  %v651 = vld [vmem:[%s631 + $0x90] sm:$0xff]
                  %652 = vst [vmem:[%s632 + $0x48] sm:$0xff] %v651
                  %v653 = vld [vmem:[%s631 + $0xa0] sm:$0xff]
                  %654 = vst [vmem:[%s632 + $0x50] sm:$0xff] %v653
                  %v655 = vld [vmem:[%s631 + $0xb0] sm:$0xff]
                  %656 = vst [vmem:[%s632 + $0x58] sm:$0xff] %v655
                  %v657 = vld [vmem:[%s631 + $0xc0] sm:$0xff]
                  %658 = vst [vmem:[%s632 + $0x60] sm:$0xff] %v657
                  %v659 = vld [vmem:[%s631 + $0xd0] sm:$0xff]
                  %660 = vst [vmem:[%s632 + $0x68] sm:$0xff] %v659
                  %v661 = vld [vmem:[%s631 + $0xe0] sm:$0xff]
                  %662 = vst [vmem:[%s632 + $0x70] sm:$0xff] %v661
                  %v663 = vld [vmem:[%s631 + $0xf0] sm:$0xff]
                  %664 = vst [vmem:[%s632 + $0x78] sm:$0xff] %v663
                  %v665 = vld [vmem:[%s631 + $0x100] sm:$0xff]
                  %666 = vst [vmem:[%s632 + $0x80] sm:$0xff] %v665
                  %v667 = vld [vmem:[%s631 + $0x110] sm:$0xff]
                  %668 = vst [vmem:[%s632 + $0x88] sm:$0xff] %v667
                  %v669 = vld [vmem:[%s631 + $0x120] sm:$0xff]
                  %670 = vst [vmem:[%s632 + $0x90] sm:$0xff] %v669
                  %v671 = vld [vmem:[%s631 + $0x130] sm:$0xff]
                  %672 = vst [vmem:[%s632 + $0x98] sm:$0xff] %v671
                  %v673 = vld [vmem:[%s631 + $0x140] sm:$0xff]
                  %674 = vst [vmem:[%s632 + $0xa0] sm:$0xff] %v673
                  %v675 = vld [vmem:[%s631 + $0x150] sm:$0xff]
                  %676 = vst [vmem:[%s632 + $0xa8] sm:$0xff] %v675
                  %v677 = vld [vmem:[%s631 + $0x160] sm:$0xff]
                  %678 = vst [vmem:[%s632 + $0xb0] sm:$0xff] %v677
                  %v679 = vld [vmem:[%s631 + $0x170] sm:$0xff]
                  %680 = vst [vmem:[%s632 + $0xb8] sm:$0xff] %v679
                  %v681 = vld [vmem:[%s631 + $0x180] sm:$0xff]
                  %682 = vst [vmem:[%s632 + $0xc0] sm:$0xff] %v681
                  %v683 = vld [vmem:[%s631 + $0x190] sm:$0xff]
                  %684 = vst [vmem:[%s632 + $0xc8] sm:$0xff] %v683
                  %v685 = vld [vmem:[%s631 + $0x1a0] sm:$0xff]
                  %686 = vst [vmem:[%s632 + $0xd0] sm:$0xff] %v685
                  %v687 = vld [vmem:[%s631 + $0x1b0] sm:$0xff]
                  %688 = vst [vmem:[%s632 + $0xd8] sm:$0xff] %v687
                  %v689 = vld [vmem:[%s631 + $0x1c0] sm:$0xff]
                  %690 = vst [vmem:[%s632 + $0xe0] sm:$0xff] %v689
                  %v691 = vld [vmem:[%s631 + $0x1d0] sm:$0xff]
                  %692 = vst [vmem:[%s632 + $0xe8] sm:$0xff] %v691
                  %v693 = vld [vmem:[%s631 + $0x1e0] sm:$0xff]
                  %694 = vst [vmem:[%s632 + $0xf0] sm:$0xff] %v693
                  %v695 = vld [vmem:[%s631 + $0x1f0] sm:$0xff]
                  %696 = vst [vmem:[%s632 + $0xf8] sm:$0xff] %v695
                $region132: #{additive_coupling_forward.2} parent=126 // loop_footer
                  %s630 = sadd.s32 1, %s626
                $region133: #{additive_coupling_forward.2} parent=126 // loop_footer_branch
                  %625 = sbr.rel target = $region129
                $region134: #{additive_coupling_forward.2} parent=126 // loop_exit
                  _
              $region127: #{additive_coupling_forward.2} parent=111 // pred_fallthru
                _
              // Predicated region
              $region135: #{additive_coupling_forward.2} parent=111 // pred_check
                _
              $region136: #{additive_coupling_forward.2} parent=111 // pred_check_branch
                %698 = sbr.rel target = $region138
              $region137: #{additive_coupling_forward.2} parent=111 // pred_region
                _
              $region138: #{additive_coupling_forward.2} parent=111 // pred_fallthru
                _
            $region112: #{additive_coupling_forward.2} parent=107 // pred_fallthru
              _
            // Predicated region
            $region113: #{additive_coupling_forward.2} parent=107 // pred_check
              _
            $region114: #{additive_coupling_forward.2} parent=107 // pred_check_branch
              %549 = sbr.rel target = $region116
            $region115: #{additive_coupling_forward.2} parent=107 // pred_region
              loop: start=0, step=1, limit=1
              $region117: #{additive_coupling_forward.2} parent=115 // loop_pre_header
                _
              $region118: #{additive_coupling_forward.2} parent=115 // loop_header
                %s552 = sphi 0, %s556
                %p553 = scmp.ge.s32.totalorder %s552, 1
                %s557 = sphi %s543, %s543
                %s558 = sphi %s539, %s539
              $region119: #{additive_coupling_forward.2} parent=115 // loop_header_branch
                %555 = sbr.rel (%p553) target = $region123
              $region120: #{additive_coupling_forward.2} parent=115 // loop_body
                %v559 = vld [vmem:[%s557] sm:$0xff]
                %560 = vst [vmem:[%s558] sm:$0xff] %v559
                %v561 = vld [vmem:[%s557 + $0x10] sm:$0xff]
                %562 = vst [vmem:[%s558 + $0x8] sm:$0xff] %v561
                %v563 = vld [vmem:[%s557 + $0x20] sm:$0xff]
                %564 = vst [vmem:[%s558 + $0x10] sm:$0xff] %v563
                %v565 = vld [vmem:[%s557 + $0x30] sm:$0xff]
                %566 = vst [vmem:[%s558 + $0x18] sm:$0xff] %v565
                %v567 = vld [vmem:[%s557 + $0x40] sm:$0xff]
                %568 = vst [vmem:[%s558 + $0x20] sm:$0xff] %v567
                %v569 = vld [vmem:[%s557 + $0x50] sm:$0xff]
                %570 = vst [vmem:[%s558 + $0x28] sm:$0xff] %v569
                %v571 = vld [vmem:[%s557 + $0x60] sm:$0xff]
                %572 = vst [vmem:[%s558 + $0x30] sm:$0xff] %v571
                %v573 = vld [vmem:[%s557 + $0x70] sm:$0xff]
                %574 = vst [vmem:[%s558 + $0x38] sm:$0xff] %v573
                %v575 = vld [vmem:[%s557 + $0x80] sm:$0xff]
                %576 = vst [vmem:[%s558 + $0x40] sm:$0xff] %v575
                %v577 = vld [vmem:[%s557 + $0x90] sm:$0xff]
                %578 = vst [vmem:[%s558 + $0x48] sm:$0xff] %v577
                %v579 = vld [vmem:[%s557 + $0xa0] sm:$0xff]
                %580 = vst [vmem:[%s558 + $0x50] sm:$0xff] %v579
                %v581 = vld [vmem:[%s557 + $0xb0] sm:$0xff]
                %582 = vst [vmem:[%s558 + $0x58] sm:$0xff] %v581
                %v583 = vld [vmem:[%s557 + $0xc0] sm:$0xff]
                %584 = vst [vmem:[%s558 + $0x60] sm:$0xff] %v583
                %v585 = vld [vmem:[%s557 + $0xd0] sm:$0xff]
                %586 = vst [vmem:[%s558 + $0x68] sm:$0xff] %v585
                %v587 = vld [vmem:[%s557 + $0xe0] sm:$0xff]
                %588 = vst [vmem:[%s558 + $0x70] sm:$0xff] %v587
                %v589 = vld [vmem:[%s557 + $0xf0] sm:$0xff]
                %590 = vst [vmem:[%s558 + $0x78] sm:$0xff] %v589
                %v591 = vld [vmem:[%s557 + $0x100] sm:$0xff]
                %592 = vst [vmem:[%s558 + $0x80] sm:$0xff] %v591
                %v593 = vld [vmem:[%s557 + $0x110] sm:$0xff]
                %594 = vst [vmem:[%s558 + $0x88] sm:$0xff] %v593
                %v595 = vld [vmem:[%s557 + $0x120] sm:$0xff]
                %596 = vst [vmem:[%s558 + $0x90] sm:$0xff] %v595
                %v597 = vld [vmem:[%s557 + $0x130] sm:$0xff]
                %598 = vst [vmem:[%s558 + $0x98] sm:$0xff] %v597
                %v599 = vld [vmem:[%s557 + $0x140] sm:$0xff]
                %600 = vst [vmem:[%s558 + $0xa0] sm:$0xff] %v599
                %v601 = vld [vmem:[%s557 + $0x150] sm:$0xff]
                %602 = vst [vmem:[%s558 + $0xa8] sm:$0xff] %v601
                %v603 = vld [vmem:[%s557 + $0x160] sm:$0xff]
                %604 = vst [vmem:[%s558 + $0xb0] sm:$0xff] %v603
                %v605 = vld [vmem:[%s557 + $0x170] sm:$0xff]
                %606 = vst [vmem:[%s558 + $0xb8] sm:$0xff] %v605
                %v607 = vld [vmem:[%s557 + $0x180] sm:$0xff]
                %608 = vst [vmem:[%s558 + $0xc0] sm:$0xff] %v607
                %v609 = vld [vmem:[%s557 + $0x190] sm:$0xff]
                %610 = vst [vmem:[%s558 + $0xc8] sm:$0xff] %v609
                %v611 = vld [vmem:[%s557 + $0x1a0] sm:$0xff]
                %612 = vst [vmem:[%s558 + $0xd0] sm:$0xff] %v611
                %v613 = vld [vmem:[%s557 + $0x1b0] sm:$0xff]
                %614 = vst [vmem:[%s558 + $0xd8] sm:$0xff] %v613
                %v615 = vld [vmem:[%s557 + $0x1c0] sm:$0xff]
                %616 = vst [vmem:[%s558 + $0xe0] sm:$0xff] %v615
                %v617 = vld [vmem:[%s557 + $0x1d0] sm:$0xff]
                %618 = vst [vmem:[%s558 + $0xe8] sm:$0xff] %v617
                %v619 = vld [vmem:[%s557 + $0x1e0] sm:$0xff]
                %620 = vst [vmem:[%s558 + $0xf0] sm:$0xff] %v619
                %v621 = vld [vmem:[%s557 + $0x1f0] sm:$0xff]
                %622 = vst [vmem:[%s558 + $0xf8] sm:$0xff] %v621
              $region121: #{additive_coupling_forward.2} parent=115 // loop_footer
                %s556 = sadd.s32 1, %s552
              $region122: #{additive_coupling_forward.2} parent=115 // loop_footer_branch
                %551 = sbr.rel target = $region118
              $region123: #{additive_coupling_forward.2} parent=115 // loop_exit
                _
            $region116: #{additive_coupling_forward.2} parent=107 // pred_fallthru
              _
          $region108: #{additive_coupling_forward.2} parent=103 // pred_fallthru
            _
          %699 = vnop
        $region104: #{additive_coupling_forward.2} parent=23 // pred_fallthru
          _
      $region24: #{additive_coupling_forward.2} parent=5 // pred_fallthru
        _
      %p700 = scmp.le.s32.totalorder 1, %s11
      %p701 = scmp.lt.s32.totalorder %s11, 5
      %p702 = pnand %p700, %p701
      %p703 = pneg %p702
      // Predicated region
      $region139: #{additive_coupling_forward.2} parent=5 // pred_check
        _
      $region140: #{additive_coupling_forward.2} parent=5 // pred_check_branch
        %705 = sbr.rel (%p702) target = $region142
      $region141: #{additive_coupling_forward.2} parent=5 // pred_region
        %s706 = ssub.s32 %s11, 1
        %s707 = sand.u32 %s38, 1
        %s708 = sand.u32 %s38, 1
        %s709 = smul.addr %s708, 256
        %s710 = scalar_lea.vmem [#allocation3], %s709
        // Predicated region
        $region143: #{additive_coupling_forward.2} parent=141 // pred_check
          %p711 = pneg %p51
        $region144: #{additive_coupling_forward.2} parent=141 // pred_check_branch
          %713 = sbr.rel (%p711) target = $region146
        $region145: #{additive_coupling_forward.2} parent=141 // pred_region
          _
        $region146: #{additive_coupling_forward.2} parent=141 // pred_fallthru
          _
        %s714 = sand.u32 %s64, 1
        %s715 = sand.u32 %s64, 1
        %s716 = smul.addr %s715, 256
        %s717 = scalar_lea.vmem [#allocation4], %s716
        // Predicated region
        $region147: #{additive_coupling_forward.2} parent=141 // pred_check
          %p718 = pneg %p77
        $region148: #{additive_coupling_forward.2} parent=141 // pred_check_branch
          %720 = sbr.rel (%p718) target = $region150
        $region149: #{additive_coupling_forward.2} parent=141 // pred_region
          _
        $region150: #{additive_coupling_forward.2} parent=141 // pred_fallthru
          _
        %s721 = sand.u32 %s90, 1
        %s722 = sand.u32 %s90, 1
        %s723 = smul.addr %s722, 256
        %s724 = scalar_lea.vmem [#allocation5], %s723
        // Predicated region
        $region151: #{additive_coupling_forward.2} parent=141 // pred_check
          %p725 = pneg %p103
        $region152: #{additive_coupling_forward.2} parent=141 // pred_check_branch
          %727 = sbr.rel (%p725) target = $region154
        $region153: #{additive_coupling_forward.2} parent=141 // pred_region
          _
        $region154: #{additive_coupling_forward.2} parent=141 // pred_fallthru
          _
        %s728 = sand.u32 %s38, 1
        %s729 = sand.u32 %s38, 1
        %s730 = smul.addr %s729, 256
        %s731 = scalar_lea.vmem [#allocation3], %s730
        %p732 = pneg %p51
        %p733 = pneg %p48
        %s734 = sand.u32 %s64, 1
        %s735 = sand.u32 %s64, 1
        %s736 = smul.addr %s735, 256
        %s737 = scalar_lea.vmem [#allocation4], %s736
        %p738 = pneg %p77
        %p739 = pneg %p74
        %s740 = sand.u32 %s90, 1
        %s741 = sand.u32 %s90, 1
        %s742 = smul.addr %s741, 256
        %s743 = scalar_lea.vmem [#allocation5], %s742
        %p744 = pneg %p103
        %p745 = pneg %p100
        %p746 = pneg %p124
        %p747 = pneg %p121
        %p748 = pneg %p145
        %p749 = pneg %p142
        %p750 = pneg %p171
        %p751 = pneg %p168
        %s752 = smul.u32 32, %s20
        %p753 = scmp.lt.s32.totalorder %s752, 63
        %s754 = scalar_select %p753, %s752, 63
        %s755 = smul.addr %s754, 8
        %s756 = scalar_lea.vmem %s5, %s755
        %s757 = smul.u32 32, %s20
        %s758 = smul.u32 2, %s21
        %s759 = smul.u32 32, %s21
        %s760 = smul.u32 32, %s20
        %s761 = smul.u32 32, %s20
        %p762 = scmp.lt.s32.totalorder %s761, 63
        %s763 = scalar_select %p762, %s761, 63
        %s764 = smul.addr %s763, 8
        %s765 = scalar_lea.vmem %s5, %s764
        %s766 = smul.u32 32, %s20
        %p768 = scmp.eq.s32.totalorder %s21, 0
        // Predicated region
        $region155: #{additive_coupling_forward.2} parent=141 // pred_check
          %p769 = pneg %p768
        $region156: #{additive_coupling_forward.2} parent=141 // pred_check_branch
          %771 = sbr.rel (%p769) target = $region158
        $region157: #{additive_coupling_forward.2} parent=141 // pred_region
          %772 = vst [vmem:[#allocation2] sm:$0xff] 0.0
          %773 = vst [vmem:[#allocation2 + $0x8] sm:$0xff] 0.0
          %774 = vst [vmem:[#allocation2 + $0x10] sm:$0xff] 0.0
          %775 = vst [vmem:[#allocation2 + $0x18] sm:$0xff] 0.0
          %776 = vst [vmem:[#allocation2 + $0x20] sm:$0xff] 0.0
          %777 = vst [vmem:[#allocation2 + $0x28] sm:$0xff] 0.0
          %778 = vst [vmem:[#allocation2 + $0x30] sm:$0xff] 0.0
          %779 = vst [vmem:[#allocation2 + $0x38] sm:$0xff] 0.0
          %780 = vst [vmem:[#allocation2 + $0x40] sm:$0xff] 0.0
          %781 = vst [vmem:[#allocation2 + $0x48] sm:$0xff] 0.0
          %782 = vst [vmem:[#allocation2 + $0x50] sm:$0xff] 0.0
          %783 = vst [vmem:[#allocation2 + $0x58] sm:$0xff] 0.0
          %784 = vst [vmem:[#allocation2 + $0x60] sm:$0xff] 0.0
          %785 = vst [vmem:[#allocation2 + $0x68] sm:$0xff] 0.0
          %786 = vst [vmem:[#allocation2 + $0x70] sm:$0xff] 0.0
          %787 = vst [vmem:[#allocation2 + $0x78] sm:$0xff] 0.0
          %788 = vst [vmem:[#allocation2 + $0x80] sm:$0xff] 0.0
          %789 = vst [vmem:[#allocation2 + $0x88] sm:$0xff] 0.0
          %790 = vst [vmem:[#allocation2 + $0x90] sm:$0xff] 0.0
          %791 = vst [vmem:[#allocation2 + $0x98] sm:$0xff] 0.0
          %792 = vst [vmem:[#allocation2 + $0xa0] sm:$0xff] 0.0
          %793 = vst [vmem:[#allocation2 + $0xa8] sm:$0xff] 0.0
          %794 = vst [vmem:[#allocation2 + $0xb0] sm:$0xff] 0.0
          %795 = vst [vmem:[#allocation2 + $0xb8] sm:$0xff] 0.0
          %796 = vst [vmem:[#allocation2 + $0xc0] sm:$0xff] 0.0
          %797 = vst [vmem:[#allocation2 + $0xc8] sm:$0xff] 0.0
          %798 = vst [vmem:[#allocation2 + $0xd0] sm:$0xff] 0.0
          %799 = vst [vmem:[#allocation2 + $0xd8] sm:$0xff] 0.0
          %800 = vst [vmem:[#allocation2 + $0xe0] sm:$0xff] 0.0
          %801 = vst [vmem:[#allocation2 + $0xe8] sm:$0xff] 0.0
          %802 = vst [vmem:[#allocation2 + $0xf0] sm:$0xff] 0.0
          %803 = vst [vmem:[#allocation2 + $0xf8] sm:$0xff] 0.0
        $region158: #{additive_coupling_forward.2} parent=141 // pred_fallthru
          _
        %v804 = vld [vmem:[%s717] sm:$0xff]
        %v805 = vld [vmem:[%s717 + $0x8] sm:$0xff]
        %v806 = vld [vmem:[%s717 + $0x10] sm:$0xff]
        %v807 = vld [vmem:[%s717 + $0x18] sm:$0xff]
        %v808 = vld [vmem:[%s717 + $0x20] sm:$0xff]
        %v809 = vld [vmem:[%s717 + $0x28] sm:$0xff]
        %v810 = vld [vmem:[%s717 + $0x30] sm:$0xff]
        %v811 = vld [vmem:[%s717 + $0x38] sm:$0xff]
        %v812 = vld [vmem:[%s717 + $0x40] sm:$0xff]
        %v813 = vld [vmem:[%s717 + $0x48] sm:$0xff]
        %v814 = vld [vmem:[%s717 + $0x50] sm:$0xff]
        %v815 = vld [vmem:[%s717 + $0x58] sm:$0xff]
        %v816 = vld [vmem:[%s717 + $0x60] sm:$0xff]
        %v817 = vld [vmem:[%s717 + $0x68] sm:$0xff]
        %v818 = vld [vmem:[%s717 + $0x70] sm:$0xff]
        %v819 = vld [vmem:[%s717 + $0x78] sm:$0xff]
        %v820 = vld [vmem:[%s717 + $0x80] sm:$0xff]
        %v821 = vld [vmem:[%s717 + $0x88] sm:$0xff]
        %v822 = vld [vmem:[%s717 + $0x90] sm:$0xff]
        %v823 = vld [vmem:[%s717 + $0x98] sm:$0xff]
        %v824 = vld [vmem:[%s717 + $0xa0] sm:$0xff]
        %v825 = vld [vmem:[%s717 + $0xa8] sm:$0xff]
        %v826 = vld [vmem:[%s717 + $0xb0] sm:$0xff]
        %v827 = vld [vmem:[%s717 + $0xb8] sm:$0xff]
        %v828 = vld [vmem:[%s717 + $0xc0] sm:$0xff]
        %v829 = vld [vmem:[%s717 + $0xc8] sm:$0xff]
        %v830 = vld [vmem:[%s717 + $0xd0] sm:$0xff]
        %v831 = vld [vmem:[%s717 + $0xd8] sm:$0xff]
        %v832 = vld [vmem:[%s717 + $0xe0] sm:$0xff]
        %v833 = vld [vmem:[%s717 + $0xe8] sm:$0xff]
        %v834 = vld [vmem:[%s717 + $0xf0] sm:$0xff]
        %v835 = vld [vmem:[%s717 + $0xf8] sm:$0xff]
        %v836 = vpack.c.bf16 %v805, %v804
        %v837 = vpack.c.bf16 %v807, %v806
        %v838 = vpack.c.bf16 %v809, %v808
        %v839 = vpack.c.bf16 %v811, %v810
        %v840 = vpack.c.bf16 %v813, %v812
        %v841 = vpack.c.bf16 %v815, %v814
        %v842 = vpack.c.bf16 %v817, %v816
        %v843 = vpack.c.bf16 %v819, %v818
        %v844 = vpack.c.bf16 %v821, %v820
        %v845 = vpack.c.bf16 %v823, %v822
        %v846 = vpack.c.bf16 %v825, %v824
        %v847 = vpack.c.bf16 %v827, %v826
        %v848 = vpack.c.bf16 %v829, %v828
        %v849 = vpack.c.bf16 %v831, %v830
        %v850 = vpack.c.bf16 %v833, %v832
        %v851 = vpack.c.bf16 %v835, %v834
        %v852 = vld [vmem:[%s3] sm:$0xf]
        %v853 = vld [vmem:[%s3 + $0x4] sm:$0xf]
        %v854 = vld [vmem:[%s3 + $0x8] sm:$0xf]
        %v855 = vld [vmem:[%s3 + $0xc] sm:$0xf]
        %v856 = vld [vmem:[%s3 + $0x10] sm:$0xf]
        %v857 = vld [vmem:[%s3 + $0x14] sm:$0xf]
        %v858 = vld [vmem:[%s3 + $0x18] sm:$0xf]
        %v859 = vld [vmem:[%s3 + $0x1c] sm:$0xf]
        %v860 = vld [vmem:[%s3 + $0x20] sm:$0xf]
        %v861 = vld [vmem:[%s3 + $0x24] sm:$0xf]
        %v862 = vld [vmem:[%s3 + $0x28] sm:$0xf]
        %v863 = vld [vmem:[%s3 + $0x2c] sm:$0xf]
        %v864 = vld [vmem:[%s3 + $0x30] sm:$0xf]
        %v865 = vld [vmem:[%s3 + $0x34] sm:$0xf]
        %v866 = vld [vmem:[%s3 + $0x38] sm:$0xf]
        %v867 = vld [vmem:[%s3 + $0x3c] sm:$0xf]
        %v884 = vunpack.c.l.b16 %v852
        %v885 = vunpack.c.l.b16 %v853
        %v886 = vunpack.c.l.b16 %v854
        %v887 = vunpack.c.l.b16 %v855
        %v888 = vunpack.c.l.b16 %v856
        %v889 = vunpack.c.l.b16 %v857
        %v890 = vunpack.c.l.b16 %v858
        %v891 = vunpack.c.l.b16 %v859
        %v892 = vunpack.c.l.b16 %v860
        %v893 = vunpack.c.l.b16 %v861
        %v894 = vunpack.c.l.b16 %v862
        %v895 = vunpack.c.l.b16 %v863
        %v896 = vunpack.c.l.b16 %v864
        %v897 = vunpack.c.l.b16 %v865
        %v898 = vunpack.c.l.b16 %v866
        %v899 = vunpack.c.l.b16 %v867
        %v900 = vpack.c.b16 %v885, %v884
        %v901 = vpack.c.b16 %v887, %v886
        %v902 = vpack.c.b16 %v889, %v888
        %v903 = vpack.c.b16 %v891, %v890
        %v904 = vpack.c.b16 %v893, %v892
        %v905 = vpack.c.b16 %v895, %v894
        %v906 = vpack.c.b16 %v897, %v896
        %v907 = vpack.c.b16 %v899, %v898
        %916 = vmatprep.subr.bf16.mxu0 0
        %917 = vmatpush1.bf16.msra.mxu0 %v900
        %918 = vmatprep.subr.bf16.mxu0 0
        %919 = vmatpush1.bf16.msra.mxu0 %v901
        %920 = vmatprep.subr.bf16.mxu0 0
        %921 = vmatpush1.bf16.msra.mxu0 %v902
        %922 = vmatprep.subr.bf16.mxu0 0
        %923 = vmatpush1.bf16.msra.mxu0 %v903
        %924 = vmatprep.subr.bf16.mxu0 0
        %925 = vmatpush1.bf16.msra.mxu0 %v904
        %926 = vmatprep.subr.bf16.mxu0 0
        %927 = vmatpush1.bf16.msra.mxu0 %v905
        %928 = vmatprep.subr.bf16.mxu0 0
        %929 = vmatpush1.bf16.msra.mxu0 %v906
        %930 = vmatprep.subr.bf16.mxu0 0
        %931 = vmatpush1.bf16.msra.mxu0 %v907
        %932 = vmatprep.subr.bf16.mxu0 0
        %933 = vmatpush1.bf16.msra.mxu0 0
        %934 = vmatprep.subr.bf16.mxu0 0
        %935 = vmatpush1.bf16.msra.mxu0 0
        %936 = vmatprep.subr.bf16.mxu0 0
        %937 = vmatpush1.bf16.msra.mxu0 0
        %938 = vmatprep.subr.bf16.mxu0 0
        %939 = vmatpush1.bf16.msra.mxu0 0
        %940 = vmatprep.subr.bf16.mxu0 0
        %941 = vmatpush1.bf16.msra.mxu0 0
        %942 = vmatprep.subr.bf16.mxu0 0
        %943 = vmatpush1.bf16.msra.mxu0 0
        %944 = vmatprep.subr.bf16.mxu0 0
        %945 = vmatpush1.bf16.msra.mxu0 0
        %946 = vmatprep.subr.bf16.mxu0 0
        %947 = vmatpush1.bf16.msra.mxu0 0
        %948 = vmatprep.mubr.bf16.mxu0 0
        %949 = vmatmul.mubr.bf16.gmra.mrb[0].mxu0 %v836
        %v950 = vpop.f32.mrb[0].mxu0
        %v951 = vadd.f32 0.0, %v950
        %v952 = vpop.f32.mrb[0].mxu0
        %v953 = vpop.f32.mrb[0].mxu0
        %v954 = vadd.f32 0.0, %v953
        %v955 = vpop.f32.mrb[0].mxu0
        %956 = vmatprep.mubr.bf16.mxu0 0
        %957 = vmatmul.mubr.bf16.gmra.mrb[0].mxu0 %v837
        %v958 = vpop.f32.mrb[0].mxu0
        %v959 = vadd.f32 0.0, %v958
        %v960 = vpop.f32.mrb[0].mxu0
        %v961 = vpop.f32.mrb[0].mxu0
        %v962 = vadd.f32 0.0, %v961
        %v963 = vpop.f32.mrb[0].mxu0
        %964 = vmatprep.mubr.bf16.mxu0 0
        %965 = vmatmul.mubr.bf16.gmra.mrb[0].mxu0 %v838
        %v966 = vpop.f32.mrb[0].mxu0
        %v967 = vadd.f32 0.0, %v966
        %v968 = vpop.f32.mrb[0].mxu0
        %v969 = vpop.f32.mrb[0].mxu0
        %v970 = vadd.f32 0.0, %v969
        %v971 = vpop.f32.mrb[0].mxu0
        %972 = vmatprep.mubr.bf16.mxu0 0
        %973 = vmatmul.mubr.bf16.gmra.mrb[0].mxu0 %v839
        %v974 = vpop.f32.mrb[0].mxu0
        %v975 = vadd.f32 0.0, %v974
        %v976 = vpop.f32.mrb[0].mxu0
        %v977 = vpop.f32.mrb[0].mxu0
        %v978 = vadd.f32 0.0, %v977
        %v979 = vpop.f32.mrb[0].mxu0
        %980 = vmatprep.mubr.bf16.mxu0 0
        %981 = vmatmul.mubr.bf16.gmra.mrb[0].mxu0 %v840
        %v982 = vpop.f32.mrb[0].mxu0
        %v983 = vadd.f32 0.0, %v982
        %v984 = vpop.f32.mrb[0].mxu0
        %v985 = vpop.f32.mrb[0].mxu0
        %v986 = vadd.f32 0.0, %v985
        %v987 = vpop.f32.mrb[0].mxu0
        %988 = vmatprep.mubr.bf16.mxu0 0
        %989 = vmatmul.mubr.bf16.gmra.mrb[0].mxu0 %v841
        %v990 = vpop.f32.mrb[0].mxu0
        %v991 = vadd.f32 0.0, %v990
        %v992 = vpop.f32.mrb[0].mxu0
        %v993 = vpop.f32.mrb[0].mxu0
        %v994 = vadd.f32 0.0, %v993
        %v995 = vpop.f32.mrb[0].mxu0
        %996 = vmatprep.mubr.bf16.mxu0 0
        %997 = vmatmul.mubr.bf16.gmra.mrb[0].mxu0 %v842
        %v998 = vpop.f32.mrb[0].mxu0
        %v999 = vadd.f32 0.0, %v998
        %v1000 = vpop.f32.mrb[0].mxu0
        %v1001 = vpop.f32.mrb[0].mxu0
        %v1002 = vadd.f32 0.0, %v1001
        %v1003 = vpop.f32.mrb[0].mxu0
        %1004 = vmatprep.mubr.bf16.mxu0 0
        %1005 = vmatmul.mubr.bf16.gmra.mrb[0].mxu0 %v843
        %v1006 = vpop.f32.mrb[0].mxu0
        %v1007 = vadd.f32 0.0, %v1006
        %v1008 = vpop.f32.mrb[0].mxu0
        %v1009 = vpop.f32.mrb[0].mxu0
        %v1010 = vadd.f32 0.0, %v1009
        %v1011 = vpop.f32.mrb[0].mxu0
        %1012 = vmatprep.mubr.bf16.mxu0 0
        %1013 = vmatmul.mubr.bf16.gmra.mrb[0].mxu0 %v844
        %v1014 = vpop.f32.mrb[0].mxu0
        %v1015 = vadd.f32 0.0, %v1014
        %v1016 = vpop.f32.mrb[0].mxu0
        %v1017 = vpop.f32.mrb[0].mxu0
        %v1018 = vadd.f32 0.0, %v1017
        %v1019 = vpop.f32.mrb[0].mxu0
        %1020 = vmatprep.mubr.bf16.mxu0 0
        %1021 = vmatmul.mubr.bf16.gmra.mrb[0].mxu0 %v845
        %v1022 = vpop.f32.mrb[0].mxu0
        %v1023 = vadd.f32 0.0, %v1022
        %v1024 = vpop.f32.mrb[0].mxu0
        %v1025 = vpop.f32.mrb[0].mxu0
        %v1026 = vadd.f32 0.0, %v1025
        %v1027 = vpop.f32.mrb[0].mxu0
        %1028 = vmatprep.mubr.bf16.mxu0 0
        %1029 = vmatmul.mubr.bf16.gmra.mrb[0].mxu0 %v846
        %v1030 = vpop.f32.mrb[0].mxu0
        %v1031 = vadd.f32 0.0, %v1030
        %v1032 = vpop.f32.mrb[0].mxu0
        %v1033 = vpop.f32.mrb[0].mxu0
        %v1034 = vadd.f32 0.0, %v1033
        %v1035 = vpop.f32.mrb[0].mxu0
        %1036 = vmatprep.mubr.bf16.mxu0 0
        %1037 = vmatmul.mubr.bf16.gmra.mrb[0].mxu0 %v847
        %v1038 = vpop.f32.mrb[0].mxu0
        %v1039 = vadd.f32 0.0, %v1038
        %v1040 = vpop.f32.mrb[0].mxu0
        %v1041 = vpop.f32.mrb[0].mxu0
        %v1042 = vadd.f32 0.0, %v1041
        %v1043 = vpop.f32.mrb[0].mxu0
        %1044 = vmatprep.mubr.bf16.mxu0 0
        %1045 = vmatmul.mubr.bf16.gmra.mrb[0].mxu0 %v848
        %v1046 = vpop.f32.mrb[0].mxu0
        %v1047 = vadd.f32 0.0, %v1046
        %v1048 = vpop.f32.mrb[0].mxu0
        %v1049 = vpop.f32.mrb[0].mxu0
        %v1050 = vadd.f32 0.0, %v1049
        %v1051 = vpop.f32.mrb[0].mxu0
        %1052 = vmatprep.mubr.bf16.mxu0 0
        %1053 = vmatmul.mubr.bf16.gmra.mrb[0].mxu0 %v849
        %v1054 = vpop.f32.mrb[0].mxu0
        %v1055 = vadd.f32 0.0, %v1054
        %v1056 = vpop.f32.mrb[0].mxu0
        %v1057 = vpop.f32.mrb[0].mxu0
        %v1058 = vadd.f32 0.0, %v1057
        %v1059 = vpop.f32.mrb[0].mxu0
        %1060 = vmatprep.mubr.bf16.mxu0 0
        %1061 = vmatmul.mubr.bf16.gmra.mrb[0].mxu0 %v850
        %v1062 = vpop.f32.mrb[0].mxu0
        %v1063 = vadd.f32 0.0, %v1062
        %v1064 = vpop.f32.mrb[0].mxu0
        %v1065 = vpop.f32.mrb[0].mxu0
        %v1066 = vadd.f32 0.0, %v1065
        %v1067 = vpop.f32.mrb[0].mxu0
        %1068 = vmatprep.mubr.bf16.mxu0 0
        %1069 = vmatmul.mubr.bf16.gmra.mrb[0].mxu0 %v851
        %v1070 = vpop.f32.mrb[0].mxu0
        %v1071 = vadd.f32 0.0, %v1070
        %v1072 = vpop.f32.mrb[0].mxu0
        %v1073 = vpop.f32.mrb[0].mxu0
        %v1074 = vadd.f32 0.0, %v1073
        %v1075 = vpop.f32.mrb[0].mxu0
        %1076 = vdwg.mxu0
        %v1077 = vpack.c.bf16 %v954, %v951
        %v1078 = vpack.c.bf16 %v962, %v959
        %v1079 = vpack.c.bf16 %v970, %v967
        %v1080 = vpack.c.bf16 %v978, %v975
        %v1081 = vpack.c.bf16 %v986, %v983
        %v1082 = vpack.c.bf16 %v994, %v991
        %v1083 = vpack.c.bf16 %v1002, %v999
        %v1084 = vpack.c.bf16 %v1010, %v1007
        %v1085 = vpack.c.bf16 %v1018, %v1015
        %v1086 = vpack.c.bf16 %v1026, %v1023
        %v1087 = vpack.c.bf16 %v1034, %v1031
        %v1088 = vpack.c.bf16 %v1042, %v1039
        %v1089 = vpack.c.bf16 %v1050, %v1047
        %v1090 = vpack.c.bf16 %v1058, %v1055
        %v1091 = vpack.c.bf16 %v1066, %v1063
        %v1092 = vpack.c.bf16 %v1074, %v1071
        %v1093 = vld [vmem:[#allocation2] sm:$0xff]
        %v1094 = vld [vmem:[#allocation2 + $0x8] sm:$0xff]
        %v1095 = vld [vmem:[#allocation2 + $0x10] sm:$0xff]
        %v1096 = vld [vmem:[#allocation2 + $0x18] sm:$0xff]
        %v1097 = vld [vmem:[#allocation2 + $0x20] sm:$0xff]
        %v1098 = vld [vmem:[#allocation2 + $0x28] sm:$0xff]
        %v1099 = vld [vmem:[#allocation2 + $0x30] sm:$0xff]
        %v1100 = vld [vmem:[#allocation2 + $0x38] sm:$0xff]
        %v1101 = vld [vmem:[#allocation2 + $0x40] sm:$0xff]
        %v1102 = vld [vmem:[#allocation2 + $0x48] sm:$0xff]
        %v1103 = vld [vmem:[#allocation2 + $0x50] sm:$0xff]
        %v1104 = vld [vmem:[#allocation2 + $0x58] sm:$0xff]
        %v1105 = vld [vmem:[#allocation2 + $0x60] sm:$0xff]
        %v1106 = vld [vmem:[#allocation2 + $0x68] sm:$0xff]
        %v1107 = vld [vmem:[#allocation2 + $0x70] sm:$0xff]
        %v1108 = vld [vmem:[#allocation2 + $0x78] sm:$0xff]
        %v1109 = vld [vmem:[#allocation2 + $0x80] sm:$0xff]
        %v1110 = vld [vmem:[#allocation2 + $0x88] sm:$0xff]
        %v1111 = vld [vmem:[#allocation2 + $0x90] sm:$0xff]
        %v1112 = vld [vmem:[#allocation2 + $0x98] sm:$0xff]
        %v1113 = vld [vmem:[#allocation2 + $0xa0] sm:$0xff]
        %v1114 = vld [vmem:[#allocation2 + $0xa8] sm:$0xff]
        %v1115 = vld [vmem:[#allocation2 + $0xb0] sm:$0xff]
        %v1116 = vld [vmem:[#allocation2 + $0xb8] sm:$0xff]
        %v1117 = vld [vmem:[#allocation2 + $0xc0] sm:$0xff]
        %v1118 = vld [vmem:[#allocation2 + $0xc8] sm:$0xff]
        %v1119 = vld [vmem:[#allocation2 + $0xd0] sm:$0xff]
        %v1120 = vld [vmem:[#allocation2 + $0xd8] sm:$0xff]
        %v1121 = vld [vmem:[#allocation2 + $0xe0] sm:$0xff]
        %v1122 = vld [vmem:[#allocation2 + $0xe8] sm:$0xff]
        %v1123 = vld [vmem:[#allocation2 + $0xf0] sm:$0xff]
        %v1124 = vld [vmem:[#allocation2 + $0xf8] sm:$0xff]
        %v1125 = vld [vmem:[%s710] sm:$0xff]
        %v1126 = vld [vmem:[%s710 + $0x8] sm:$0xff]
        %v1127 = vld [vmem:[%s710 + $0x10] sm:$0xff]
        %v1128 = vld [vmem:[%s710 + $0x18] sm:$0xff]
        %v1129 = vld [vmem:[%s710 + $0x20] sm:$0xff]
        %v1130 = vld [vmem:[%s710 + $0x28] sm:$0xff]
        %v1131 = vld [vmem:[%s710 + $0x30] sm:$0xff]
        %v1132 = vld [vmem:[%s710 + $0x38] sm:$0xff]
        %v1133 = vld [vmem:[%s710 + $0x40] sm:$0xff]
        %v1134 = vld [vmem:[%s710 + $0x48] sm:$0xff]
        %v1135 = vld [vmem:[%s710 + $0x50] sm:$0xff]
        %v1136 = vld [vmem:[%s710 + $0x58] sm:$0xff]
        %v1137 = vld [vmem:[%s710 + $0x60] sm:$0xff]
        %v1138 = vld [vmem:[%s710 + $0x68] sm:$0xff]
        %v1139 = vld [vmem:[%s710 + $0x70] sm:$0xff]
        %v1140 = vld [vmem:[%s710 + $0x78] sm:$0xff]
        %v1141 = vld [vmem:[%s710 + $0x80] sm:$0xff]
        %v1142 = vld [vmem:[%s710 + $0x88] sm:$0xff]
        %v1143 = vld [vmem:[%s710 + $0x90] sm:$0xff]
        %v1144 = vld [vmem:[%s710 + $0x98] sm:$0xff]
        %v1145 = vld [vmem:[%s710 + $0xa0] sm:$0xff]
        %v1146 = vld [vmem:[%s710 + $0xa8] sm:$0xff]
        %v1147 = vld [vmem:[%s710 + $0xb0] sm:$0xff]
        %v1148 = vld [vmem:[%s710 + $0xb8] sm:$0xff]
        %v1149 = vld [vmem:[%s710 + $0xc0] sm:$0xff]
        %v1150 = vld [vmem:[%s710 + $0xc8] sm:$0xff]
        %v1151 = vld [vmem:[%s710 + $0xd0] sm:$0xff]
        %v1152 = vld [vmem:[%s710 + $0xd8] sm:$0xff]
        %v1153 = vld [vmem:[%s710 + $0xe0] sm:$0xff]
        %v1154 = vld [vmem:[%s710 + $0xe8] sm:$0xff]
        %v1155 = vld [vmem:[%s710 + $0xf0] sm:$0xff]
        %v1156 = vld [vmem:[%s710 + $0xf8] sm:$0xff]
        %v1189 = vunpack.c.l.b16 %v1125
        %v1190 = vunpack.c.h.b16 %v1125
        %v1191 = vunpack.c.l.b16 %v1126
        %v1192 = vunpack.c.h.b16 %v1126
        %v1193 = vunpack.c.l.b16 %v1127
        %v1194 = vunpack.c.h.b16 %v1127
        %v1195 = vunpack.c.l.b16 %v1128
        %v1196 = vunpack.c.h.b16 %v1128
        %v1197 = vunpack.c.l.b16 %v1129
        %v1198 = vunpack.c.h.b16 %v1129
        %v1199 = vunpack.c.l.b16 %v1130
        %v1200 = vunpack.c.h.b16 %v1130
        %v1201 = vunpack.c.l.b16 %v1131
        %v1202 = vunpack.c.h.b16 %v1131
        %v1203 = vunpack.c.l.b16 %v1132
        %v1204 = vunpack.c.h.b16 %v1132
        %v1205 = vunpack.c.l.b16 %v1133
        %v1206 = vunpack.c.h.b16 %v1133
        %v1207 = vunpack.c.l.b16 %v1134
        %v1208 = vunpack.c.h.b16 %v1134
        %v1209 = vunpack.c.l.b16 %v1135
        %v1210 = vunpack.c.h.b16 %v1135
        %v1211 = vunpack.c.l.b16 %v1136
        %v1212 = vunpack.c.h.b16 %v1136
        %v1213 = vunpack.c.l.b16 %v1137
        %v1214 = vunpack.c.h.b16 %v1137
        %v1215 = vunpack.c.l.b16 %v1138
        %v1216 = vunpack.c.h.b16 %v1138
        %v1217 = vunpack.c.l.b16 %v1139
        %v1218 = vunpack.c.h.b16 %v1139
        %v1219 = vunpack.c.l.b16 %v1140
        %v1220 = vunpack.c.h.b16 %v1140
        %v1221 = vunpack.c.l.b16 %v1141
        %v1222 = vunpack.c.h.b16 %v1141
        %v1223 = vunpack.c.l.b16 %v1142
        %v1224 = vunpack.c.h.b16 %v1142
        %v1225 = vunpack.c.l.b16 %v1143
        %v1226 = vunpack.c.h.b16 %v1143
        %v1227 = vunpack.c.l.b16 %v1144
        %v1228 = vunpack.c.h.b16 %v1144
        %v1229 = vunpack.c.l.b16 %v1145
        %v1230 = vunpack.c.h.b16 %v1145
        %v1231 = vunpack.c.l.b16 %v1146
        %v1232 = vunpack.c.h.b16 %v1146
        %v1233 = vunpack.c.l.b16 %v1147
        %v1234 = vunpack.c.h.b16 %v1147
        %v1235 = vunpack.c.l.b16 %v1148
        %v1236 = vunpack.c.h.b16 %v1148
        %v1237 = vunpack.c.l.b16 %v1149
        %v1238 = vunpack.c.h.b16 %v1149
        %v1239 = vunpack.c.l.b16 %v1150
        %v1240 = vunpack.c.h.b16 %v1150
        %v1241 = vunpack.c.l.b16 %v1151
        %v1242 = vunpack.c.h.b16 %v1151
        %v1243 = vunpack.c.l.b16 %v1152
        %v1244 = vunpack.c.h.b16 %v1152
        %v1245 = vunpack.c.l.b16 %v1153
        %v1246 = vunpack.c.h.b16 %v1153
        %v1247 = vunpack.c.l.b16 %v1154
        %v1248 = vunpack.c.h.b16 %v1154
        %v1249 = vunpack.c.l.b16 %v1155
        %v1250 = vunpack.c.h.b16 %v1155
        %v1251 = vunpack.c.l.b16 %v1156
        %v1252 = vunpack.c.h.b16 %v1156
        %v1253 = vpack.c.b16 %v1191, %v1189
        %v1254 = vpack.c.b16 %v1192, %v1190
        %v1255 = vpack.c.b16 %v1195, %v1193
        %v1256 = vpack.c.b16 %v1196, %v1194
        %v1257 = vpack.c.b16 %v1199, %v1197
        %v1258 = vpack.c.b16 %v1200, %v1198
        %v1259 = vpack.c.b16 %v1203, %v1201
        %v1260 = vpack.c.b16 %v1204, %v1202
        %v1261 = vpack.c.b16 %v1207, %v1205
        %v1262 = vpack.c.b16 %v1208, %v1206
        %v1263 = vpack.c.b16 %v1211, %v1209
        %v1264 = vpack.c.b16 %v1212, %v1210
        %v1265 = vpack.c.b16 %v1215, %v1213
        %v1266 = vpack.c.b16 %v1216, %v1214
        %v1267 = vpack.c.b16 %v1219, %v1217
        %v1268 = vpack.c.b16 %v1220, %v1218
        %v1269 = vpack.c.b16 %v1223, %v1221
        %v1270 = vpack.c.b16 %v1224, %v1222
        %v1271 = vpack.c.b16 %v1227, %v1225
        %v1272 = vpack.c.b16 %v1228, %v1226
        %v1273 = vpack.c.b16 %v1231, %v1229
        %v1274 = vpack.c.b16 %v1232, %v1230
        %v1275 = vpack.c.b16 %v1235, %v1233
        %v1276 = vpack.c.b16 %v1236, %v1234
        %v1277 = vpack.c.b16 %v1239, %v1237
        %v1278 = vpack.c.b16 %v1240, %v1238
        %v1279 = vpack.c.b16 %v1243, %v1241
        %v1280 = vpack.c.b16 %v1244, %v1242
        %v1281 = vpack.c.b16 %v1247, %v1245
        %v1282 = vpack.c.b16 %v1248, %v1246
        %v1283 = vpack.c.b16 %v1251, %v1249
        %v1284 = vpack.c.b16 %v1252, %v1250
        %1317 = vmatprep.subr.bf16.mxu0 0
        %1318 = vmatpush1.bf16.msra.mxu0 %v1077
        %1319 = vmatprep.subr.bf16.mxu0 0
        %1320 = vmatpush1.bf16.msra.mxu0 %v1078
        %1321 = vmatprep.subr.bf16.mxu0 0
        %1322 = vmatpush1.bf16.msra.mxu0 %v1079
        %1323 = vmatprep.subr.bf16.mxu0 0
        %1324 = vmatpush1.bf16.msra.mxu0 %v1080
        %1325 = vmatprep.subr.bf16.mxu0 0
        %1326 = vmatpush1.bf16.msra.mxu0 %v1081
        %1327 = vmatprep.subr.bf16.mxu0 0
        %1328 = vmatpush1.bf16.msra.mxu0 %v1082
        %1329 = vmatprep.subr.bf16.mxu0 0
        %1330 = vmatpush1.bf16.msra.mxu0 %v1083
        %1331 = vmatprep.subr.bf16.mxu0 0
        %1332 = vmatpush1.bf16.msra.mxu0 %v1084
        %1333 = vmatprep.subr.bf16.mxu0 0
        %1334 = vmatpush1.bf16.msra.mxu0 %v1085
        %1335 = vmatprep.subr.bf16.mxu0 0
        %1336 = vmatpush1.bf16.msra.mxu0 %v1086
        %1337 = vmatprep.subr.bf16.mxu0 0
        %1338 = vmatpush1.bf16.msra.mxu0 %v1087
        %1339 = vmatprep.subr.bf16.mxu0 0
        %1340 = vmatpush1.bf16.msra.mxu0 %v1088
        %1341 = vmatprep.subr.bf16.mxu0 0
        %1342 = vmatpush1.bf16.msra.mxu0 %v1089
        %1343 = vmatprep.subr.bf16.mxu0 0
        %1344 = vmatpush1.bf16.msra.mxu0 %v1090
        %1345 = vmatprep.subr.bf16.mxu0 0
        %1346 = vmatpush1.bf16.msra.mxu0 %v1091
        %1347 = vmatprep.subr.bf16.mxu0 0
        %1348 = vmatpush1.bf16.msra.mxu0 %v1092
        %1349 = vmatprep.mubr.bf16.mxu0 %v1254
        %1350 = vmatmul.mubr.bf16.gmra.mrb[0].mxu0 %v1253
        %v1351 = vpop.f32.mrb[0].mxu0
        %v1352 = vadd.f32 0.0, %v1351
        %v1353 = vpop.f32.mrb[0].mxu0
        %v1354 = vpop.f32.mrb[0].mxu0
        %v1355 = vadd.f32 0.0, %v1354
        %v1356 = vpop.f32.mrb[0].mxu0
        %1357 = vmatprep.mubr.bf16.mxu0 %v1256
        %1358 = vmatmul.mubr.bf16.gmra.mrb[0].mxu0 %v1255
        %v1359 = vpop.f32.mrb[0].mxu0
        %v1360 = vadd.f32 0.0, %v1359
        %v1361 = vpop.f32.mrb[0].mxu0
        %v1362 = vpop.f32.mrb[0].mxu0
        %v1363 = vadd.f32 0.0, %v1362
        %v1364 = vpop.f32.mrb[0].mxu0
        %1365 = vmatprep.mubr.bf16.mxu0 %v1258
        %1366 = vmatmul.mubr.bf16.gmra.mrb[0].mxu0 %v1257
        %v1367 = vpop.f32.mrb[0].mxu0
        %v1368 = vadd.f32 0.0, %v1367
        %v1369 = vpop.f32.mrb[0].mxu0
        %v1370 = vpop.f32.mrb[0].mxu0
        %v1371 = vadd.f32 0.0, %v1370
        %v1372 = vpop.f32.mrb[0].mxu0
        %1373 = vmatprep.mubr.bf16.mxu0 %v1260
        %1374 = vmatmul.mubr.bf16.gmra.mrb[0].mxu0 %v1259
        %v1375 = vpop.f32.mrb[0].mxu0
        %v1376 = vadd.f32 0.0, %v1375
        %v1377 = vpop.f32.mrb[0].mxu0
        %v1378 = vpop.f32.mrb[0].mxu0
        %v1379 = vadd.f32 0.0, %v1378
        %v1380 = vpop.f32.mrb[0].mxu0
        %1381 = vmatprep.mubr.bf16.mxu0 %v1262
        %1382 = vmatmul.mubr.bf16.gmra.mrb[0].mxu0 %v1261
        %v1383 = vpop.f32.mrb[0].mxu0
        %v1384 = vadd.f32 0.0, %v1383
        %v1385 = vpop.f32.mrb[0].mxu0
        %v1386 = vpop.f32.mrb[0].mxu0
        %v1387 = vadd.f32 0.0, %v1386
        %v1388 = vpop.f32.mrb[0].mxu0
        %1389 = vmatprep.mubr.bf16.mxu0 %v1264
        %1390 = vmatmul.mubr.bf16.gmra.mrb[0].mxu0 %v1263
        %v1391 = vpop.f32.mrb[0].mxu0
        %v1392 = vadd.f32 0.0, %v1391
        %v1393 = vpop.f32.mrb[0].mxu0
        %v1394 = vpop.f32.mrb[0].mxu0
        %v1395 = vadd.f32 0.0, %v1394
        %v1396 = vpop.f32.mrb[0].mxu0
        %1397 = vmatprep.mubr.bf16.mxu0 %v1266
        %1398 = vmatmul.mubr.bf16.gmra.mrb[0].mxu0 %v1265
        %v1399 = vpop.f32.mrb[0].mxu0
        %v1400 = vadd.f32 0.0, %v1399
        %v1401 = vpop.f32.mrb[0].mxu0
        %v1402 = vpop.f32.mrb[0].mxu0
        %v1403 = vadd.f32 0.0, %v1402
        %v1404 = vpop.f32.mrb[0].mxu0
        %1405 = vmatprep.mubr.bf16.mxu0 %v1268
        %1406 = vmatmul.mubr.bf16.gmra.mrb[0].mxu0 %v1267
        %v1407 = vpop.f32.mrb[0].mxu0
        %v1408 = vadd.f32 0.0, %v1407
        %v1409 = vpop.f32.mrb[0].mxu0
        %v1410 = vpop.f32.mrb[0].mxu0
        %v1411 = vadd.f32 0.0, %v1410
        %v1412 = vpop.f32.mrb[0].mxu0
        %1413 = vmatprep.mubr.bf16.mxu0 %v1270
        %1414 = vmatmul.mubr.bf16.gmra.mrb[0].mxu0 %v1269
        %v1415 = vpop.f32.mrb[0].mxu0
        %v1416 = vadd.f32 0.0, %v1415
        %v1417 = vpop.f32.mrb[0].mxu0
        %v1418 = vpop.f32.mrb[0].mxu0
        %v1419 = vadd.f32 0.0, %v1418
        %v1420 = vpop.f32.mrb[0].mxu0
        %1421 = vmatprep.mubr.bf16.mxu0 %v1272
        %1422 = vmatmul.mubr.bf16.gmra.mrb[0].mxu0 %v1271
        %v1423 = vpop.f32.mrb[0].mxu0
        %v1424 = vadd.f32 0.0, %v1423
        %v1425 = vpop.f32.mrb[0].mxu0
        %v1426 = vpop.f32.mrb[0].mxu0
        %v1427 = vadd.f32 0.0, %v1426
        %v1428 = vpop.f32.mrb[0].mxu0
        %1429 = vmatprep.mubr.bf16.mxu0 %v1274
        %1430 = vmatmul.mubr.bf16.gmra.mrb[0].mxu0 %v1273
        %v1431 = vpop.f32.mrb[0].mxu0
        %v1432 = vadd.f32 0.0, %v1431
        %v1433 = vpop.f32.mrb[0].mxu0
        %v1434 = vpop.f32.mrb[0].mxu0
        %v1435 = vadd.f32 0.0, %v1434
        %v1436 = vpop.f32.mrb[0].mxu0
        %1437 = vmatprep.mubr.bf16.mxu0 %v1276
        %1438 = vmatmul.mubr.bf16.gmra.mrb[0].mxu0 %v1275
        %v1439 = vpop.f32.mrb[0].mxu0
        %v1440 = vadd.f32 0.0, %v1439
        %v1441 = vpop.f32.mrb[0].mxu0
        %v1442 = vpop.f32.mrb[0].mxu0
        %v1443 = vadd.f32 0.0, %v1442
        %v1444 = vpop.f32.mrb[0].mxu0
        %1445 = vmatprep.mubr.bf16.mxu0 %v1278
        %1446 = vmatmul.mubr.bf16.gmra.mrb[0].mxu0 %v1277
        %v1447 = vpop.f32.mrb[0].mxu0
        %v1448 = vadd.f32 0.0, %v1447
        %v1449 = vpop.f32.mrb[0].mxu0
        %v1450 = vpop.f32.mrb[0].mxu0
        %v1451 = vadd.f32 0.0, %v1450
        %v1452 = vpop.f32.mrb[0].mxu0
        %1453 = vmatprep.mubr.bf16.mxu0 %v1280
        %1454 = vmatmul.mubr.bf16.gmra.mrb[0].mxu0 %v1279
        %v1455 = vpop.f32.mrb[0].mxu0
        %v1456 = vadd.f32 0.0, %v1455
        %v1457 = vpop.f32.mrb[0].mxu0
        %v1458 = vpop.f32.mrb[0].mxu0
        %v1459 = vadd.f32 0.0, %v1458
        %v1460 = vpop.f32.mrb[0].mxu0
        %1461 = vmatprep.mubr.bf16.mxu0 %v1282
        %1462 = vmatmul.mubr.bf16.gmra.mrb[0].mxu0 %v1281
        %v1463 = vpop.f32.mrb[0].mxu0
        %v1464 = vadd.f32 0.0, %v1463
        %v1465 = vpop.f32.mrb[0].mxu0
        %v1466 = vpop.f32.mrb[0].mxu0
        %v1467 = vadd.f32 0.0, %v1466
        %v1468 = vpop.f32.mrb[0].mxu0
        %1469 = vmatprep.mubr.bf16.mxu0 %v1284
        %1470 = vmatmul.mubr.bf16.gmra.mrb[0].mxu0 %v1283
        %v1471 = vpop.f32.mrb[0].mxu0
        %v1472 = vadd.f32 0.0, %v1471
        %v1473 = vpop.f32.mrb[0].mxu0
        %v1474 = vpop.f32.mrb[0].mxu0
        %v1475 = vadd.f32 0.0, %v1474
        %v1476 = vpop.f32.mrb[0].mxu0
        %1477 = vdwg.mxu0
        %v1478 = vadd.f32 %v1093, %v1352
        %v1479 = vadd.f32 %v1094, %v1355
        %v1480 = vadd.f32 %v1095, %v1360
        %v1481 = vadd.f32 %v1096, %v1363
        %v1482 = vadd.f32 %v1097, %v1368
        %v1483 = vadd.f32 %v1098, %v1371
        %v1484 = vadd.f32 %v1099, %v1376
        %v1485 = vadd.f32 %v1100, %v1379
        %v1486 = vadd.f32 %v1101, %v1384
        %v1487 = vadd.f32 %v1102, %v1387
        %v1488 = vadd.f32 %v1103, %v1392
        %v1489 = vadd.f32 %v1104, %v1395
        %v1490 = vadd.f32 %v1105, %v1400
        %v1491 = vadd.f32 %v1106, %v1403
        %v1492 = vadd.f32 %v1107, %v1408
        %v1493 = vadd.f32 %v1108, %v1411
        %v1494 = vadd.f32 %v1109, %v1416
        %v1495 = vadd.f32 %v1110, %v1419
        %v1496 = vadd.f32 %v1111, %v1424
        %v1497 = vadd.f32 %v1112, %v1427
        %v1498 = vadd.f32 %v1113, %v1432
        %v1499 = vadd.f32 %v1114, %v1435
        %v1500 = vadd.f32 %v1115, %v1440
        %v1501 = vadd.f32 %v1116, %v1443
        %v1502 = vadd.f32 %v1117, %v1448
        %v1503 = vadd.f32 %v1118, %v1451
        %v1504 = vadd.f32 %v1119, %v1456
        %v1505 = vadd.f32 %v1120, %v1459
        %v1506 = vadd.f32 %v1121, %v1464
        %v1507 = vadd.f32 %v1122, %v1467
        %v1508 = vadd.f32 %v1123, %v1472
        %v1509 = vadd.f32 %v1124, %v1475
        %1510 = vst [vmem:[#allocation2] sm:$0xff] %v1478
        %1511 = vst [vmem:[#allocation2 + $0x8] sm:$0xff] %v1479
        %1512 = vst [vmem:[#allocation2 + $0x10] sm:$0xff] %v1480
        %1513 = vst [vmem:[#allocation2 + $0x18] sm:$0xff] %v1481
        %1514 = vst [vmem:[#allocation2 + $0x20] sm:$0xff] %v1482
        %1515 = vst [vmem:[#allocation2 + $0x28] sm:$0xff] %v1483
        %1516 = vst [vmem:[#allocation2 + $0x30] sm:$0xff] %v1484
        %1517 = vst [vmem:[#allocation2 + $0x38] sm:$0xff] %v1485
        %1518 = vst [vmem:[#allocation2 + $0x40] sm:$0xff] %v1486
        %1519 = vst [vmem:[#allocation2 + $0x48] sm:$0xff] %v1487
        %1520 = vst [vmem:[#allocation2 + $0x50] sm:$0xff] %v1488
        %1521 = vst [vmem:[#allocation2 + $0x58] sm:$0xff] %v1489
        %1522 = vst [vmem:[#allocation2 + $0x60] sm:$0xff] %v1490
        %1523 = vst [vmem:[#allocation2 + $0x68] sm:$0xff] %v1491
        %1524 = vst [vmem:[#allocation2 + $0x70] sm:$0xff] %v1492
        %1525 = vst [vmem:[#allocation2 + $0x78] sm:$0xff] %v1493
        %1526 = vst [vmem:[#allocation2 + $0x80] sm:$0xff] %v1494
        %1527 = vst [vmem:[#allocation2 + $0x88] sm:$0xff] %v1495
        %1528 = vst [vmem:[#allocation2 + $0x90] sm:$0xff] %v1496
        %1529 = vst [vmem:[#allocation2 + $0x98] sm:$0xff] %v1497
        %1530 = vst [vmem:[#allocation2 + $0xa0] sm:$0xff] %v1498
        %1531 = vst [vmem:[#allocation2 + $0xa8] sm:$0xff] %v1499
        %1532 = vst [vmem:[#allocation2 + $0xb0] sm:$0xff] %v1500
        %1533 = vst [vmem:[#allocation2 + $0xb8] sm:$0xff] %v1501
        %1534 = vst [vmem:[#allocation2 + $0xc0] sm:$0xff] %v1502
        %1535 = vst [vmem:[#allocation2 + $0xc8] sm:$0xff] %v1503
        %1536 = vst [vmem:[#allocation2 + $0xd0] sm:$0xff] %v1504
        %1537 = vst [vmem:[#allocation2 + $0xd8] sm:$0xff] %v1505
        %1538 = vst [vmem:[#allocation2 + $0xe0] sm:$0xff] %v1506
        %1539 = vst [vmem:[#allocation2 + $0xe8] sm:$0xff] %v1507
        %1540 = vst [vmem:[#allocation2 + $0xf0] sm:$0xff] %v1508
        %1541 = vst [vmem:[#allocation2 + $0xf8] sm:$0xff] %v1509
        %p1542 = scmp.eq.s32.totalorder %s21, 1
        // Predicated region
        $region159: #{additive_coupling_forward.2} parent=141 // pred_check
          %p1543 = pneg %p1542
        $region160: #{additive_coupling_forward.2} parent=141 // pred_check_branch
          %1545 = sbr.rel (%p1543) target = $region162
        $region161: #{additive_coupling_forward.2} parent=141 // pred_region
          %v1546 = vld [vmem:[%s724] sm:$0xff]
          %v1547 = vld [vmem:[%s724 + $0x8] sm:$0xff]
          %v1548 = vld [vmem:[%s724 + $0x10] sm:$0xff]
          %v1549 = vld [vmem:[%s724 + $0x18] sm:$0xff]
          %v1550 = vld [vmem:[%s724 + $0x20] sm:$0xff]
          %v1551 = vld [vmem:[%s724 + $0x28] sm:$0xff]
          %v1552 = vld [vmem:[%s724 + $0x30] sm:$0xff]
          %v1553 = vld [vmem:[%s724 + $0x38] sm:$0xff]
          %v1554 = vld [vmem:[%s724 + $0x40] sm:$0xff]
          %v1555 = vld [vmem:[%s724 + $0x48] sm:$0xff]
          %v1556 = vld [vmem:[%s724 + $0x50] sm:$0xff]
          %v1557 = vld [vmem:[%s724 + $0x58] sm:$0xff]
          %v1558 = vld [vmem:[%s724 + $0x60] sm:$0xff]
          %v1559 = vld [vmem:[%s724 + $0x68] sm:$0xff]
          %v1560 = vld [vmem:[%s724 + $0x70] sm:$0xff]
          %v1561 = vld [vmem:[%s724 + $0x78] sm:$0xff]
          %v1562 = vld [vmem:[%s724 + $0x80] sm:$0xff]
          %v1563 = vld [vmem:[%s724 + $0x88] sm:$0xff]
          %v1564 = vld [vmem:[%s724 + $0x90] sm:$0xff]
          %v1565 = vld [vmem:[%s724 + $0x98] sm:$0xff]
          %v1566 = vld [vmem:[%s724 + $0xa0] sm:$0xff]
          %v1567 = vld [vmem:[%s724 + $0xa8] sm:$0xff]
          %v1568 = vld [vmem:[%s724 + $0xb0] sm:$0xff]
          %v1569 = vld [vmem:[%s724 + $0xb8] sm:$0xff]
          %v1570 = vld [vmem:[%s724 + $0xc0] sm:$0xff]
          %v1571 = vld [vmem:[%s724 + $0xc8] sm:$0xff]
          %v1572 = vld [vmem:[%s724 + $0xd0] sm:$0xff]
          %v1573 = vld [vmem:[%s724 + $0xd8] sm:$0xff]
          %v1574 = vld [vmem:[%s724 + $0xe0] sm:$0xff]
          %v1575 = vld [vmem:[%s724 + $0xe8] sm:$0xff]
          %v1576 = vld [vmem:[%s724 + $0xf0] sm:$0xff]
          %v1577 = vld [vmem:[%s724 + $0xf8] sm:$0xff]
          %v1578 = vld [vmem:[#allocation2] sm:$0xff]
          %v1579 = vld [vmem:[#allocation2 + $0x8] sm:$0xff]
          %v1580 = vld [vmem:[#allocation2 + $0x10] sm:$0xff]
          %v1581 = vld [vmem:[#allocation2 + $0x18] sm:$0xff]
          %v1582 = vld [vmem:[#allocation2 + $0x20] sm:$0xff]
          %v1583 = vld [vmem:[#allocation2 + $0x28] sm:$0xff]
          %v1584 = vld [vmem:[#allocation2 + $0x30] sm:$0xff]
          %v1585 = vld [vmem:[#allocation2 + $0x38] sm:$0xff]
          %v1586 = vld [vmem:[#allocation2 + $0x40] sm:$0xff]
          %v1587 = vld [vmem:[#allocation2 + $0x48] sm:$0xff]
          %v1588 = vld [vmem:[#allocation2 + $0x50] sm:$0xff]
          %v1589 = vld [vmem:[#allocation2 + $0x58] sm:$0xff]
          %v1590 = vld [vmem:[#allocation2 + $0x60] sm:$0xff]
          %v1591 = vld [vmem:[#allocation2 + $0x68] sm:$0xff]
          %v1592 = vld [vmem:[#allocation2 + $0x70] sm:$0xff]
          %v1593 = vld [vmem:[#allocation2 + $0x78] sm:$0xff]
          %v1594 = vld [vmem:[#allocation2 + $0x80] sm:$0xff]
          %v1595 = vld [vmem:[#allocation2 + $0x88] sm:$0xff]
          %v1596 = vld [vmem:[#allocation2 + $0x90] sm:$0xff]
          %v1597 = vld [vmem:[#allocation2 + $0x98] sm:$0xff]
          %v1598 = vld [vmem:[#allocation2 + $0xa0] sm:$0xff]
          %v1599 = vld [vmem:[#allocation2 + $0xa8] sm:$0xff]
          %v1600 = vld [vmem:[#allocation2 + $0xb0] sm:$0xff]
          %v1601 = vld [vmem:[#allocation2 + $0xb8] sm:$0xff]
          %v1602 = vld [vmem:[#allocation2 + $0xc0] sm:$0xff]
          %v1603 = vld [vmem:[#allocation2 + $0xc8] sm:$0xff]
          %v1604 = vld [vmem:[#allocation2 + $0xd0] sm:$0xff]
          %v1605 = vld [vmem:[#allocation2 + $0xd8] sm:$0xff]
          %v1606 = vld [vmem:[#allocation2 + $0xe0] sm:$0xff]
          %v1607 = vld [vmem:[#allocation2 + $0xe8] sm:$0xff]
          %v1608 = vld [vmem:[#allocation2 + $0xf0] sm:$0xff]
          %v1609 = vld [vmem:[#allocation2 + $0xf8] sm:$0xff]
          %v1610 = vadd.f32 %v1546, %v1578
          %v1611 = vadd.f32 %v1547, %v1579
          %v1612 = vadd.f32 %v1548, %v1580
          %v1613 = vadd.f32 %v1549, %v1581
          %v1614 = vadd.f32 %v1550, %v1582
          %v1615 = vadd.f32 %v1551, %v1583
          %v1616 = vadd.f32 %v1552, %v1584
          %v1617 = vadd.f32 %v1553, %v1585
          %v1618 = vadd.f32 %v1554, %v1586
          %v1619 = vadd.f32 %v1555, %v1587
          %v1620 = vadd.f32 %v1556, %v1588
          %v1621 = vadd.f32 %v1557, %v1589
          %v1622 = vadd.f32 %v1558, %v1590
          %v1623 = vadd.f32 %v1559, %v1591
          %v1624 = vadd.f32 %v1560, %v1592
          %v1625 = vadd.f32 %v1561, %v1593
          %v1626 = vadd.f32 %v1562, %v1594
          %v1627 = vadd.f32 %v1563, %v1595
          %v1628 = vadd.f32 %v1564, %v1596
          %v1629 = vadd.f32 %v1565, %v1597
          %v1630 = vadd.f32 %v1566, %v1598
          %v1631 = vadd.f32 %v1567, %v1599
          %v1632 = vadd.f32 %v1568, %v1600
          %v1633 = vadd.f32 %v1569, %v1601
          %v1634 = vadd.f32 %v1570, %v1602
          %v1635 = vadd.f32 %v1571, %v1603
          %v1636 = vadd.f32 %v1572, %v1604
          %v1637 = vadd.f32 %v1573, %v1605
          %v1638 = vadd.f32 %v1574, %v1606
          %v1639 = vadd.f32 %v1575, %v1607
          %v1640 = vadd.f32 %v1576, %v1608
          %v1641 = vadd.f32 %v1577, %v1609
          %v1642 = vld [vmem:[%s4] sm:$0x1]
          %v1644 = vlaneseq
          %v1645 = vshrl.u32 %v1644, 7
          %v1646 = vsub.s32 0, %v1645
          %v1647 = vrot.slane %v1642, %v1646
          %v1649 = vadd.f32 %v1610, %v1647
          %v1650 = vadd.f32 %v1611, %v1647
          %v1651 = vadd.f32 %v1612, %v1647
          %v1652 = vadd.f32 %v1613, %v1647
          %v1653 = vadd.f32 %v1614, %v1647
          %v1654 = vadd.f32 %v1615, %v1647
          %v1655 = vadd.f32 %v1616, %v1647
          %v1656 = vadd.f32 %v1617, %v1647
          %v1657 = vadd.f32 %v1618, %v1647
          %v1658 = vadd.f32 %v1619, %v1647
          %v1659 = vadd.f32 %v1620, %v1647
          %v1660 = vadd.f32 %v1621, %v1647
          %v1661 = vadd.f32 %v1622, %v1647
          %v1662 = vadd.f32 %v1623, %v1647
          %v1663 = vadd.f32 %v1624, %v1647
          %v1664 = vadd.f32 %v1625, %v1647
          %v1665 = vadd.f32 %v1626, %v1647
          %v1666 = vadd.f32 %v1627, %v1647
          %v1667 = vadd.f32 %v1628, %v1647
          %v1668 = vadd.f32 %v1629, %v1647
          %v1669 = vadd.f32 %v1630, %v1647
          %v1670 = vadd.f32 %v1631, %v1647
          %v1671 = vadd.f32 %v1632, %v1647
          %v1672 = vadd.f32 %v1633, %v1647
          %v1673 = vadd.f32 %v1634, %v1647
          %v1674 = vadd.f32 %v1635, %v1647
          %v1675 = vadd.f32 %v1636, %v1647
          %v1676 = vadd.f32 %v1637, %v1647
          %v1677 = vadd.f32 %v1638, %v1647
          %v1678 = vadd.f32 %v1639, %v1647
          %v1679 = vadd.f32 %v1640, %v1647
          %v1680 = vadd.f32 %v1641, %v1647
          %1681 = vst [vmem:[%s765] sm:$0xff] %v1649
          %1682 = vst [vmem:[%s765 + $0x8] sm:$0xff] %v1650
          %1683 = vst [vmem:[%s765 + $0x10] sm:$0xff] %v1651
          %1684 = vst [vmem:[%s765 + $0x18] sm:$0xff] %v1652
          %1685 = vst [vmem:[%s765 + $0x20] sm:$0xff] %v1653
          %1686 = vst [vmem:[%s765 + $0x28] sm:$0xff] %v1654
          %1687 = vst [vmem:[%s765 + $0x30] sm:$0xff] %v1655
          %1688 = vst [vmem:[%s765 + $0x38] sm:$0xff] %v1656
          %1689 = vst [vmem:[%s765 + $0x40] sm:$0xff] %v1657
          %1690 = vst [vmem:[%s765 + $0x48] sm:$0xff] %v1658
          %1691 = vst [vmem:[%s765 + $0x50] sm:$0xff] %v1659
          %1692 = vst [vmem:[%s765 + $0x58] sm:$0xff] %v1660
          %1693 = vst [vmem:[%s765 + $0x60] sm:$0xff] %v1661
          %1694 = vst [vmem:[%s765 + $0x68] sm:$0xff] %v1662
          %1695 = vst [vmem:[%s765 + $0x70] sm:$0xff] %v1663
          %1696 = vst [vmem:[%s765 + $0x78] sm:$0xff] %v1664
          %1697 = vst [vmem:[%s765 + $0x80] sm:$0xff] %v1665
          %1698 = vst [vmem:[%s765 + $0x88] sm:$0xff] %v1666
          %1699 = vst [vmem:[%s765 + $0x90] sm:$0xff] %v1667
          %1700 = vst [vmem:[%s765 + $0x98] sm:$0xff] %v1668
          %1701 = vst [vmem:[%s765 + $0xa0] sm:$0xff] %v1669
          %1702 = vst [vmem:[%s765 + $0xa8] sm:$0xff] %v1670
          %1703 = vst [vmem:[%s765 + $0xb0] sm:$0xff] %v1671
          %1704 = vst [vmem:[%s765 + $0xb8] sm:$0xff] %v1672
          %1705 = vst [vmem:[%s765 + $0xc0] sm:$0xff] %v1673
          %1706 = vst [vmem:[%s765 + $0xc8] sm:$0xff] %v1674
          %1707 = vst [vmem:[%s765 + $0xd0] sm:$0xff] %v1675
          %1708 = vst [vmem:[%s765 + $0xd8] sm:$0xff] %v1676
          %1709 = vst [vmem:[%s765 + $0xe0] sm:$0xff] %v1677
          %1710 = vst [vmem:[%s765 + $0xe8] sm:$0xff] %v1678
          %1711 = vst [vmem:[%s765 + $0xf0] sm:$0xff] %v1679
          %1712 = vst [vmem:[%s765 + $0xf8] sm:$0xff] %v1680
        $region162: #{additive_coupling_forward.2} parent=141 // pred_fallthru
          _
        %s1713 = smul.u32 32, %s20
        %p1714 = scmp.lt.s32.totalorder %s1713, 63
        %s1715 = scalar_select %p1714, %s1713, 63
        %s1716 = smul.addr %s1715, 8
        %s1717 = scalar_lea.vmem %s5, %s1716
        // Predicated region
        $region163: #{additive_coupling_forward.2} parent=141 // pred_check
          %p1718 = pneg %p168
        $region164: #{additive_coupling_forward.2} parent=141 // pred_check_branch
          %1720 = sbr.rel (%p1718) target = $region166
        $region165: #{additive_coupling_forward.2} parent=141 // pred_region
          %s1721 = smul.u32 32, %s20
        $region166: #{additive_coupling_forward.2} parent=141 // pred_fallthru
          _
      $region142: #{additive_coupling_forward.2} parent=5 // pred_fallthru
        _
      %p1722 = scmp.le.s32.totalorder 2, %s11
      // Predicated region
      $region167: #{additive_coupling_forward.2} parent=5 // pred_check
        %p1723 = pneg %p1722
      $region168: #{additive_coupling_forward.2} parent=5 // pred_check_branch
        %1725 = sbr.rel (%p1723) target = $region170
      $region169: #{additive_coupling_forward.2} parent=5 // pred_region
        %s1726 = ssub.s32 %s11, 2
        // Predicated region
        $region171: #{additive_coupling_forward.2} parent=169 // pred_check
          %p1727 = pneg %p174
        $region172: #{additive_coupling_forward.2} parent=169 // pred_check_branch
          %1729 = sbr.rel (%p1727) target = $region174
        $region173: #{additive_coupling_forward.2} parent=169 // pred_region
          %s1730 = smul.u32 32, %s22
          %p1731 = scmp.lt.s32.totalorder %s1730, 63
          %s1732 = scalar_select %p1731, %s1730, 63
          %s1733 = smul.addr %s1732, 8
          %s1734 = scalar_lea.vmem %s5, %s1733
        $region174: #{additive_coupling_forward.2} parent=169 // pred_fallthru
          _
      $region170: #{additive_coupling_forward.2} parent=5 // pred_fallthru
        _
    $region6: #{additive_coupling_forward.2} parent=1 // loop_footer
      %s15 = sadd.s32 1, %s11
    $region7: #{additive_coupling_forward.2} parent=1 // loop_footer_branch
      %10 = sbr.rel target = $region3
    $region8: #{additive_coupling_forward.2} parent=1 // loop_exit
      _

// kernel: additive_coupling_forward.3
$region0: #{additive_coupling_forward.3}
  #allocation0 [shape = 'u32[]', space=smem, size = 0x4, offset = 0x4, fixed_abs, tag = 'smem constant byte address 0x4 - core index']
  #allocation1 [shape = 'u32[144,128]{1,0:T(1,128)}', space=vmem, size = 0x12000, scoped, tag = 'internal scratch']
  #allocation2 [shape = 'f32[256,128]{1,0:T(8,128)}', space=vmem, size = 0x20000, scoped, tag = 'scratch operand']
  %s0 = inlined_call_operand.vmem [shape: bf16[512,512], index: 0, kind: input, shape index: {}]
  %s1 = inlined_call_operand.vmem [shape: f32[512,128], index: 1, kind: input, shape index: {}, may-alias: {1,2}]
  %s2 = inlined_call_operand.vmem [shape: f32[512,128], index: 2, kind: input, shape index: {}, may-alias: {1,2}]
  %s3 = inlined_call_operand.vmem [shape: f32[512,256], index: 3, kind: input, shape index: {}]
  %s4 = inlined_call_operand.vmem [shape: bf16[128,128], index: 4, kind: input, shape index: {}]
  %s5 = inlined_call_operand.vmem [shape: f32[1,128], index: 5, kind: input, shape index: {}]
  %s6 = inlined_call_operand.hbm [shape: f32[512,256], index: 6, kind: output, shape index: {}]
  %s7 = sld [smem:[#allocation0]]
  $region141: #{additive_coupling_forward.3} parent=0
    _
  %s9 = ssub.s32 1, %s7
  %s10 = scalar_select 0, %s9, %s7
  $region1: #{additive_coupling_forward.3} parent=0
    #allocation3 [shape = 'u8[262144]{0}', space=vmem, size = 0x40000, scoped, tag = 'input window, operand 0']
    #allocation4 [shape = 'u8[262144]{0}', space=vmem, size = 0x40000, scoped, tag = 'input window, operand 3']
    #allocation5 [shape = 'u8[524288]{0}', space=vmem, size = 0x80000, scoped, tag = 'output window, operand 0']
    #allocation6 [shape = 's32[2]{0}', space=sflag, size = 0x8, scoped, tag = 'scoped memory for additive_coupling_forward.3']
    %11 = vsyncpa [#allocation6], 0
    %s12 = scalar_lea.sflag [#allocation6], 1
    %13 = vsyncpa %s12, 0
    loop: start=0, step=1, limit=6
    $region2: #{additive_coupling_forward.3} parent=1 // loop_pre_header
      _
    $region3: #{additive_coupling_forward.3} parent=1 // loop_header
      %s15 = sphi 0, %s19
      %p16 = scmp.ge.s32.totalorder %s15, 6
      %s22 = sphi 0, %s34
      %s23 = sphi 0, %s30
      %s24 = sphi 0, %s22
      %s25 = sphi 0, %s23
      %s26 = sphi 0, %s24
      %s27 = sphi 0, %s25
      %s39 = sphi 0, %s41
      %s42 = sphi 0, %s39
      %s43 = sphi 0, %s42
      %s59 = sphi 0, %s43
      %s65 = sphi 0, %s67
      %s68 = sphi 0, %s65
      %s69 = sphi 0, %s68
      %s85 = sphi 0, %s69
      %s91 = sphi 0, %s93
      %s94 = sphi 0, %s91
      %s95 = sphi 0, %s94
      %s111 = sphi 0, %s95
      %s117 = sphi 0, %s119
      %s120 = sphi 0, %s117
      %s121 = sphi 0, %s120
      %s137 = sphi 0, %s121
      %s141 = sphi 0, %s141
      %s143 = sphi 0, %s141
      %s144 = sphi 0, %s143
      %s158 = sphi 0, %s144
      %s162 = sphi 0, %s162
      %s164 = sphi 0, %s162
      %s165 = sphi 0, %s164
      %s179 = sphi 0, %s165
      %s185 = sphi 0, %s187
      %s188 = sphi 0, %s185
      %s189 = sphi 0, %s188
      %s205 = sphi 0, %s189
    $region4: #{additive_coupling_forward.3} parent=1 // loop_header_branch
      %18 = sbr.rel (%p16) target = $region8
    $region5: #{additive_coupling_forward.3} parent=1 // loop_body
      %s20 = ssub.s32 %s15, 1
      %s21 = ssub.s32 %s15, 2
      %s28 = sadd.s32 1, %s23
      %p29 = scmp.ge.s32.totalorder %s28, 2
      %s30 = scalar_select %p29, 0, %s28
      %s31 = sadd.s32 1, %s22
      %s32 = scalar_select %p29, %s31, %s22
      %p33 = scmp.ge.s32.totalorder %s32, 2
      %s34 = scalar_select %p33, 0, %s32
      %s35 = ssub.s32 %s22, %s34
      %s36 = ssub.s32 %s23, %s30
      %s37 = sor.u32 %s35, %s36
      %p38 = scmp.eq.s32.totalorder %s37, 0
      %s40 = sadd.s32 %s39, 1
      %s41 = scalar_select %p38, %s39, %s40
      %p44 = pneg %p38
      %p45 = scmp.eq.s32.totalorder %s15, 3
      %p46 = por %p44, %p45
      %p47 = scmp.ne.s32.totalorder %s39, %s42
      %p48 = scmp.eq.s32.totalorder %s15, 0
      %p49 = por %p47, %p48
      %p50 = scmp.ne.s32.totalorder %s39, %s42
      %p51 = scmp.eq.s32.totalorder %s20, 3
      %p52 = por %p50, %p51
      %p53 = scmp.ne.s32.totalorder %s42, %s43
      %p54 = scmp.eq.s32.totalorder %s20, 0
      %p55 = por %p53, %p54
      %p56 = scmp.ne.s32.totalorder %s42, %s43
      %p57 = scmp.eq.s32.totalorder %s21, 3
      %p58 = por %p56, %p57
      %p60 = scmp.ne.s32.totalorder %s43, %s59
      %p61 = scmp.eq.s32.totalorder %s21, 0
      %p62 = por %p60, %p61
      %s63 = ssub.s32 %s23, %s30
      %p64 = scmp.eq.s32.totalorder %s63, 0
      %s66 = sadd.s32 %s65, 1
      %s67 = scalar_select %p64, %s65, %s66
      %p70 = pneg %p64
      %p71 = scmp.eq.s32.totalorder %s15, 3
      %p72 = por %p70, %p71
      %p73 = scmp.ne.s32.totalorder %s65, %s68
      %p74 = scmp.eq.s32.totalorder %s15, 0
      %p75 = por %p73, %p74
      %p76 = scmp.ne.s32.totalorder %s65, %s68
      %p77 = scmp.eq.s32.totalorder %s20, 3
      %p78 = por %p76, %p77
      %p79 = scmp.ne.s32.totalorder %s68, %s69
      %p80 = scmp.eq.s32.totalorder %s20, 0
      %p81 = por %p79, %p80
      %p82 = scmp.ne.s32.totalorder %s68, %s69
      %p83 = scmp.eq.s32.totalorder %s21, 3
      %p84 = por %p82, %p83
      %p86 = scmp.ne.s32.totalorder %s69, %s85
      %p87 = scmp.eq.s32.totalorder %s21, 0
      %p88 = por %p86, %p87
      %s89 = ssub.s32 %s22, %s34
      %p90 = scmp.eq.s32.totalorder %s89, 0
      %s92 = sadd.s32 %s91, 1
      %s93 = scalar_select %p90, %s91, %s92
      %p96 = pneg %p90
      %p97 = scmp.eq.s32.totalorder %s15, 3
      %p98 = por %p96, %p97
      %p99 = scmp.ne.s32.totalorder %s91, %s94
      %p100 = scmp.eq.s32.totalorder %s15, 0
      %p101 = por %p99, %p100
      %p102 = scmp.ne.s32.totalorder %s91, %s94
      %p103 = scmp.eq.s32.totalorder %s20, 3
      %p104 = por %p102, %p103
      %p105 = scmp.ne.s32.totalorder %s94, %s95
      %p106 = scmp.eq.s32.totalorder %s20, 0
      %p107 = por %p105, %p106
      %p108 = scmp.ne.s32.totalorder %s94, %s95
      %p109 = scmp.eq.s32.totalorder %s21, 3
      %p110 = por %p108, %p109
      %p112 = scmp.ne.s32.totalorder %s95, %s111
      %p113 = scmp.eq.s32.totalorder %s21, 0
      %p114 = por %p112, %p113
      %s115 = ssub.s32 %s22, %s34
      %p116 = scmp.eq.s32.totalorder %s115, 0
      %s118 = sadd.s32 %s117, 1
      %s119 = scalar_select %p116, %s117, %s118
      %p122 = pneg %p116
      %p123 = scmp.eq.s32.totalorder %s15, 3
      %p124 = por %p122, %p123
      %p125 = scmp.ne.s32.totalorder %s117, %s120
      %p126 = scmp.eq.s32.totalorder %s15, 0
      %p127 = por %p125, %p126
      %p128 = scmp.ne.s32.totalorder %s117, %s120
      %p129 = scmp.eq.s32.totalorder %s20, 3
      %p130 = por %p128, %p129
      %p131 = scmp.ne.s32.totalorder %s120, %s121
      %p132 = scmp.eq.s32.totalorder %s20, 0
      %p133 = por %p131, %p132
      %p134 = scmp.ne.s32.totalorder %s120, %s121
      %p135 = scmp.eq.s32.totalorder %s21, 3
      %p136 = por %p134, %p135
      %p138 = scmp.ne.s32.totalorder %s121, %s137
      %p139 = scmp.eq.s32.totalorder %s21, 0
      %p140 = por %p138, %p139
      %s142 = sadd.s32 %s141, 1
      %p145 = scmp.eq.s32.totalorder %s15, 3
      %p146 = scmp.ne.s32.totalorder %s141, %s143
      %p147 = scmp.eq.s32.totalorder %s15, 0
      %p148 = por %p146, %p147
      %p149 = scmp.ne.s32.totalorder %s141, %s143
      %p150 = scmp.eq.s32.totalorder %s20, 3
      %p151 = por %p149, %p150
      %p152 = scmp.ne.s32.totalorder %s143, %s144
      %p153 = scmp.eq.s32.totalorder %s20, 0
      %p154 = por %p152, %p153
      %p155 = scmp.ne.s32.totalorder %s143, %s144
      %p156 = scmp.eq.s32.totalorder %s21, 3
      %p157 = por %p155, %p156
      %p159 = scmp.ne.s32.totalorder %s144, %s158
      %p160 = scmp.eq.s32.totalorder %s21, 0
      %p161 = por %p159, %p160
      %s163 = sadd.s32 %s162, 1
      %p166 = scmp.eq.s32.totalorder %s15, 3
      %p167 = scmp.ne.s32.totalorder %s162, %s164
      %p168 = scmp.eq.s32.totalorder %s15, 0
      %p169 = por %p167, %p168
      %p170 = scmp.ne.s32.totalorder %s162, %s164
      %p171 = scmp.eq.s32.totalorder %s20, 3
      %p172 = por %p170, %p171
      %p173 = scmp.ne.s32.totalorder %s164, %s165
      %p174 = scmp.eq.s32.totalorder %s20, 0
      %p175 = por %p173, %p174
      %p176 = scmp.ne.s32.totalorder %s164, %s165
      %p177 = scmp.eq.s32.totalorder %s21, 3
      %p178 = por %p176, %p177
      %p180 = scmp.ne.s32.totalorder %s165, %s179
      %p181 = scmp.eq.s32.totalorder %s21, 0
      %p182 = por %p180, %p181
      %s183 = ssub.s32 %s22, %s34
      %p184 = scmp.eq.s32.totalorder %s183, 0
      %s186 = sadd.s32 %s185, 1
      %s187 = scalar_select %p184, %s185, %s186
      %p190 = pneg %p184
      %p191 = scmp.eq.s32.totalorder %s15, 3
      %p192 = por %p190, %p191
      %p193 = scmp.ne.s32.totalorder %s185, %s188
      %p194 = scmp.eq.s32.totalorder %s15, 0
      %p195 = por %p193, %p194
      %p196 = scmp.ne.s32.totalorder %s185, %s188
      %p197 = scmp.eq.s32.totalorder %s20, 3
      %p198 = por %p196, %p197
      %p199 = scmp.ne.s32.totalorder %s188, %s189
      %p200 = scmp.eq.s32.totalorder %s20, 0
      %p201 = por %p199, %p200
      %p202 = scmp.ne.s32.totalorder %s188, %s189
      %p203 = scmp.eq.s32.totalorder %s21, 3
      %p204 = por %p202, %p203
      %p206 = scmp.ne.s32.totalorder %s189, %s205
      %p207 = scmp.eq.s32.totalorder %s21, 0
      %p208 = por %p206, %p207
      %p209 = scmp.le.s32.totalorder 1, %s15
      %p210 = scmp.lt.s32.totalorder %s15, 5
      %p211 = pnand %p209, %p210
      %p212 = pneg %p211
      // Predicated region
      $region9: #{additive_coupling_forward.3} parent=5 // pred_check
        _
      $region10: #{additive_coupling_forward.3} parent=5 // pred_check_branch
        %214 = sbr.rel (%p211) target = $region12
      $region11: #{additive_coupling_forward.3} parent=5 // pred_region
        %s215 = ssub.s32 %s15, 1
        // Predicated region
        $region13: #{additive_coupling_forward.3} parent=11 // pred_check
          %p216 = pneg %p154
        $region14: #{additive_coupling_forward.3} parent=11 // pred_check_branch
          %218 = sbr.rel (%p216) target = $region16
        $region15: #{additive_coupling_forward.3} parent=11 // pred_region
          _
        $region16: #{additive_coupling_forward.3} parent=11 // pred_fallthru
          _
        // Predicated region
        $region17: #{additive_coupling_forward.3} parent=11 // pred_check
          %p219 = pneg %p175
        $region18: #{additive_coupling_forward.3} parent=11 // pred_check_branch
          %221 = sbr.rel (%p219) target = $region20
        $region19: #{additive_coupling_forward.3} parent=11 // pred_region
          _
        $region20: #{additive_coupling_forward.3} parent=11 // pred_fallthru
          _
      $region12: #{additive_coupling_forward.3} parent=5 // pred_fallthru
        _
      %p222 = scmp.lt.s32.totalorder %s15, 4
      // Predicated region
      $region21: #{additive_coupling_forward.3} parent=5 // pred_check
        %p223 = pneg %p222
      $region22: #{additive_coupling_forward.3} parent=5 // pred_check_branch
        %225 = sbr.rel (%p223) target = $region24
      $region23: #{additive_coupling_forward.3} parent=5 // pred_region
        // Predicated region
        $region25: #{additive_coupling_forward.3} parent=23 // pred_check
          %p226 = pneg %p49
        $region26: #{additive_coupling_forward.3} parent=23 // pred_check_branch
          %228 = sbr.rel (%p226) target = $region28
        $region27: #{additive_coupling_forward.3} parent=23 // pred_region
          %s229 = sand.u32 %s39, 1
          %s230 = sand.u32 %s39, 1
          %s231 = smul.addr %s230, 256
          %s232 = scalar_lea.vmem [#allocation3], %s231
          %s233 = smul.u32 32, %s22
          %s234 = smul.u32 2, %s23
          %s235 = smul.addr %s233, 4
          %s236 = sadd.s32 %s234, %s235
          %s237 = smul.addr %s236, 4
          %s238 = scalar_lea.vmem %s0, %s237
          // Predicated region
          $region29: #{additive_coupling_forward.3} parent=27 // pred_check
            _
          $region30: #{additive_coupling_forward.3} parent=27 // pred_check_branch
            %240 = sbr.rel (0) target = $region32
          $region31: #{additive_coupling_forward.3} parent=27 // pred_region
            // Predicated region
            $region33: #{additive_coupling_forward.3} parent=31 // pred_check
              _
            $region34: #{additive_coupling_forward.3} parent=31 // pred_check_branch
              %242 = sbr.rel (0) target = $region36
            $region35: #{additive_coupling_forward.3} parent=31 // pred_region
              // Predicated region
              $region48: #{additive_coupling_forward.3} parent=35 // pred_check
                _
              $region49: #{additive_coupling_forward.3} parent=35 // pred_check_branch
                %319 = sbr.rel (0) target = $region51
              $region50: #{additive_coupling_forward.3} parent=35 // pred_region
                loop: start=0, step=1, limit=1
                $region52: #{additive_coupling_forward.3} parent=50 // loop_pre_header
                  _
                $region53: #{additive_coupling_forward.3} parent=50 // loop_header
                  %s321 = sphi 0, %s325
                  %p322 = scmp.ge.s32.totalorder %s321, 1
                  %s326 = sphi %s238, %s238
                  %s327 = sphi %s232, %s232
                $region54: #{additive_coupling_forward.3} parent=50 // loop_header_branch
                  %324 = sbr.rel (%p322) target = $region58
                $region55: #{additive_coupling_forward.3} parent=50 // loop_body
                  %v328 = vld [vmem:[%s326] sm:$0xff]
                  %329 = vst [vmem:[%s327] sm:$0xff] %v328
                  %v330 = vld [vmem:[%s326 + $0x10] sm:$0xff]
                  %331 = vst [vmem:[%s327 + $0x8] sm:$0xff] %v330
                  %v332 = vld [vmem:[%s326 + $0x20] sm:$0xff]
                  %333 = vst [vmem:[%s327 + $0x10] sm:$0xff] %v332
                  %v334 = vld [vmem:[%s326 + $0x30] sm:$0xff]
                  %335 = vst [vmem:[%s327 + $0x18] sm:$0xff] %v334
                  %v336 = vld [vmem:[%s326 + $0x40] sm:$0xff]
                  %337 = vst [vmem:[%s327 + $0x20] sm:$0xff] %v336
                  %v338 = vld [vmem:[%s326 + $0x50] sm:$0xff]
                  %339 = vst [vmem:[%s327 + $0x28] sm:$0xff] %v338
                  %v340 = vld [vmem:[%s326 + $0x60] sm:$0xff]
                  %341 = vst [vmem:[%s327 + $0x30] sm:$0xff] %v340
                  %v342 = vld [vmem:[%s326 + $0x70] sm:$0xff]
                  %343 = vst [vmem:[%s327 + $0x38] sm:$0xff] %v342
                  %v344 = vld [vmem:[%s326 + $0x80] sm:$0xff]
                  %345 = vst [vmem:[%s327 + $0x40] sm:$0xff] %v344
                  %v346 = vld [vmem:[%s326 + $0x90] sm:$0xff]
                  %347 = vst [vmem:[%s327 + $0x48] sm:$0xff] %v346
                  %v348 = vld [vmem:[%s326 + $0xa0] sm:$0xff]
                  %349 = vst [vmem:[%s327 + $0x50] sm:$0xff] %v348
                  %v350 = vld [vmem:[%s326 + $0xb0] sm:$0xff]
                  %351 = vst [vmem:[%s327 + $0x58] sm:$0xff] %v350
                  %v352 = vld [vmem:[%s326 + $0xc0] sm:$0xff]
                  %353 = vst [vmem:[%s327 + $0x60] sm:$0xff] %v352
                  %v354 = vld [vmem:[%s326 + $0xd0] sm:$0xff]
                  %355 = vst [vmem:[%s327 + $0x68] sm:$0xff] %v354
                  %v356 = vld [vmem:[%s326 + $0xe0] sm:$0xff]
                  %357 = vst [vmem:[%s327 + $0x70] sm:$0xff] %v356
                  %v358 = vld [vmem:[%s326 + $0xf0] sm:$0xff]
                  %359 = vst [vmem:[%s327 + $0x78] sm:$0xff] %v358
                  %v360 = vld [vmem:[%s326 + $0x100] sm:$0xff]
                  %361 = vst [vmem:[%s327 + $0x80] sm:$0xff] %v360
                  %v362 = vld [vmem:[%s326 + $0x110] sm:$0xff]
                  %363 = vst [vmem:[%s327 + $0x88] sm:$0xff] %v362
                  %v364 = vld [vmem:[%s326 + $0x120] sm:$0xff]
                  %365 = vst [vmem:[%s327 + $0x90] sm:$0xff] %v364
                  %v366 = vld [vmem:[%s326 + $0x130] sm:$0xff]
                  %367 = vst [vmem:[%s327 + $0x98] sm:$0xff] %v366
                  %v368 = vld [vmem:[%s326 + $0x140] sm:$0xff]
                  %369 = vst [vmem:[%s327 + $0xa0] sm:$0xff] %v368
                  %v370 = vld [vmem:[%s326 + $0x150] sm:$0xff]
                  %371 = vst [vmem:[%s327 + $0xa8] sm:$0xff] %v370
                  %v372 = vld [vmem:[%s326 + $0x160] sm:$0xff]
                  %373 = vst [vmem:[%s327 + $0xb0] sm:$0xff] %v372
                  %v374 = vld [vmem:[%s326 + $0x170] sm:$0xff]
                  %375 = vst [vmem:[%s327 + $0xb8] sm:$0xff] %v374
                  %v376 = vld [vmem:[%s326 + $0x180] sm:$0xff]
                  %377 = vst [vmem:[%s327 + $0xc0] sm:$0xff] %v376
                  %v378 = vld [vmem:[%s326 + $0x190] sm:$0xff]
                  %379 = vst [vmem:[%s327 + $0xc8] sm:$0xff] %v378
                  %v380 = vld [vmem:[%s326 + $0x1a0] sm:$0xff]
                  %381 = vst [vmem:[%s327 + $0xd0] sm:$0xff] %v380
                  %v382 = vld [vmem:[%s326 + $0x1b0] sm:$0xff]
                  %383 = vst [vmem:[%s327 + $0xd8] sm:$0xff] %v382
                  %v384 = vld [vmem:[%s326 + $0x1c0] sm:$0xff]
                  %385 = vst [vmem:[%s327 + $0xe0] sm:$0xff] %v384
                  %v386 = vld [vmem:[%s326 + $0x1d0] sm:$0xff]
                  %387 = vst [vmem:[%s327 + $0xe8] sm:$0xff] %v386
                  %v388 = vld [vmem:[%s326 + $0x1e0] sm:$0xff]
                  %389 = vst [vmem:[%s327 + $0xf0] sm:$0xff] %v388
                  %v390 = vld [vmem:[%s326 + $0x1f0] sm:$0xff]
                  %391 = vst [vmem:[%s327 + $0xf8] sm:$0xff] %v390
                $region56: #{additive_coupling_forward.3} parent=50 // loop_footer
                  %s325 = sadd.s32 1, %s321
                $region57: #{additive_coupling_forward.3} parent=50 // loop_footer_branch
                  %320 = sbr.rel target = $region53
                $region58: #{additive_coupling_forward.3} parent=50 // loop_exit
                  _
              $region51: #{additive_coupling_forward.3} parent=35 // pred_fallthru
                _
              // Predicated region
              $region59: #{additive_coupling_forward.3} parent=35 // pred_check
                _
              $region60: #{additive_coupling_forward.3} parent=35 // pred_check_branch
                %393 = sbr.rel target = $region62
              $region61: #{additive_coupling_forward.3} parent=35 // pred_region
                _
              $region62: #{additive_coupling_forward.3} parent=35 // pred_fallthru
                _
            $region36: #{additive_coupling_forward.3} parent=31 // pred_fallthru
              _
            // Predicated region
            $region37: #{additive_coupling_forward.3} parent=31 // pred_check
              _
            $region38: #{additive_coupling_forward.3} parent=31 // pred_check_branch
              %244 = sbr.rel target = $region40
            $region39: #{additive_coupling_forward.3} parent=31 // pred_region
              loop: start=0, step=1, limit=1
              $region41: #{additive_coupling_forward.3} parent=39 // loop_pre_header
                _
              $region42: #{additive_coupling_forward.3} parent=39 // loop_header
                %s247 = sphi 0, %s251
                %p248 = scmp.ge.s32.totalorder %s247, 1
                %s252 = sphi %s238, %s238
                %s253 = sphi %s232, %s232
              $region43: #{additive_coupling_forward.3} parent=39 // loop_header_branch
                %250 = sbr.rel (%p248) target = $region47
              $region44: #{additive_coupling_forward.3} parent=39 // loop_body
                %v254 = vld [vmem:[%s252] sm:$0xff]
                %255 = vst [vmem:[%s253] sm:$0xff] %v254
                %v256 = vld [vmem:[%s252 + $0x10] sm:$0xff]
                %257 = vst [vmem:[%s253 + $0x8] sm:$0xff] %v256
                %v258 = vld [vmem:[%s252 + $0x20] sm:$0xff]
                %259 = vst [vmem:[%s253 + $0x10] sm:$0xff] %v258
                %v260 = vld [vmem:[%s252 + $0x30] sm:$0xff]
                %261 = vst [vmem:[%s253 + $0x18] sm:$0xff] %v260
                %v262 = vld [vmem:[%s252 + $0x40] sm:$0xff]
                %263 = vst [vmem:[%s253 + $0x20] sm:$0xff] %v262
                %v264 = vld [vmem:[%s252 + $0x50] sm:$0xff]
                %265 = vst [vmem:[%s253 + $0x28] sm:$0xff] %v264
                %v266 = vld [vmem:[%s252 + $0x60] sm:$0xff]
                %267 = vst [vmem:[%s253 + $0x30] sm:$0xff] %v266
                %v268 = vld [vmem:[%s252 + $0x70] sm:$0xff]
                %269 = vst [vmem:[%s253 + $0x38] sm:$0xff] %v268
                %v270 = vld [vmem:[%s252 + $0x80] sm:$0xff]
                %271 = vst [vmem:[%s253 + $0x40] sm:$0xff] %v270
                %v272 = vld [vmem:[%s252 + $0x90] sm:$0xff]
                %273 = vst [vmem:[%s253 + $0x48] sm:$0xff] %v272
                %v274 = vld [vmem:[%s252 + $0xa0] sm:$0xff]
                %275 = vst [vmem:[%s253 + $0x50] sm:$0xff] %v274
                %v276 = vld [vmem:[%s252 + $0xb0] sm:$0xff]
                %277 = vst [vmem:[%s253 + $0x58] sm:$0xff] %v276
                %v278 = vld [vmem:[%s252 + $0xc0] sm:$0xff]
                %279 = vst [vmem:[%s253 + $0x60] sm:$0xff] %v278
                %v280 = vld [vmem:[%s252 + $0xd0] sm:$0xff]
                %281 = vst [vmem:[%s253 + $0x68] sm:$0xff] %v280
                %v282 = vld [vmem:[%s252 + $0xe0] sm:$0xff]
                %283 = vst [vmem:[%s253 + $0x70] sm:$0xff] %v282
                %v284 = vld [vmem:[%s252 + $0xf0] sm:$0xff]
                %285 = vst [vmem:[%s253 + $0x78] sm:$0xff] %v284
                %v286 = vld [vmem:[%s252 + $0x100] sm:$0xff]
                %287 = vst [vmem:[%s253 + $0x80] sm:$0xff] %v286
                %v288 = vld [vmem:[%s252 + $0x110] sm:$0xff]
                %289 = vst [vmem:[%s253 + $0x88] sm:$0xff] %v288
                %v290 = vld [vmem:[%s252 + $0x120] sm:$0xff]
                %291 = vst [vmem:[%s253 + $0x90] sm:$0xff] %v290
                %v292 = vld [vmem:[%s252 + $0x130] sm:$0xff]
                %293 = vst [vmem:[%s253 + $0x98] sm:$0xff] %v292
                %v294 = vld [vmem:[%s252 + $0x140] sm:$0xff]
                %295 = vst [vmem:[%s253 + $0xa0] sm:$0xff] %v294
                %v296 = vld [vmem:[%s252 + $0x150] sm:$0xff]
                %297 = vst [vmem:[%s253 + $0xa8] sm:$0xff] %v296
                %v298 = vld [vmem:[%s252 + $0x160] sm:$0xff]
                %299 = vst [vmem:[%s253 + $0xb0] sm:$0xff] %v298
                %v300 = vld [vmem:[%s252 + $0x170] sm:$0xff]
                %301 = vst [vmem:[%s253 + $0xb8] sm:$0xff] %v300
                %v302 = vld [vmem:[%s252 + $0x180] sm:$0xff]
                %303 = vst [vmem:[%s253 + $0xc0] sm:$0xff] %v302
                %v304 = vld [vmem:[%s252 + $0x190] sm:$0xff]
                %305 = vst [vmem:[%s253 + $0xc8] sm:$0xff] %v304
                %v306 = vld [vmem:[%s252 + $0x1a0] sm:$0xff]
                %307 = vst [vmem:[%s253 + $0xd0] sm:$0xff] %v306
                %v308 = vld [vmem:[%s252 + $0x1b0] sm:$0xff]
                %309 = vst [vmem:[%s253 + $0xd8] sm:$0xff] %v308
                %v310 = vld [vmem:[%s252 + $0x1c0] sm:$0xff]
                %311 = vst [vmem:[%s253 + $0xe0] sm:$0xff] %v310
                %v312 = vld [vmem:[%s252 + $0x1d0] sm:$0xff]
                %313 = vst [vmem:[%s253 + $0xe8] sm:$0xff] %v312
                %v314 = vld [vmem:[%s252 + $0x1e0] sm:$0xff]
                %315 = vst [vmem:[%s253 + $0xf0] sm:$0xff] %v314
                %v316 = vld [vmem:[%s252 + $0x1f0] sm:$0xff]
                %317 = vst [vmem:[%s253 + $0xf8] sm:$0xff] %v316
              $region45: #{additive_coupling_forward.3} parent=39 // loop_footer
                %s251 = sadd.s32 1, %s247
              $region46: #{additive_coupling_forward.3} parent=39 // loop_footer_branch
                %246 = sbr.rel target = $region42
              $region47: #{additive_coupling_forward.3} parent=39 // loop_exit
                _
            $region40: #{additive_coupling_forward.3} parent=31 // pred_fallthru
              _
          $region32: #{additive_coupling_forward.3} parent=27 // pred_fallthru
            _
          %394 = vnop
        $region28: #{additive_coupling_forward.3} parent=23 // pred_fallthru
          _
        // Predicated region
        $region63: #{additive_coupling_forward.3} parent=23 // pred_check
          %p395 = pneg %p75
        $region64: #{additive_coupling_forward.3} parent=23 // pred_check_branch
          %397 = sbr.rel (%p395) target = $region66
        $region65: #{additive_coupling_forward.3} parent=23 // pred_region
          %s398 = smul.u32 32, %s23
          %p399 = scmp.lt.s32.totalorder %s398, 63
          %s400 = scalar_select %p399, %s398, 63
          %s401 = smul.addr %s400, 8
          %s402 = scalar_lea.vmem %s1, %s401
          %s403 = smul.u32 32, %s23
        $region66: #{additive_coupling_forward.3} parent=23 // pred_fallthru
          _
        // Predicated region
        $region67: #{additive_coupling_forward.3} parent=23 // pred_check
          %p404 = pneg %p101
        $region68: #{additive_coupling_forward.3} parent=23 // pred_check_branch
          %406 = sbr.rel (%p404) target = $region70
        $region69: #{additive_coupling_forward.3} parent=23 // pred_region
          %s407 = smul.u32 32, %s22
          %p408 = scmp.lt.s32.totalorder %s407, 63
          %s409 = scalar_select %p408, %s407, 63
          %s410 = smul.addr %s409, 8
          %s411 = scalar_lea.vmem %s2, %s410
          %s412 = smul.u32 32, %s22
        $region70: #{additive_coupling_forward.3} parent=23 // pred_fallthru
          _
        // Predicated region
        $region71: #{additive_coupling_forward.3} parent=23 // pred_check
          %p413 = pneg %p127
        $region72: #{additive_coupling_forward.3} parent=23 // pred_check_branch
          %415 = sbr.rel (%p413) target = $region74
        $region73: #{additive_coupling_forward.3} parent=23 // pred_region
          %s416 = sand.u32 %s117, 1
          %s417 = sand.u32 %s117, 1
          %s418 = smul.addr %s417, 256
          %s419 = scalar_lea.vmem [#allocation4], %s418
          %s420 = smul.u32 32, %s22
          %s421 = smul.addr %s420, 2
          %s422 = sadd.s32 1, %s421
          %s423 = smul.addr %s422, 8
          %s424 = scalar_lea.vmem %s3, %s423
          // Predicated region
          $region75: #{additive_coupling_forward.3} parent=73 // pred_check
            _
          $region76: #{additive_coupling_forward.3} parent=73 // pred_check_branch
            %426 = sbr.rel (0) target = $region78
          $region77: #{additive_coupling_forward.3} parent=73 // pred_region
            // Predicated region
            $region79: #{additive_coupling_forward.3} parent=77 // pred_check
              _
            $region80: #{additive_coupling_forward.3} parent=77 // pred_check_branch
              %428 = sbr.rel (0) target = $region82
            $region81: #{additive_coupling_forward.3} parent=77 // pred_region
              // Predicated region
              $region94: #{additive_coupling_forward.3} parent=81 // pred_check
                _
              $region95: #{additive_coupling_forward.3} parent=81 // pred_check_branch
                %505 = sbr.rel (0) target = $region97
              $region96: #{additive_coupling_forward.3} parent=81 // pred_region
                loop: start=0, step=1, limit=1
                $region98: #{additive_coupling_forward.3} parent=96 // loop_pre_header
                  _
                $region99: #{additive_coupling_forward.3} parent=96 // loop_header
                  %s507 = sphi 0, %s511
                  %p508 = scmp.ge.s32.totalorder %s507, 1
                  %s512 = sphi %s424, %s424
                  %s513 = sphi %s419, %s419
                $region100: #{additive_coupling_forward.3} parent=96 // loop_header_branch
                  %510 = sbr.rel (%p508) target = $region104
                $region101: #{additive_coupling_forward.3} parent=96 // loop_body
                  %v514 = vld [vmem:[%s512] sm:$0xff]
                  %515 = vst [vmem:[%s513] sm:$0xff] %v514
                  %v516 = vld [vmem:[%s512 + $0x10] sm:$0xff]
                  %517 = vst [vmem:[%s513 + $0x8] sm:$0xff] %v516
                  %v518 = vld [vmem:[%s512 + $0x20] sm:$0xff]
                  %519 = vst [vmem:[%s513 + $0x10] sm:$0xff] %v518
                  %v520 = vld [vmem:[%s512 + $0x30] sm:$0xff]
                  %521 = vst [vmem:[%s513 + $0x18] sm:$0xff] %v520
                  %v522 = vld [vmem:[%s512 + $0x40] sm:$0xff]
                  %523 = vst [vmem:[%s513 + $0x20] sm:$0xff] %v522
                  %v524 = vld [vmem:[%s512 + $0x50] sm:$0xff]
                  %525 = vst [vmem:[%s513 + $0x28] sm:$0xff] %v524
                  %v526 = vld [vmem:[%s512 + $0x60] sm:$0xff]
                  %527 = vst [vmem:[%s513 + $0x30] sm:$0xff] %v526
                  %v528 = vld [vmem:[%s512 + $0x70] sm:$0xff]
                  %529 = vst [vmem:[%s513 + $0x38] sm:$0xff] %v528
                  %v530 = vld [vmem:[%s512 + $0x80] sm:$0xff]
                  %531 = vst [vmem:[%s513 + $0x40] sm:$0xff] %v530
                  %v532 = vld [vmem:[%s512 + $0x90] sm:$0xff]
                  %533 = vst [vmem:[%s513 + $0x48] sm:$0xff] %v532
                  %v534 = vld [vmem:[%s512 + $0xa0] sm:$0xff]
                  %535 = vst [vmem:[%s513 + $0x50] sm:$0xff] %v534
                  %v536 = vld [vmem:[%s512 + $0xb0] sm:$0xff]
                  %537 = vst [vmem:[%s513 + $0x58] sm:$0xff] %v536
                  %v538 = vld [vmem:[%s512 + $0xc0] sm:$0xff]
                  %539 = vst [vmem:[%s513 + $0x60] sm:$0xff] %v538
                  %v540 = vld [vmem:[%s512 + $0xd0] sm:$0xff]
                  %541 = vst [vmem:[%s513 + $0x68] sm:$0xff] %v540
                  %v542 = vld [vmem:[%s512 + $0xe0] sm:$0xff]
                  %543 = vst [vmem:[%s513 + $0x70] sm:$0xff] %v542
                  %v544 = vld [vmem:[%s512 + $0xf0] sm:$0xff]
                  %545 = vst [vmem:[%s513 + $0x78] sm:$0xff] %v544
                  %v546 = vld [vmem:[%s512 + $0x100] sm:$0xff]
                  %547 = vst [vmem:[%s513 + $0x80] sm:$0xff] %v546
                  %v548 = vld [vmem:[%s512 + $0x110] sm:$0xff]
                  %549 = vst [vmem:[%s513 + $0x88] sm:$0xff] %v548
                  %v550 = vld [vmem:[%s512 + $0x120] sm:$0xff]
                  %551 = vst [vmem:[%s513 + $0x90] sm:$0xff] %v550
                  %v552 = vld [vmem:[%s512 + $0x130] sm:$0xff]
                  %553 = vst [vmem:[%s513 + $0x98] sm:$0xff] %v552
                  %v554 = vld [vmem:[%s512 + $0x140] sm:$0xff]
                  %555 = vst [vmem:[%s513 + $0xa0] sm:$0xff] %v554
                  %v556 = vld [vmem:[%s512 + $0x150] sm:$0xff]
                  %557 = vst [vmem:[%s513 + $0xa8] sm:$0xff] %v556
                  %v558 = vld [vmem:[%s512 + $0x160] sm:$0xff]
                  %559 = vst [vmem:[%s513 + $0xb0] sm:$0xff] %v558
                  %v560 = vld [vmem:[%s512 + $0x170] sm:$0xff]
                  %561 = vst [vmem:[%s513 + $0xb8] sm:$0xff] %v560
                  %v562 = vld [vmem:[%s512 + $0x180] sm:$0xff]
                  %563 = vst [vmem:[%s513 + $0xc0] sm:$0xff] %v562
                  %v564 = vld [vmem:[%s512 + $0x190] sm:$0xff]
                  %565 = vst [vmem:[%s513 + $0xc8] sm:$0xff] %v564
                  %v566 = vld [vmem:[%s512 + $0x1a0] sm:$0xff]
                  %567 = vst [vmem:[%s513 + $0xd0] sm:$0xff] %v566
                  %v568 = vld [vmem:[%s512 + $0x1b0] sm:$0xff]
                  %569 = vst [vmem:[%s513 + $0xd8] sm:$0xff] %v568
                  %v570 = vld [vmem:[%s512 + $0x1c0] sm:$0xff]
                  %571 = vst [vmem:[%s513 + $0xe0] sm:$0xff] %v570
                  %v572 = vld [vmem:[%s512 + $0x1d0] sm:$0xff]
                  %573 = vst [vmem:[%s513 + $0xe8] sm:$0xff] %v572
                  %v574 = vld [vmem:[%s512 + $0x1e0] sm:$0xff]
                  %575 = vst [vmem:[%s513 + $0xf0] sm:$0xff] %v574
                  %v576 = vld [vmem:[%s512 + $0x1f0] sm:$0xff]
                  %577 = vst [vmem:[%s513 + $0xf8] sm:$0xff] %v576
                $region102: #{additive_coupling_forward.3} parent=96 // loop_footer
                  %s511 = sadd.s32 1, %s507
                $region103: #{additive_coupling_forward.3} parent=96 // loop_footer_branch
                  %506 = sbr.rel target = $region99
                $region104: #{additive_coupling_forward.3} parent=96 // loop_exit
                  _
              $region97: #{additive_coupling_forward.3} parent=81 // pred_fallthru
                _
              // Predicated region
              $region105: #{additive_coupling_forward.3} parent=81 // pred_check
                _
              $region106: #{additive_coupling_forward.3} parent=81 // pred_check_branch
                %579 = sbr.rel target = $region108
              $region107: #{additive_coupling_forward.3} parent=81 // pred_region
                _
              $region108: #{additive_coupling_forward.3} parent=81 // pred_fallthru
                _
            $region82: #{additive_coupling_forward.3} parent=77 // pred_fallthru
              _
            // Predicated region
            $region83: #{additive_coupling_forward.3} parent=77 // pred_check
              _
            $region84: #{additive_coupling_forward.3} parent=77 // pred_check_branch
              %430 = sbr.rel target = $region86
            $region85: #{additive_coupling_forward.3} parent=77 // pred_region
              loop: start=0, step=1, limit=1
              $region87: #{additive_coupling_forward.3} parent=85 // loop_pre_header
                _
              $region88: #{additive_coupling_forward.3} parent=85 // loop_header
                %s433 = sphi 0, %s437
                %p434 = scmp.ge.s32.totalorder %s433, 1
                %s438 = sphi %s424, %s424
                %s439 = sphi %s419, %s419
              $region89: #{additive_coupling_forward.3} parent=85 // loop_header_branch
                %436 = sbr.rel (%p434) target = $region93
              $region90: #{additive_coupling_forward.3} parent=85 // loop_body
                %v440 = vld [vmem:[%s438] sm:$0xff]
                %441 = vst [vmem:[%s439] sm:$0xff] %v440
                %v442 = vld [vmem:[%s438 + $0x10] sm:$0xff]
                %443 = vst [vmem:[%s439 + $0x8] sm:$0xff] %v442
                %v444 = vld [vmem:[%s438 + $0x20] sm:$0xff]
                %445 = vst [vmem:[%s439 + $0x10] sm:$0xff] %v444
                %v446 = vld [vmem:[%s438 + $0x30] sm:$0xff]
                %447 = vst [vmem:[%s439 + $0x18] sm:$0xff] %v446
                %v448 = vld [vmem:[%s438 + $0x40] sm:$0xff]
                %449 = vst [vmem:[%s439 + $0x20] sm:$0xff] %v448
                %v450 = vld [vmem:[%s438 + $0x50] sm:$0xff]
                %451 = vst [vmem:[%s439 + $0x28] sm:$0xff] %v450
                %v452 = vld [vmem:[%s438 + $0x60] sm:$0xff]
                %453 = vst [vmem:[%s439 + $0x30] sm:$0xff] %v452
                %v454 = vld [vmem:[%s438 + $0x70] sm:$0xff]
                %455 = vst [vmem:[%s439 + $0x38] sm:$0xff] %v454
                %v456 = vld [vmem:[%s438 + $0x80] sm:$0xff]
                %457 = vst [vmem:[%s439 + $0x40] sm:$0xff] %v456
                %v458 = vld [vmem:[%s438 + $0x90] sm:$0xff]
                %459 = vst [vmem:[%s439 + $0x48] sm:$0xff] %v458
                %v460 = vld [vmem:[%s438 + $0xa0] sm:$0xff]
                %461 = vst [vmem:[%s439 + $0x50] sm:$0xff] %v460
                %v462 = vld [vmem:[%s438 + $0xb0] sm:$0xff]
                %463 = vst [vmem:[%s439 + $0x58] sm:$0xff] %v462
                %v464 = vld [vmem:[%s438 + $0xc0] sm:$0xff]
                %465 = vst [vmem:[%s439 + $0x60] sm:$0xff] %v464
                %v466 = vld [vmem:[%s438 + $0xd0] sm:$0xff]
                %467 = vst [vmem:[%s439 + $0x68] sm:$0xff] %v466
                %v468 = vld [vmem:[%s438 + $0xe0] sm:$0xff]
                %469 = vst [vmem:[%s439 + $0x70] sm:$0xff] %v468
                %v470 = vld [vmem:[%s438 + $0xf0] sm:$0xff]
                %471 = vst [vmem:[%s439 + $0x78] sm:$0xff] %v470
                %v472 = vld [vmem:[%s438 + $0x100] sm:$0xff]
                %473 = vst [vmem:[%s439 + $0x80] sm:$0xff] %v472
                %v474 = vld [vmem:[%s438 + $0x110] sm:$0xff]
                %475 = vst [vmem:[%s439 + $0x88] sm:$0xff] %v474
                %v476 = vld [vmem:[%s438 + $0x120] sm:$0xff]
                %477 = vst [vmem:[%s439 + $0x90] sm:$0xff] %v476
                %v478 = vld [vmem:[%s438 + $0x130] sm:$0xff]
                %479 = vst [vmem:[%s439 + $0x98] sm:$0xff] %v478
                %v480 = vld [vmem:[%s438 + $0x140] sm:$0xff]
                %481 = vst [vmem:[%s439 + $0xa0] sm:$0xff] %v480
                %v482 = vld [vmem:[%s438 + $0x150] sm:$0xff]
                %483 = vst [vmem:[%s439 + $0xa8] sm:$0xff] %v482
                %v484 = vld [vmem:[%s438 + $0x160] sm:$0xff]
                %485 = vst [vmem:[%s439 + $0xb0] sm:$0xff] %v484
                %v486 = vld [vmem:[%s438 + $0x170] sm:$0xff]
                %487 = vst [vmem:[%s439 + $0xb8] sm:$0xff] %v486
                %v488 = vld [vmem:[%s438 + $0x180] sm:$0xff]
                %489 = vst [vmem:[%s439 + $0xc0] sm:$0xff] %v488
                %v490 = vld [vmem:[%s438 + $0x190] sm:$0xff]
                %491 = vst [vmem:[%s439 + $0xc8] sm:$0xff] %v490
                %v492 = vld [vmem:[%s438 + $0x1a0] sm:$0xff]
                %493 = vst [vmem:[%s439 + $0xd0] sm:$0xff] %v492
                %v494 = vld [vmem:[%s438 + $0x1b0] sm:$0xff]
                %495 = vst [vmem:[%s439 + $0xd8] sm:$0xff] %v494
                %v496 = vld [vmem:[%s438 + $0x1c0] sm:$0xff]
                %497 = vst [vmem:[%s439 + $0xe0] sm:$0xff] %v496
                %v498 = vld [vmem:[%s438 + $0x1d0] sm:$0xff]
                %499 = vst [vmem:[%s439 + $0xe8] sm:$0xff] %v498
                %v500 = vld [vmem:[%s438 + $0x1e0] sm:$0xff]
                %501 = vst [vmem:[%s439 + $0xf0] sm:$0xff] %v500
                %v502 = vld [vmem:[%s438 + $0x1f0] sm:$0xff]
                %503 = vst [vmem:[%s439 + $0xf8] sm:$0xff] %v502
              $region91: #{additive_coupling_forward.3} parent=85 // loop_footer
                %s437 = sadd.s32 1, %s433
              $region92: #{additive_coupling_forward.3} parent=85 // loop_footer_branch
                %432 = sbr.rel target = $region88
              $region93: #{additive_coupling_forward.3} parent=85 // loop_exit
                _
            $region86: #{additive_coupling_forward.3} parent=77 // pred_fallthru
              _
          $region78: #{additive_coupling_forward.3} parent=73 // pred_fallthru
            _
          %580 = vnop
        $region74: #{additive_coupling_forward.3} parent=23 // pred_fallthru
          _
      $region24: #{additive_coupling_forward.3} parent=5 // pred_fallthru
        _
      %p581 = scmp.le.s32.totalorder 1, %s15
      %p582 = scmp.lt.s32.totalorder %s15, 5
      %p583 = pnand %p581, %p582
      %p584 = pneg %p583
      // Predicated region
      $region109: #{additive_coupling_forward.3} parent=5 // pred_check
        _
      $region110: #{additive_coupling_forward.3} parent=5 // pred_check_branch
        %586 = sbr.rel (%p583) target = $region112
      $region111: #{additive_coupling_forward.3} parent=5 // pred_region
        %s587 = ssub.s32 %s15, 1
        %s588 = sand.u32 %s42, 1
        %s589 = sand.u32 %s42, 1
        %s590 = smul.addr %s589, 256
        %s591 = scalar_lea.vmem [#allocation3], %s590
        // Predicated region
        $region113: #{additive_coupling_forward.3} parent=111 // pred_check
          %p592 = pneg %p55
        $region114: #{additive_coupling_forward.3} parent=111 // pred_check_branch
          %594 = sbr.rel (%p592) target = $region116
        $region115: #{additive_coupling_forward.3} parent=111 // pred_region
          _
        $region116: #{additive_coupling_forward.3} parent=111 // pred_fallthru
          _
        %s595 = sand.u32 %s120, 1
        %s596 = sand.u32 %s120, 1
        %s597 = smul.addr %s596, 256
        %s598 = scalar_lea.vmem [#allocation4], %s597
        // Predicated region
        $region117: #{additive_coupling_forward.3} parent=111 // pred_check
          %p599 = pneg %p133
        $region118: #{additive_coupling_forward.3} parent=111 // pred_check_branch
          %601 = sbr.rel (%p599) target = $region120
        $region119: #{additive_coupling_forward.3} parent=111 // pred_region
          _
        $region120: #{additive_coupling_forward.3} parent=111 // pred_fallthru
          _
        %s602 = sand.u32 %s42, 1
        %s603 = sand.u32 %s42, 1
        %s604 = smul.addr %s603, 256
        %s605 = scalar_lea.vmem [#allocation3], %s604
        %p606 = pneg %p55
        %p607 = pneg %p52
        %s608 = smul.u32 32, %s25
        %p609 = scmp.lt.s32.totalorder %s608, 63
        %s610 = scalar_select %p609, %s608, 63
        %s611 = smul.addr %s610, 8
        %s612 = scalar_lea.vmem %s1, %s611
        %p613 = pneg %p81
        %p614 = pneg %p78
        %s615 = smul.u32 32, %s24
        %p616 = scmp.lt.s32.totalorder %s615, 63
        %s617 = scalar_select %p616, %s615, 63
        %s618 = smul.addr %s617, 8
        %s619 = scalar_lea.vmem %s2, %s618
        %p620 = pneg %p107
        %p621 = pneg %p104
        %s622 = sand.u32 %s120, 1
        %s623 = sand.u32 %s120, 1
        %s624 = smul.addr %s623, 256
        %s625 = scalar_lea.vmem [#allocation4], %s624
        %p626 = pneg %p133
        %p627 = pneg %p130
        %p628 = pneg %p154
        %p629 = pneg %p151
        %p630 = pneg %p175
        %p631 = pneg %p172
        %p632 = pneg %p201
        %p633 = pneg %p198
        %s634 = sand.u32 %s188, 1
        %s635 = scalar_lea.sflag [#allocation6], %s634
        %s636 = sand.u32 %s188, 1
        %s637 = smul.addr %s636, 512
        %s638 = scalar_lea.vmem [#allocation5], %s637
        %s639 = smul.u32 32, %s24
        %s640 = smul.u32 2, %s25
        %s641 = smul.u32 32, %s25
        %p642 = scmp.lt.s32.totalorder %s641, 63
        %s643 = scalar_select %p642, %s641, 63
        %s644 = smul.addr %s643, 8
        %s645 = scalar_lea.vmem %s1, %s644
        %s646 = smul.u32 32, %s25
        %s647 = smul.u32 32, %s24
        %p648 = scmp.lt.s32.totalorder %s647, 63
        %s649 = scalar_select %p648, %s647, 63
        %s650 = smul.addr %s649, 8
        %s651 = scalar_lea.vmem %s2, %s650
        %s652 = smul.u32 32, %s24
        %s653 = smul.u32 32, %s24
        %s654 = smul.u32 32, %s24
        %p656 = scmp.eq.s32.totalorder %s25, 0
        // Predicated region
        $region121: #{additive_coupling_forward.3} parent=111 // pred_check
          %p657 = pneg %p656
        $region122: #{additive_coupling_forward.3} parent=111 // pred_check_branch
          %659 = sbr.rel (%p657) target = $region124
        $region123: #{additive_coupling_forward.3} parent=111 // pred_region
          %660 = vst [vmem:[#allocation2] sm:$0xff] 0.0
          %661 = vst [vmem:[#allocation2 + $0x8] sm:$0xff] 0.0
          %662 = vst [vmem:[#allocation2 + $0x10] sm:$0xff] 0.0
          %663 = vst [vmem:[#allocation2 + $0x18] sm:$0xff] 0.0
          %664 = vst [vmem:[#allocation2 + $0x20] sm:$0xff] 0.0
          %665 = vst [vmem:[#allocation2 + $0x28] sm:$0xff] 0.0
          %666 = vst [vmem:[#allocation2 + $0x30] sm:$0xff] 0.0
          %667 = vst [vmem:[#allocation2 + $0x38] sm:$0xff] 0.0
          %668 = vst [vmem:[#allocation2 + $0x40] sm:$0xff] 0.0
          %669 = vst [vmem:[#allocation2 + $0x48] sm:$0xff] 0.0
          %670 = vst [vmem:[#allocation2 + $0x50] sm:$0xff] 0.0
          %671 = vst [vmem:[#allocation2 + $0x58] sm:$0xff] 0.0
          %672 = vst [vmem:[#allocation2 + $0x60] sm:$0xff] 0.0
          %673 = vst [vmem:[#allocation2 + $0x68] sm:$0xff] 0.0
          %674 = vst [vmem:[#allocation2 + $0x70] sm:$0xff] 0.0
          %675 = vst [vmem:[#allocation2 + $0x78] sm:$0xff] 0.0
          %676 = vst [vmem:[#allocation2 + $0x80] sm:$0xff] 0.0
          %677 = vst [vmem:[#allocation2 + $0x88] sm:$0xff] 0.0
          %678 = vst [vmem:[#allocation2 + $0x90] sm:$0xff] 0.0
          %679 = vst [vmem:[#allocation2 + $0x98] sm:$0xff] 0.0
          %680 = vst [vmem:[#allocation2 + $0xa0] sm:$0xff] 0.0
          %681 = vst [vmem:[#allocation2 + $0xa8] sm:$0xff] 0.0
          %682 = vst [vmem:[#allocation2 + $0xb0] sm:$0xff] 0.0
          %683 = vst [vmem:[#allocation2 + $0xb8] sm:$0xff] 0.0
          %684 = vst [vmem:[#allocation2 + $0xc0] sm:$0xff] 0.0
          %685 = vst [vmem:[#allocation2 + $0xc8] sm:$0xff] 0.0
          %686 = vst [vmem:[#allocation2 + $0xd0] sm:$0xff] 0.0
          %687 = vst [vmem:[#allocation2 + $0xd8] sm:$0xff] 0.0
          %688 = vst [vmem:[#allocation2 + $0xe0] sm:$0xff] 0.0
          %689 = vst [vmem:[#allocation2 + $0xe8] sm:$0xff] 0.0
          %690 = vst [vmem:[#allocation2 + $0xf0] sm:$0xff] 0.0
          %691 = vst [vmem:[#allocation2 + $0xf8] sm:$0xff] 0.0
        $region124: #{additive_coupling_forward.3} parent=111 // pred_fallthru
          _
        %v692 = vld [vmem:[%s645] sm:$0xff]
        %v693 = vld [vmem:[%s645 + $0x8] sm:$0xff]
        %v694 = vld [vmem:[%s645 + $0x10] sm:$0xff]
        %v695 = vld [vmem:[%s645 + $0x18] sm:$0xff]
        %v696 = vld [vmem:[%s645 + $0x20] sm:$0xff]
        %v697 = vld [vmem:[%s645 + $0x28] sm:$0xff]
        %v698 = vld [vmem:[%s645 + $0x30] sm:$0xff]
        %v699 = vld [vmem:[%s645 + $0x38] sm:$0xff]
        %v700 = vld [vmem:[%s645 + $0x40] sm:$0xff]
        %v701 = vld [vmem:[%s645 + $0x48] sm:$0xff]
        %v702 = vld [vmem:[%s645 + $0x50] sm:$0xff]
        %v703 = vld [vmem:[%s645 + $0x58] sm:$0xff]
        %v704 = vld [vmem:[%s645 + $0x60] sm:$0xff]
        %v705 = vld [vmem:[%s645 + $0x68] sm:$0xff]
        %v706 = vld [vmem:[%s645 + $0x70] sm:$0xff]
        %v707 = vld [vmem:[%s645 + $0x78] sm:$0xff]
        %v708 = vld [vmem:[%s645 + $0x80] sm:$0xff]
        %v709 = vld [vmem:[%s645 + $0x88] sm:$0xff]
        %v710 = vld [vmem:[%s645 + $0x90] sm:$0xff]
        %v711 = vld [vmem:[%s645 + $0x98] sm:$0xff]
        %v712 = vld [vmem:[%s645 + $0xa0] sm:$0xff]
        %v713 = vld [vmem:[%s645 + $0xa8] sm:$0xff]
        %v714 = vld [vmem:[%s645 + $0xb0] sm:$0xff]
        %v715 = vld [vmem:[%s645 + $0xb8] sm:$0xff]
        %v716 = vld [vmem:[%s645 + $0xc0] sm:$0xff]
        %v717 = vld [vmem:[%s645 + $0xc8] sm:$0xff]
        %v718 = vld [vmem:[%s645 + $0xd0] sm:$0xff]
        %v719 = vld [vmem:[%s645 + $0xd8] sm:$0xff]
        %v720 = vld [vmem:[%s645 + $0xe0] sm:$0xff]
        %v721 = vld [vmem:[%s645 + $0xe8] sm:$0xff]
        %v722 = vld [vmem:[%s645 + $0xf0] sm:$0xff]
        %v723 = vld [vmem:[%s645 + $0xf8] sm:$0xff]
        %v724 = vpack.c.bf16 %v693, %v692
        %v725 = vpack.c.bf16 %v695, %v694
        %v726 = vpack.c.bf16 %v697, %v696
        %v727 = vpack.c.bf16 %v699, %v698
        %v728 = vpack.c.bf16 %v701, %v700
        %v729 = vpack.c.bf16 %v703, %v702
        %v730 = vpack.c.bf16 %v705, %v704
        %v731 = vpack.c.bf16 %v707, %v706
        %v732 = vpack.c.bf16 %v709, %v708
        %v733 = vpack.c.bf16 %v711, %v710
        %v734 = vpack.c.bf16 %v713, %v712
        %v735 = vpack.c.bf16 %v715, %v714
        %v736 = vpack.c.bf16 %v717, %v716
        %v737 = vpack.c.bf16 %v719, %v718
        %v738 = vpack.c.bf16 %v721, %v720
        %v739 = vpack.c.bf16 %v723, %v722
        %v740 = vld [vmem:[%s4] sm:$0xf]
        %v741 = vld [vmem:[%s4 + $0x4] sm:$0xf]
        %v742 = vld [vmem:[%s4 + $0x8] sm:$0xf]
        %v743 = vld [vmem:[%s4 + $0xc] sm:$0xf]
        %v744 = vld [vmem:[%s4 + $0x10] sm:$0xf]
        %v745 = vld [vmem:[%s4 + $0x14] sm:$0xf]
        %v746 = vld [vmem:[%s4 + $0x18] sm:$0xf]
        %v747 = vld [vmem:[%s4 + $0x1c] sm:$0xf]
        %v748 = vld [vmem:[%s4 + $0x20] sm:$0xf]
        %v749 = vld [vmem:[%s4 + $0x24] sm:$0xf]
        %v750 = vld [vmem:[%s4 + $0x28] sm:$0xf]
        %v751 = vld [vmem:[%s4 + $0x2c] sm:$0xf]
        %v752 = vld [vmem:[%s4 + $0x30] sm:$0xf]
        %v753 = vld [vmem:[%s4 + $0x34] sm:$0xf]
        %v754 = vld [vmem:[%s4 + $0x38] sm:$0xf]
        %v755 = vld [vmem:[%s4 + $0x3c] sm:$0xf]
        %v772 = vunpack.c.l.b16 %v740
        %v773 = vunpack.c.l.b16 %v741
        %v774 = vunpack.c.l.b16 %v742
        %v775 = vunpack.c.l.b16 %v743
        %v776 = vunpack.c.l.b16 %v744
        %v777 = vunpack.c.l.b16 %v745
        %v778 = vunpack.c.l.b16 %v746
        %v779 = vunpack.c.l.b16 %v747
        %v780 = vunpack.c.l.b16 %v748
        %v781 = vunpack.c.l.b16 %v749
        %v782 = vunpack.c.l.b16 %v750
        %v783 = vunpack.c.l.b16 %v751
        %v784 = vunpack.c.l.b16 %v752
        %v785 = vunpack.c.l.b16 %v753
        %v786 = vunpack.c.l.b16 %v754
        %v787 = vunpack.c.l.b16 %v755
        %v788 = vpack.c.b16 %v773, %v772
        %v789 = vpack.c.b16 %v775, %v774
        %v790 = vpack.c.b16 %v777, %v776
        %v791 = vpack.c.b16 %v779, %v778
        %v792 = vpack.c.b16 %v781, %v780
        %v793 = vpack.c.b16 %v783, %v782
        %v794 = vpack.c.b16 %v785, %v784
        %v795 = vpack.c.b16 %v787, %v786
        %804 = vmatprep.subr.bf16.mxu0 0
        %805 = vmatpush1.bf16.msra.mxu0 %v788
        %806 = vmatprep.subr.bf16.mxu0 0
        %807 = vmatpush1.bf16.msra.mxu0 %v789
        %808 = vmatprep.subr.bf16.mxu0 0
        %809 = vmatpush1.bf16.msra.mxu0 %v790
        %810 = vmatprep.subr.bf16.mxu0 0
        %811 = vmatpush1.bf16.msra.mxu0 %v791
        %812 = vmatprep.subr.bf16.mxu0 0
        %813 = vmatpush1.bf16.msra.mxu0 %v792
        %814 = vmatprep.subr.bf16.mxu0 0
        %815 = vmatpush1.bf16.msra.mxu0 %v793
        %816 = vmatprep.subr.bf16.mxu0 0
        %817 = vmatpush1.bf16.msra.mxu0 %v794
        %818 = vmatprep.subr.bf16.mxu0 0
        %819 = vmatpush1.bf16.msra.mxu0 %v795
        %820 = vmatprep.subr.bf16.mxu0 0
        %821 = vmatpush1.bf16.msra.mxu0 0
        %822 = vmatprep.subr.bf16.mxu0 0
        %823 = vmatpush1.bf16.msra.mxu0 0
        %824 = vmatprep.subr.bf16.mxu0 0
        %825 = vmatpush1.bf16.msra.mxu0 0
        %826 = vmatprep.subr.bf16.mxu0 0
        %827 = vmatpush1.bf16.msra.mxu0 0
        %828 = vmatprep.subr.bf16.mxu0 0
        %829 = vmatpush1.bf16.msra.mxu0 0
        %830 = vmatprep.subr.bf16.mxu0 0
        %831 = vmatpush1.bf16.msra.mxu0 0
        %832 = vmatprep.subr.bf16.mxu0 0
        %833 = vmatpush1.bf16.msra.mxu0 0
        %834 = vmatprep.subr.bf16.mxu0 0
        %835 = vmatpush1.bf16.msra.mxu0 0
        %836 = vmatprep.mubr.bf16.mxu0 0
        %837 = vmatmul.mubr.bf16.gmra.mrb[0].mxu0 %v724
        %v838 = vpop.f32.mrb[0].mxu0
        %v839 = vadd.f32 0.0, %v838
        %v840 = vpop.f32.mrb[0].mxu0
        %v841 = vpop.f32.mrb[0].mxu0
        %v842 = vadd.f32 0.0, %v841
        %v843 = vpop.f32.mrb[0].mxu0
        %844 = vmatprep.mubr.bf16.mxu0 0
        %845 = vmatmul.mubr.bf16.gmra.mrb[0].mxu0 %v725
        %v846 = vpop.f32.mrb[0].mxu0
        %v847 = vadd.f32 0.0, %v846
        %v848 = vpop.f32.mrb[0].mxu0
        %v849 = vpop.f32.mrb[0].mxu0
        %v850 = vadd.f32 0.0, %v849
        %v851 = vpop.f32.mrb[0].mxu0
        %852 = vmatprep.mubr.bf16.mxu0 0
        %853 = vmatmul.mubr.bf16.gmra.mrb[0].mxu0 %v726
        %v854 = vpop.f32.mrb[0].mxu0
        %v855 = vadd.f32 0.0, %v854
        %v856 = vpop.f32.mrb[0].mxu0
        %v857 = vpop.f32.mrb[0].mxu0
        %v858 = vadd.f32 0.0, %v857
        %v859 = vpop.f32.mrb[0].mxu0
        %860 = vmatprep.mubr.bf16.mxu0 0
        %861 = vmatmul.mubr.bf16.gmra.mrb[0].mxu0 %v727
        %v862 = vpop.f32.mrb[0].mxu0
        %v863 = vadd.f32 0.0, %v862
        %v864 = vpop.f32.mrb[0].mxu0
        %v865 = vpop.f32.mrb[0].mxu0
        %v866 = vadd.f32 0.0, %v865
        %v867 = vpop.f32.mrb[0].mxu0
        %868 = vmatprep.mubr.bf16.mxu0 0
        %869 = vmatmul.mubr.bf16.gmra.mrb[0].mxu0 %v728
        %v870 = vpop.f32.mrb[0].mxu0
        %v871 = vadd.f32 0.0, %v870
        %v872 = vpop.f32.mrb[0].mxu0
        %v873 = vpop.f32.mrb[0].mxu0
        %v874 = vadd.f32 0.0, %v873
        %v875 = vpop.f32.mrb[0].mxu0
        %876 = vmatprep.mubr.bf16.mxu0 0
        %877 = vmatmul.mubr.bf16.gmra.mrb[0].mxu0 %v729
        %v878 = vpop.f32.mrb[0].mxu0
        %v879 = vadd.f32 0.0, %v878
        %v880 = vpop.f32.mrb[0].mxu0
        %v881 = vpop.f32.mrb[0].mxu0
        %v882 = vadd.f32 0.0, %v881
        %v883 = vpop.f32.mrb[0].mxu0
        %884 = vmatprep.mubr.bf16.mxu0 0
        %885 = vmatmul.mubr.bf16.gmra.mrb[0].mxu0 %v730
        %v886 = vpop.f32.mrb[0].mxu0
        %v887 = vadd.f32 0.0, %v886
        %v888 = vpop.f32.mrb[0].mxu0
        %v889 = vpop.f32.mrb[0].mxu0
        %v890 = vadd.f32 0.0, %v889
        %v891 = vpop.f32.mrb[0].mxu0
        %892 = vmatprep.mubr.bf16.mxu0 0
        %893 = vmatmul.mubr.bf16.gmra.mrb[0].mxu0 %v731
        %v894 = vpop.f32.mrb[0].mxu0
        %v895 = vadd.f32 0.0, %v894
        %v896 = vpop.f32.mrb[0].mxu0
        %v897 = vpop.f32.mrb[0].mxu0
        %v898 = vadd.f32 0.0, %v897
        %v899 = vpop.f32.mrb[0].mxu0
        %900 = vmatprep.mubr.bf16.mxu0 0
        %901 = vmatmul.mubr.bf16.gmra.mrb[0].mxu0 %v732
        %v902 = vpop.f32.mrb[0].mxu0
        %v903 = vadd.f32 0.0, %v902
        %v904 = vpop.f32.mrb[0].mxu0
        %v905 = vpop.f32.mrb[0].mxu0
        %v906 = vadd.f32 0.0, %v905
        %v907 = vpop.f32.mrb[0].mxu0
        %908 = vmatprep.mubr.bf16.mxu0 0
        %909 = vmatmul.mubr.bf16.gmra.mrb[0].mxu0 %v733
        %v910 = vpop.f32.mrb[0].mxu0
        %v911 = vadd.f32 0.0, %v910
        %v912 = vpop.f32.mrb[0].mxu0
        %v913 = vpop.f32.mrb[0].mxu0
        %v914 = vadd.f32 0.0, %v913
        %v915 = vpop.f32.mrb[0].mxu0
        %916 = vmatprep.mubr.bf16.mxu0 0
        %917 = vmatmul.mubr.bf16.gmra.mrb[0].mxu0 %v734
        %v918 = vpop.f32.mrb[0].mxu0
        %v919 = vadd.f32 0.0, %v918
        %v920 = vpop.f32.mrb[0].mxu0
        %v921 = vpop.f32.mrb[0].mxu0
        %v922 = vadd.f32 0.0, %v921
        %v923 = vpop.f32.mrb[0].mxu0
        %924 = vmatprep.mubr.bf16.mxu0 0
        %925 = vmatmul.mubr.bf16.gmra.mrb[0].mxu0 %v735
        %v926 = vpop.f32.mrb[0].mxu0
        %v927 = vadd.f32 0.0, %v926
        %v928 = vpop.f32.mrb[0].mxu0
        %v929 = vpop.f32.mrb[0].mxu0
        %v930 = vadd.f32 0.0, %v929
        %v931 = vpop.f32.mrb[0].mxu0
        %932 = vmatprep.mubr.bf16.mxu0 0
        %933 = vmatmul.mubr.bf16.gmra.mrb[0].mxu0 %v736
        %v934 = vpop.f32.mrb[0].mxu0
        %v935 = vadd.f32 0.0, %v934
        %v936 = vpop.f32.mrb[0].mxu0
        %v937 = vpop.f32.mrb[0].mxu0
        %v938 = vadd.f32 0.0, %v937
        %v939 = vpop.f32.mrb[0].mxu0
        %940 = vmatprep.mubr.bf16.mxu0 0
        %941 = vmatmul.mubr.bf16.gmra.mrb[0].mxu0 %v737
        %v942 = vpop.f32.mrb[0].mxu0
        %v943 = vadd.f32 0.0, %v942
        %v944 = vpop.f32.mrb[0].mxu0
        %v945 = vpop.f32.mrb[0].mxu0
        %v946 = vadd.f32 0.0, %v945
        %v947 = vpop.f32.mrb[0].mxu0
        %948 = vmatprep.mubr.bf16.mxu0 0
        %949 = vmatmul.mubr.bf16.gmra.mrb[0].mxu0 %v738
        %v950 = vpop.f32.mrb[0].mxu0
        %v951 = vadd.f32 0.0, %v950
        %v952 = vpop.f32.mrb[0].mxu0
        %v953 = vpop.f32.mrb[0].mxu0
        %v954 = vadd.f32 0.0, %v953
        %v955 = vpop.f32.mrb[0].mxu0
        %956 = vmatprep.mubr.bf16.mxu0 0
        %957 = vmatmul.mubr.bf16.gmra.mrb[0].mxu0 %v739
        %v958 = vpop.f32.mrb[0].mxu0
        %v959 = vadd.f32 0.0, %v958
        %v960 = vpop.f32.mrb[0].mxu0
        %v961 = vpop.f32.mrb[0].mxu0
        %v962 = vadd.f32 0.0, %v961
        %v963 = vpop.f32.mrb[0].mxu0
        %964 = vdwg.mxu0
        %v965 = vpack.c.bf16 %v842, %v839
        %v966 = vpack.c.bf16 %v850, %v847
        %v967 = vpack.c.bf16 %v858, %v855
        %v968 = vpack.c.bf16 %v866, %v863
        %v969 = vpack.c.bf16 %v874, %v871
        %v970 = vpack.c.bf16 %v882, %v879
        %v971 = vpack.c.bf16 %v890, %v887
        %v972 = vpack.c.bf16 %v898, %v895
        %v973 = vpack.c.bf16 %v906, %v903
        %v974 = vpack.c.bf16 %v914, %v911
        %v975 = vpack.c.bf16 %v922, %v919
        %v976 = vpack.c.bf16 %v930, %v927
        %v977 = vpack.c.bf16 %v938, %v935
        %v978 = vpack.c.bf16 %v946, %v943
        %v979 = vpack.c.bf16 %v954, %v951
        %v980 = vpack.c.bf16 %v962, %v959
        %v981 = vld [vmem:[#allocation2] sm:$0xff]
        %v982 = vld [vmem:[#allocation2 + $0x8] sm:$0xff]
        %v983 = vld [vmem:[#allocation2 + $0x10] sm:$0xff]
        %v984 = vld [vmem:[#allocation2 + $0x18] sm:$0xff]
        %v985 = vld [vmem:[#allocation2 + $0x20] sm:$0xff]
        %v986 = vld [vmem:[#allocation2 + $0x28] sm:$0xff]
        %v987 = vld [vmem:[#allocation2 + $0x30] sm:$0xff]
        %v988 = vld [vmem:[#allocation2 + $0x38] sm:$0xff]
        %v989 = vld [vmem:[#allocation2 + $0x40] sm:$0xff]
        %v990 = vld [vmem:[#allocation2 + $0x48] sm:$0xff]
        %v991 = vld [vmem:[#allocation2 + $0x50] sm:$0xff]
        %v992 = vld [vmem:[#allocation2 + $0x58] sm:$0xff]
        %v993 = vld [vmem:[#allocation2 + $0x60] sm:$0xff]
        %v994 = vld [vmem:[#allocation2 + $0x68] sm:$0xff]
        %v995 = vld [vmem:[#allocation2 + $0x70] sm:$0xff]
        %v996 = vld [vmem:[#allocation2 + $0x78] sm:$0xff]
        %v997 = vld [vmem:[#allocation2 + $0x80] sm:$0xff]
        %v998 = vld [vmem:[#allocation2 + $0x88] sm:$0xff]
        %v999 = vld [vmem:[#allocation2 + $0x90] sm:$0xff]
        %v1000 = vld [vmem:[#allocation2 + $0x98] sm:$0xff]
        %v1001 = vld [vmem:[#allocation2 + $0xa0] sm:$0xff]
        %v1002 = vld [vmem:[#allocation2 + $0xa8] sm:$0xff]
        %v1003 = vld [vmem:[#allocation2 + $0xb0] sm:$0xff]
        %v1004 = vld [vmem:[#allocation2 + $0xb8] sm:$0xff]
        %v1005 = vld [vmem:[#allocation2 + $0xc0] sm:$0xff]
        %v1006 = vld [vmem:[#allocation2 + $0xc8] sm:$0xff]
        %v1007 = vld [vmem:[#allocation2 + $0xd0] sm:$0xff]
        %v1008 = vld [vmem:[#allocation2 + $0xd8] sm:$0xff]
        %v1009 = vld [vmem:[#allocation2 + $0xe0] sm:$0xff]
        %v1010 = vld [vmem:[#allocation2 + $0xe8] sm:$0xff]
        %v1011 = vld [vmem:[#allocation2 + $0xf0] sm:$0xff]
        %v1012 = vld [vmem:[#allocation2 + $0xf8] sm:$0xff]
        %v1013 = vld [vmem:[%s591] sm:$0xff]
        %v1014 = vld [vmem:[%s591 + $0x8] sm:$0xff]
        %v1015 = vld [vmem:[%s591 + $0x10] sm:$0xff]
        %v1016 = vld [vmem:[%s591 + $0x18] sm:$0xff]
        %v1017 = vld [vmem:[%s591 + $0x20] sm:$0xff]
        %v1018 = vld [vmem:[%s591 + $0x28] sm:$0xff]
        %v1019 = vld [vmem:[%s591 + $0x30] sm:$0xff]
        %v1020 = vld [vmem:[%s591 + $0x38] sm:$0xff]
        %v1021 = vld [vmem:[%s591 + $0x40] sm:$0xff]
        %v1022 = vld [vmem:[%s591 + $0x48] sm:$0xff]
        %v1023 = vld [vmem:[%s591 + $0x50] sm:$0xff]
        %v1024 = vld [vmem:[%s591 + $0x58] sm:$0xff]
        %v1025 = vld [vmem:[%s591 + $0x60] sm:$0xff]
        %v1026 = vld [vmem:[%s591 + $0x68] sm:$0xff]
        %v1027 = vld [vmem:[%s591 + $0x70] sm:$0xff]
        %v1028 = vld [vmem:[%s591 + $0x78] sm:$0xff]
        %v1029 = vld [vmem:[%s591 + $0x80] sm:$0xff]
        %v1030 = vld [vmem:[%s591 + $0x88] sm:$0xff]
        %v1031 = vld [vmem:[%s591 + $0x90] sm:$0xff]
        %v1032 = vld [vmem:[%s591 + $0x98] sm:$0xff]
        %v1033 = vld [vmem:[%s591 + $0xa0] sm:$0xff]
        %v1034 = vld [vmem:[%s591 + $0xa8] sm:$0xff]
        %v1035 = vld [vmem:[%s591 + $0xb0] sm:$0xff]
        %v1036 = vld [vmem:[%s591 + $0xb8] sm:$0xff]
        %v1037 = vld [vmem:[%s591 + $0xc0] sm:$0xff]
        %v1038 = vld [vmem:[%s591 + $0xc8] sm:$0xff]
        %v1039 = vld [vmem:[%s591 + $0xd0] sm:$0xff]
        %v1040 = vld [vmem:[%s591 + $0xd8] sm:$0xff]
        %v1041 = vld [vmem:[%s591 + $0xe0] sm:$0xff]
        %v1042 = vld [vmem:[%s591 + $0xe8] sm:$0xff]
        %v1043 = vld [vmem:[%s591 + $0xf0] sm:$0xff]
        %v1044 = vld [vmem:[%s591 + $0xf8] sm:$0xff]
        %v1077 = vunpack.c.l.b16 %v1013
        %v1078 = vunpack.c.h.b16 %v1013
        %v1079 = vunpack.c.l.b16 %v1014
        %v1080 = vunpack.c.h.b16 %v1014
        %v1081 = vunpack.c.l.b16 %v1015
        %v1082 = vunpack.c.h.b16 %v1015
        %v1083 = vunpack.c.l.b16 %v1016
        %v1084 = vunpack.c.h.b16 %v1016
        %v1085 = vunpack.c.l.b16 %v1017
        %v1086 = vunpack.c.h.b16 %v1017
        %v1087 = vunpack.c.l.b16 %v1018
        %v1088 = vunpack.c.h.b16 %v1018
        %v1089 = vunpack.c.l.b16 %v1019
        %v1090 = vunpack.c.h.b16 %v1019
        %v1091 = vunpack.c.l.b16 %v1020
        %v1092 = vunpack.c.h.b16 %v1020
        %v1093 = vunpack.c.l.b16 %v1021
        %v1094 = vunpack.c.h.b16 %v1021
        %v1095 = vunpack.c.l.b16 %v1022
        %v1096 = vunpack.c.h.b16 %v1022
        %v1097 = vunpack.c.l.b16 %v1023
        %v1098 = vunpack.c.h.b16 %v1023
        %v1099 = vunpack.c.l.b16 %v1024
        %v1100 = vunpack.c.h.b16 %v1024
        %v1101 = vunpack.c.l.b16 %v1025
        %v1102 = vunpack.c.h.b16 %v1025
        %v1103 = vunpack.c.l.b16 %v1026
        %v1104 = vunpack.c.h.b16 %v1026
        %v1105 = vunpack.c.l.b16 %v1027
        %v1106 = vunpack.c.h.b16 %v1027
        %v1107 = vunpack.c.l.b16 %v1028
        %v1108 = vunpack.c.h.b16 %v1028
        %v1109 = vunpack.c.l.b16 %v1029
        %v1110 = vunpack.c.h.b16 %v1029
        %v1111 = vunpack.c.l.b16 %v1030
        %v1112 = vunpack.c.h.b16 %v1030
        %v1113 = vunpack.c.l.b16 %v1031
        %v1114 = vunpack.c.h.b16 %v1031
        %v1115 = vunpack.c.l.b16 %v1032
        %v1116 = vunpack.c.h.b16 %v1032
        %v1117 = vunpack.c.l.b16 %v1033
        %v1118 = vunpack.c.h.b16 %v1033
        %v1119 = vunpack.c.l.b16 %v1034
        %v1120 = vunpack.c.h.b16 %v1034
        %v1121 = vunpack.c.l.b16 %v1035
        %v1122 = vunpack.c.h.b16 %v1035
        %v1123 = vunpack.c.l.b16 %v1036
        %v1124 = vunpack.c.h.b16 %v1036
        %v1125 = vunpack.c.l.b16 %v1037
        %v1126 = vunpack.c.h.b16 %v1037
        %v1127 = vunpack.c.l.b16 %v1038
        %v1128 = vunpack.c.h.b16 %v1038
        %v1129 = vunpack.c.l.b16 %v1039
        %v1130 = vunpack.c.h.b16 %v1039
        %v1131 = vunpack.c.l.b16 %v1040
        %v1132 = vunpack.c.h.b16 %v1040
        %v1133 = vunpack.c.l.b16 %v1041
        %v1134 = vunpack.c.h.b16 %v1041
        %v1135 = vunpack.c.l.b16 %v1042
        %v1136 = vunpack.c.h.b16 %v1042
        %v1137 = vunpack.c.l.b16 %v1043
        %v1138 = vunpack.c.h.b16 %v1043
        %v1139 = vunpack.c.l.b16 %v1044
        %v1140 = vunpack.c.h.b16 %v1044
        %v1141 = vpack.c.b16 %v1079, %v1077
        %v1142 = vpack.c.b16 %v1080, %v1078
        %v1143 = vpack.c.b16 %v1083, %v1081
        %v1144 = vpack.c.b16 %v1084, %v1082
        %v1145 = vpack.c.b16 %v1087, %v1085
        %v1146 = vpack.c.b16 %v1088, %v1086
        %v1147 = vpack.c.b16 %v1091, %v1089
        %v1148 = vpack.c.b16 %v1092, %v1090
        %v1149 = vpack.c.b16 %v1095, %v1093
        %v1150 = vpack.c.b16 %v1096, %v1094
        %v1151 = vpack.c.b16 %v1099, %v1097
        %v1152 = vpack.c.b16 %v1100, %v1098
        %v1153 = vpack.c.b16 %v1103, %v1101
        %v1154 = vpack.c.b16 %v1104, %v1102
        %v1155 = vpack.c.b16 %v1107, %v1105
        %v1156 = vpack.c.b16 %v1108, %v1106
        %v1157 = vpack.c.b16 %v1111, %v1109
        %v1158 = vpack.c.b16 %v1112, %v1110
        %v1159 = vpack.c.b16 %v1115, %v1113
        %v1160 = vpack.c.b16 %v1116, %v1114
        %v1161 = vpack.c.b16 %v1119, %v1117
        %v1162 = vpack.c.b16 %v1120, %v1118
        %v1163 = vpack.c.b16 %v1123, %v1121
        %v1164 = vpack.c.b16 %v1124, %v1122
        %v1165 = vpack.c.b16 %v1127, %v1125
        %v1166 = vpack.c.b16 %v1128, %v1126
        %v1167 = vpack.c.b16 %v1131, %v1129
        %v1168 = vpack.c.b16 %v1132, %v1130
        %v1169 = vpack.c.b16 %v1135, %v1133
        %v1170 = vpack.c.b16 %v1136, %v1134
        %v1171 = vpack.c.b16 %v1139, %v1137
        %v1172 = vpack.c.b16 %v1140, %v1138
        %1205 = vmatprep.subr.bf16.mxu0 0
        %1206 = vmatpush1.bf16.msra.mxu0 %v965
        %1207 = vmatprep.subr.bf16.mxu0 0
        %1208 = vmatpush1.bf16.msra.mxu0 %v966
        %1209 = vmatprep.subr.bf16.mxu0 0
        %1210 = vmatpush1.bf16.msra.mxu0 %v967
        %1211 = vmatprep.subr.bf16.mxu0 0
        %1212 = vmatpush1.bf16.msra.mxu0 %v968
        %1213 = vmatprep.subr.bf16.mxu0 0
        %1214 = vmatpush1.bf16.msra.mxu0 %v969
        %1215 = vmatprep.subr.bf16.mxu0 0
        %1216 = vmatpush1.bf16.msra.mxu0 %v970
        %1217 = vmatprep.subr.bf16.mxu0 0
        %1218 = vmatpush1.bf16.msra.mxu0 %v971
        %1219 = vmatprep.subr.bf16.mxu0 0
        %1220 = vmatpush1.bf16.msra.mxu0 %v972
        %1221 = vmatprep.subr.bf16.mxu0 0
        %1222 = vmatpush1.bf16.msra.mxu0 %v973
        %1223 = vmatprep.subr.bf16.mxu0 0
        %1224 = vmatpush1.bf16.msra.mxu0 %v974
        %1225 = vmatprep.subr.bf16.mxu0 0
        %1226 = vmatpush1.bf16.msra.mxu0 %v975
        %1227 = vmatprep.subr.bf16.mxu0 0
        %1228 = vmatpush1.bf16.msra.mxu0 %v976
        %1229 = vmatprep.subr.bf16.mxu0 0
        %1230 = vmatpush1.bf16.msra.mxu0 %v977
        %1231 = vmatprep.subr.bf16.mxu0 0
        %1232 = vmatpush1.bf16.msra.mxu0 %v978
        %1233 = vmatprep.subr.bf16.mxu0 0
        %1234 = vmatpush1.bf16.msra.mxu0 %v979
        %1235 = vmatprep.subr.bf16.mxu0 0
        %1236 = vmatpush1.bf16.msra.mxu0 %v980
        %1237 = vmatprep.mubr.bf16.mxu0 %v1142
        %1238 = vmatmul.mubr.bf16.gmra.mrb[0].mxu0 %v1141
        %v1239 = vpop.f32.mrb[0].mxu0
        %v1240 = vadd.f32 0.0, %v1239
        %v1241 = vpop.f32.mrb[0].mxu0
        %v1242 = vpop.f32.mrb[0].mxu0
        %v1243 = vadd.f32 0.0, %v1242
        %v1244 = vpop.f32.mrb[0].mxu0
        %1245 = vmatprep.mubr.bf16.mxu0 %v1144
        %1246 = vmatmul.mubr.bf16.gmra.mrb[0].mxu0 %v1143
        %v1247 = vpop.f32.mrb[0].mxu0
        %v1248 = vadd.f32 0.0, %v1247
        %v1249 = vpop.f32.mrb[0].mxu0
        %v1250 = vpop.f32.mrb[0].mxu0
        %v1251 = vadd.f32 0.0, %v1250
        %v1252 = vpop.f32.mrb[0].mxu0
        %1253 = vmatprep.mubr.bf16.mxu0 %v1146
        %1254 = vmatmul.mubr.bf16.gmra.mrb[0].mxu0 %v1145
        %v1255 = vpop.f32.mrb[0].mxu0
        %v1256 = vadd.f32 0.0, %v1255
        %v1257 = vpop.f32.mrb[0].mxu0
        %v1258 = vpop.f32.mrb[0].mxu0
        %v1259 = vadd.f32 0.0, %v1258
        %v1260 = vpop.f32.mrb[0].mxu0
        %1261 = vmatprep.mubr.bf16.mxu0 %v1148
        %1262 = vmatmul.mubr.bf16.gmra.mrb[0].mxu0 %v1147
        %v1263 = vpop.f32.mrb[0].mxu0
        %v1264 = vadd.f32 0.0, %v1263
        %v1265 = vpop.f32.mrb[0].mxu0
        %v1266 = vpop.f32.mrb[0].mxu0
        %v1267 = vadd.f32 0.0, %v1266
        %v1268 = vpop.f32.mrb[0].mxu0
        %1269 = vmatprep.mubr.bf16.mxu0 %v1150
        %1270 = vmatmul.mubr.bf16.gmra.mrb[0].mxu0 %v1149
        %v1271 = vpop.f32.mrb[0].mxu0
        %v1272 = vadd.f32 0.0, %v1271
        %v1273 = vpop.f32.mrb[0].mxu0
        %v1274 = vpop.f32.mrb[0].mxu0
        %v1275 = vadd.f32 0.0, %v1274
        %v1276 = vpop.f32.mrb[0].mxu0
        %1277 = vmatprep.mubr.bf16.mxu0 %v1152
        %1278 = vmatmul.mubr.bf16.gmra.mrb[0].mxu0 %v1151
        %v1279 = vpop.f32.mrb[0].mxu0
        %v1280 = vadd.f32 0.0, %v1279
        %v1281 = vpop.f32.mrb[0].mxu0
        %v1282 = vpop.f32.mrb[0].mxu0
        %v1283 = vadd.f32 0.0, %v1282
        %v1284 = vpop.f32.mrb[0].mxu0
        %1285 = vmatprep.mubr.bf16.mxu0 %v1154
        %1286 = vmatmul.mubr.bf16.gmra.mrb[0].mxu0 %v1153
        %v1287 = vpop.f32.mrb[0].mxu0
        %v1288 = vadd.f32 0.0, %v1287
        %v1289 = vpop.f32.mrb[0].mxu0
        %v1290 = vpop.f32.mrb[0].mxu0
        %v1291 = vadd.f32 0.0, %v1290
        %v1292 = vpop.f32.mrb[0].mxu0
        %1293 = vmatprep.mubr.bf16.mxu0 %v1156
        %1294 = vmatmul.mubr.bf16.gmra.mrb[0].mxu0 %v1155
        %v1295 = vpop.f32.mrb[0].mxu0
        %v1296 = vadd.f32 0.0, %v1295
        %v1297 = vpop.f32.mrb[0].mxu0
        %v1298 = vpop.f32.mrb[0].mxu0
        %v1299 = vadd.f32 0.0, %v1298
        %v1300 = vpop.f32.mrb[0].mxu0
        %1301 = vmatprep.mubr.bf16.mxu0 %v1158
        %1302 = vmatmul.mubr.bf16.gmra.mrb[0].mxu0 %v1157
        %v1303 = vpop.f32.mrb[0].mxu0
        %v1304 = vadd.f32 0.0, %v1303
        %v1305 = vpop.f32.mrb[0].mxu0
        %v1306 = vpop.f32.mrb[0].mxu0
        %v1307 = vadd.f32 0.0, %v1306
        %v1308 = vpop.f32.mrb[0].mxu0
        %1309 = vmatprep.mubr.bf16.mxu0 %v1160
        %1310 = vmatmul.mubr.bf16.gmra.mrb[0].mxu0 %v1159
        %v1311 = vpop.f32.mrb[0].mxu0
        %v1312 = vadd.f32 0.0, %v1311
        %v1313 = vpop.f32.mrb[0].mxu0
        %v1314 = vpop.f32.mrb[0].mxu0
        %v1315 = vadd.f32 0.0, %v1314
        %v1316 = vpop.f32.mrb[0].mxu0
        %1317 = vmatprep.mubr.bf16.mxu0 %v1162
        %1318 = vmatmul.mubr.bf16.gmra.mrb[0].mxu0 %v1161
        %v1319 = vpop.f32.mrb[0].mxu0
        %v1320 = vadd.f32 0.0, %v1319
        %v1321 = vpop.f32.mrb[0].mxu0
        %v1322 = vpop.f32.mrb[0].mxu0
        %v1323 = vadd.f32 0.0, %v1322
        %v1324 = vpop.f32.mrb[0].mxu0
        %1325 = vmatprep.mubr.bf16.mxu0 %v1164
        %1326 = vmatmul.mubr.bf16.gmra.mrb[0].mxu0 %v1163
        %v1327 = vpop.f32.mrb[0].mxu0
        %v1328 = vadd.f32 0.0, %v1327
        %v1329 = vpop.f32.mrb[0].mxu0
        %v1330 = vpop.f32.mrb[0].mxu0
        %v1331 = vadd.f32 0.0, %v1330
        %v1332 = vpop.f32.mrb[0].mxu0
        %1333 = vmatprep.mubr.bf16.mxu0 %v1166
        %1334 = vmatmul.mubr.bf16.gmra.mrb[0].mxu0 %v1165
        %v1335 = vpop.f32.mrb[0].mxu0
        %v1336 = vadd.f32 0.0, %v1335
        %v1337 = vpop.f32.mrb[0].mxu0
        %v1338 = vpop.f32.mrb[0].mxu0
        %v1339 = vadd.f32 0.0, %v1338
        %v1340 = vpop.f32.mrb[0].mxu0
        %1341 = vmatprep.mubr.bf16.mxu0 %v1168
        %1342 = vmatmul.mubr.bf16.gmra.mrb[0].mxu0 %v1167
        %v1343 = vpop.f32.mrb[0].mxu0
        %v1344 = vadd.f32 0.0, %v1343
        %v1345 = vpop.f32.mrb[0].mxu0
        %v1346 = vpop.f32.mrb[0].mxu0
        %v1347 = vadd.f32 0.0, %v1346
        %v1348 = vpop.f32.mrb[0].mxu0
        %1349 = vmatprep.mubr.bf16.mxu0 %v1170
        %1350 = vmatmul.mubr.bf16.gmra.mrb[0].mxu0 %v1169
        %v1351 = vpop.f32.mrb[0].mxu0
        %v1352 = vadd.f32 0.0, %v1351
        %v1353 = vpop.f32.mrb[0].mxu0
        %v1354 = vpop.f32.mrb[0].mxu0
        %v1355 = vadd.f32 0.0, %v1354
        %v1356 = vpop.f32.mrb[0].mxu0
        %1357 = vmatprep.mubr.bf16.mxu0 %v1172
        %1358 = vmatmul.mubr.bf16.gmra.mrb[0].mxu0 %v1171
        %v1359 = vpop.f32.mrb[0].mxu0
        %v1360 = vadd.f32 0.0, %v1359
        %v1361 = vpop.f32.mrb[0].mxu0
        %v1362 = vpop.f32.mrb[0].mxu0
        %v1363 = vadd.f32 0.0, %v1362
        %v1364 = vpop.f32.mrb[0].mxu0
        %1365 = vdwg.mxu0
        %v1366 = vadd.f32 %v981, %v1240
        %v1367 = vadd.f32 %v982, %v1243
        %v1368 = vadd.f32 %v983, %v1248
        %v1369 = vadd.f32 %v984, %v1251
        %v1370 = vadd.f32 %v985, %v1256
        %v1371 = vadd.f32 %v986, %v1259
        %v1372 = vadd.f32 %v987, %v1264
        %v1373 = vadd.f32 %v988, %v1267
        %v1374 = vadd.f32 %v989, %v1272
        %v1375 = vadd.f32 %v990, %v1275
        %v1376 = vadd.f32 %v991, %v1280
        %v1377 = vadd.f32 %v992, %v1283
        %v1378 = vadd.f32 %v993, %v1288
        %v1379 = vadd.f32 %v994, %v1291
        %v1380 = vadd.f32 %v995, %v1296
        %v1381 = vadd.f32 %v996, %v1299
        %v1382 = vadd.f32 %v997, %v1304
        %v1383 = vadd.f32 %v998, %v1307
        %v1384 = vadd.f32 %v999, %v1312
        %v1385 = vadd.f32 %v1000, %v1315
        %v1386 = vadd.f32 %v1001, %v1320
        %v1387 = vadd.f32 %v1002, %v1323
        %v1388 = vadd.f32 %v1003, %v1328
        %v1389 = vadd.f32 %v1004, %v1331
        %v1390 = vadd.f32 %v1005, %v1336
        %v1391 = vadd.f32 %v1006, %v1339
        %v1392 = vadd.f32 %v1007, %v1344
        %v1393 = vadd.f32 %v1008, %v1347
        %v1394 = vadd.f32 %v1009, %v1352
        %v1395 = vadd.f32 %v1010, %v1355
        %v1396 = vadd.f32 %v1011, %v1360
        %v1397 = vadd.f32 %v1012, %v1363
        %1398 = vst [vmem:[#allocation2] sm:$0xff] %v1366
        %1399 = vst [vmem:[#allocation2 + $0x8] sm:$0xff] %v1367
        %1400 = vst [vmem:[#allocation2 + $0x10] sm:$0xff] %v1368
        %1401 = vst [vmem:[#allocation2 + $0x18] sm:$0xff] %v1369
        %1402 = vst [vmem:[#allocation2 + $0x20] sm:$0xff] %v1370
        %1403 = vst [vmem:[#allocation2 + $0x28] sm:$0xff] %v1371
        %1404 = vst [vmem:[#allocation2 + $0x30] sm:$0xff] %v1372
        %1405 = vst [vmem:[#allocation2 + $0x38] sm:$0xff] %v1373
        %1406 = vst [vmem:[#allocation2 + $0x40] sm:$0xff] %v1374
        %1407 = vst [vmem:[#allocation2 + $0x48] sm:$0xff] %v1375
        %1408 = vst [vmem:[#allocation2 + $0x50] sm:$0xff] %v1376
        %1409 = vst [vmem:[#allocation2 + $0x58] sm:$0xff] %v1377
        %1410 = vst [vmem:[#allocation2 + $0x60] sm:$0xff] %v1378
        %1411 = vst [vmem:[#allocation2 + $0x68] sm:$0xff] %v1379
        %1412 = vst [vmem:[#allocation2 + $0x70] sm:$0xff] %v1380
        %1413 = vst [vmem:[#allocation2 + $0x78] sm:$0xff] %v1381
        %1414 = vst [vmem:[#allocation2 + $0x80] sm:$0xff] %v1382
        %1415 = vst [vmem:[#allocation2 + $0x88] sm:$0xff] %v1383
        %1416 = vst [vmem:[#allocation2 + $0x90] sm:$0xff] %v1384
        %1417 = vst [vmem:[#allocation2 + $0x98] sm:$0xff] %v1385
        %1418 = vst [vmem:[#allocation2 + $0xa0] sm:$0xff] %v1386
        %1419 = vst [vmem:[#allocation2 + $0xa8] sm:$0xff] %v1387
        %1420 = vst [vmem:[#allocation2 + $0xb0] sm:$0xff] %v1388
        %1421 = vst [vmem:[#allocation2 + $0xb8] sm:$0xff] %v1389
        %1422 = vst [vmem:[#allocation2 + $0xc0] sm:$0xff] %v1390
        %1423 = vst [vmem:[#allocation2 + $0xc8] sm:$0xff] %v1391
        %1424 = vst [vmem:[#allocation2 + $0xd0] sm:$0xff] %v1392
        %1425 = vst [vmem:[#allocation2 + $0xd8] sm:$0xff] %v1393
        %1426 = vst [vmem:[#allocation2 + $0xe0] sm:$0xff] %v1394
        %1427 = vst [vmem:[#allocation2 + $0xe8] sm:$0xff] %v1395
        %1428 = vst [vmem:[#allocation2 + $0xf0] sm:$0xff] %v1396
        %1429 = vst [vmem:[#allocation2 + $0xf8] sm:$0xff] %v1397
        %p1430 = scmp.eq.s32.totalorder %s25, 1
        // Predicated region
        $region125: #{additive_coupling_forward.3} parent=111 // pred_check
          %p1431 = pneg %p1430
        $region126: #{additive_coupling_forward.3} parent=111 // pred_check_branch
          %1433 = sbr.rel (%p1431) target = $region128
        $region127: #{additive_coupling_forward.3} parent=111 // pred_region
          %v1434 = vld [vmem:[%s651] sm:$0xff]
          %v1435 = vld [vmem:[%s651 + $0x8] sm:$0xff]
          %v1436 = vld [vmem:[%s651 + $0x10] sm:$0xff]
          %v1437 = vld [vmem:[%s651 + $0x18] sm:$0xff]
          %v1438 = vld [vmem:[%s651 + $0x20] sm:$0xff]
          %v1439 = vld [vmem:[%s651 + $0x28] sm:$0xff]
          %v1440 = vld [vmem:[%s651 + $0x30] sm:$0xff]
          %v1441 = vld [vmem:[%s651 + $0x38] sm:$0xff]
          %v1442 = vld [vmem:[%s651 + $0x40] sm:$0xff]
          %v1443 = vld [vmem:[%s651 + $0x48] sm:$0xff]
          %v1444 = vld [vmem:[%s651 + $0x50] sm:$0xff]
          %v1445 = vld [vmem:[%s651 + $0x58] sm:$0xff]
          %v1446 = vld [vmem:[%s651 + $0x60] sm:$0xff]
          %v1447 = vld [vmem:[%s651 + $0x68] sm:$0xff]
          %v1448 = vld [vmem:[%s651 + $0x70] sm:$0xff]
          %v1449 = vld [vmem:[%s651 + $0x78] sm:$0xff]
          %v1450 = vld [vmem:[%s651 + $0x80] sm:$0xff]
          %v1451 = vld [vmem:[%s651 + $0x88] sm:$0xff]
          %v1452 = vld [vmem:[%s651 + $0x90] sm:$0xff]
          %v1453 = vld [vmem:[%s651 + $0x98] sm:$0xff]
          %v1454 = vld [vmem:[%s651 + $0xa0] sm:$0xff]
          %v1455 = vld [vmem:[%s651 + $0xa8] sm:$0xff]
          %v1456 = vld [vmem:[%s651 + $0xb0] sm:$0xff]
          %v1457 = vld [vmem:[%s651 + $0xb8] sm:$0xff]
          %v1458 = vld [vmem:[%s651 + $0xc0] sm:$0xff]
          %v1459 = vld [vmem:[%s651 + $0xc8] sm:$0xff]
          %v1460 = vld [vmem:[%s651 + $0xd0] sm:$0xff]
          %v1461 = vld [vmem:[%s651 + $0xd8] sm:$0xff]
          %v1462 = vld [vmem:[%s651 + $0xe0] sm:$0xff]
          %v1463 = vld [vmem:[%s651 + $0xe8] sm:$0xff]
          %v1464 = vld [vmem:[%s651 + $0xf0] sm:$0xff]
          %v1465 = vld [vmem:[%s651 + $0xf8] sm:$0xff]
          %1466 = vst [vmem:[%s638] sm:$0xff] %v1434
          %1467 = vst [vmem:[%s638 + $0x10] sm:$0xff] %v1435
          %1468 = vst [vmem:[%s638 + $0x20] sm:$0xff] %v1436
          %1469 = vst [vmem:[%s638 + $0x30] sm:$0xff] %v1437
          %1470 = vst [vmem:[%s638 + $0x40] sm:$0xff] %v1438
          %1471 = vst [vmem:[%s638 + $0x50] sm:$0xff] %v1439
          %1472 = vst [vmem:[%s638 + $0x60] sm:$0xff] %v1440
          %1473 = vst [vmem:[%s638 + $0x70] sm:$0xff] %v1441
          %1474 = vst [vmem:[%s638 + $0x80] sm:$0xff] %v1442
          %1475 = vst [vmem:[%s638 + $0x90] sm:$0xff] %v1443
          %1476 = vst [vmem:[%s638 + $0xa0] sm:$0xff] %v1444
          %1477 = vst [vmem:[%s638 + $0xb0] sm:$0xff] %v1445
          %1478 = vst [vmem:[%s638 + $0xc0] sm:$0xff] %v1446
          %1479 = vst [vmem:[%s638 + $0xd0] sm:$0xff] %v1447
          %1480 = vst [vmem:[%s638 + $0xe0] sm:$0xff] %v1448
          %1481 = vst [vmem:[%s638 + $0xf0] sm:$0xff] %v1449
          %1482 = vst [vmem:[%s638 + $0x100] sm:$0xff] %v1450
          %1483 = vst [vmem:[%s638 + $0x110] sm:$0xff] %v1451
          %1484 = vst [vmem:[%s638 + $0x120] sm:$0xff] %v1452
          %1485 = vst [vmem:[%s638 + $0x130] sm:$0xff] %v1453
          %1486 = vst [vmem:[%s638 + $0x140] sm:$0xff] %v1454
          %1487 = vst [vmem:[%s638 + $0x150] sm:$0xff] %v1455
          %1488 = vst [vmem:[%s638 + $0x160] sm:$0xff] %v1456
          %1489 = vst [vmem:[%s638 + $0x170] sm:$0xff] %v1457
          %1490 = vst [vmem:[%s638 + $0x180] sm:$0xff] %v1458
          %1491 = vst [vmem:[%s638 + $0x190] sm:$0xff] %v1459
          %1492 = vst [vmem:[%s638 + $0x1a0] sm:$0xff] %v1460
          %1493 = vst [vmem:[%s638 + $0x1b0] sm:$0xff] %v1461
          %1494 = vst [vmem:[%s638 + $0x1c0] sm:$0xff] %v1462
          %1495 = vst [vmem:[%s638 + $0x1d0] sm:$0xff] %v1463
          %1496 = vst [vmem:[%s638 + $0x1e0] sm:$0xff] %v1464
          %1497 = vst [vmem:[%s638 + $0x1f0] sm:$0xff] %v1465
          %v1498 = vld [vmem:[%s598] sm:$0xff]
          %v1499 = vld [vmem:[%s598 + $0x8] sm:$0xff]
          %v1500 = vld [vmem:[%s598 + $0x10] sm:$0xff]
          %v1501 = vld [vmem:[%s598 + $0x18] sm:$0xff]
          %v1502 = vld [vmem:[%s598 + $0x20] sm:$0xff]
          %v1503 = vld [vmem:[%s598 + $0x28] sm:$0xff]
          %v1504 = vld [vmem:[%s598 + $0x30] sm:$0xff]
          %v1505 = vld [vmem:[%s598 + $0x38] sm:$0xff]
          %v1506 = vld [vmem:[%s598 + $0x40] sm:$0xff]
          %v1507 = vld [vmem:[%s598 + $0x48] sm:$0xff]
          %v1508 = vld [vmem:[%s598 + $0x50] sm:$0xff]
          %v1509 = vld [vmem:[%s598 + $0x58] sm:$0xff]
          %v1510 = vld [vmem:[%s598 + $0x60] sm:$0xff]
          %v1511 = vld [vmem:[%s598 + $0x68] sm:$0xff]
          %v1512 = vld [vmem:[%s598 + $0x70] sm:$0xff]
          %v1513 = vld [vmem:[%s598 + $0x78] sm:$0xff]
          %v1514 = vld [vmem:[%s598 + $0x80] sm:$0xff]
          %v1515 = vld [vmem:[%s598 + $0x88] sm:$0xff]
          %v1516 = vld [vmem:[%s598 + $0x90] sm:$0xff]
          %v1517 = vld [vmem:[%s598 + $0x98] sm:$0xff]
          %v1518 = vld [vmem:[%s598 + $0xa0] sm:$0xff]
          %v1519 = vld [vmem:[%s598 + $0xa8] sm:$0xff]
          %v1520 = vld [vmem:[%s598 + $0xb0] sm:$0xff]
          %v1521 = vld [vmem:[%s598 + $0xb8] sm:$0xff]
          %v1522 = vld [vmem:[%s598 + $0xc0] sm:$0xff]
          %v1523 = vld [vmem:[%s598 + $0xc8] sm:$0xff]
          %v1524 = vld [vmem:[%s598 + $0xd0] sm:$0xff]
          %v1525 = vld [vmem:[%s598 + $0xd8] sm:$0xff]
          %v1526 = vld [vmem:[%s598 + $0xe0] sm:$0xff]
          %v1527 = vld [vmem:[%s598 + $0xe8] sm:$0xff]
          %v1528 = vld [vmem:[%s598 + $0xf0] sm:$0xff]
          %v1529 = vld [vmem:[%s598 + $0xf8] sm:$0xff]
          %v1530 = vld [vmem:[#allocation2] sm:$0xff]
          %v1531 = vld [vmem:[#allocation2 + $0x8] sm:$0xff]
          %v1532 = vld [vmem:[#allocation2 + $0x10] sm:$0xff]
          %v1533 = vld [vmem:[#allocation2 + $0x18] sm:$0xff]
          %v1534 = vld [vmem:[#allocation2 + $0x20] sm:$0xff]
          %v1535 = vld [vmem:[#allocation2 + $0x28] sm:$0xff]
          %v1536 = vld [vmem:[#allocation2 + $0x30] sm:$0xff]
          %v1537 = vld [vmem:[#allocation2 + $0x38] sm:$0xff]
          %v1538 = vld [vmem:[#allocation2 + $0x40] sm:$0xff]
          %v1539 = vld [vmem:[#allocation2 + $0x48] sm:$0xff]
          %v1540 = vld [vmem:[#allocation2 + $0x50] sm:$0xff]
          %v1541 = vld [vmem:[#allocation2 + $0x58] sm:$0xff]
          %v1542 = vld [vmem:[#allocation2 + $0x60] sm:$0xff]
          %v1543 = vld [vmem:[#allocation2 + $0x68] sm:$0xff]
          %v1544 = vld [vmem:[#allocation2 + $0x70] sm:$0xff]
          %v1545 = vld [vmem:[#allocation2 + $0x78] sm:$0xff]
          %v1546 = vld [vmem:[#allocation2 + $0x80] sm:$0xff]
          %v1547 = vld [vmem:[#allocation2 + $0x88] sm:$0xff]
          %v1548 = vld [vmem:[#allocation2 + $0x90] sm:$0xff]
          %v1549 = vld [vmem:[#allocation2 + $0x98] sm:$0xff]
          %v1550 = vld [vmem:[#allocation2 + $0xa0] sm:$0xff]
          %v1551 = vld [vmem:[#allocation2 + $0xa8] sm:$0xff]
          %v1552 = vld [vmem:[#allocation2 + $0xb0] sm:$0xff]
          %v1553 = vld [vmem:[#allocation2 + $0xb8] sm:$0xff]
          %v1554 = vld [vmem:[#allocation2 + $0xc0] sm:$0xff]
          %v1555 = vld [vmem:[#allocation2 + $0xc8] sm:$0xff]
          %v1556 = vld [vmem:[#allocation2 + $0xd0] sm:$0xff]
          %v1557 = vld [vmem:[#allocation2 + $0xd8] sm:$0xff]
          %v1558 = vld [vmem:[#allocation2 + $0xe0] sm:$0xff]
          %v1559 = vld [vmem:[#allocation2 + $0xe8] sm:$0xff]
          %v1560 = vld [vmem:[#allocation2 + $0xf0] sm:$0xff]
          %v1561 = vld [vmem:[#allocation2 + $0xf8] sm:$0xff]
          %v1562 = vadd.f32 %v1498, %v1530
          %v1563 = vadd.f32 %v1499, %v1531
          %v1564 = vadd.f32 %v1500, %v1532
          %v1565 = vadd.f32 %v1501, %v1533
          %v1566 = vadd.f32 %v1502, %v1534
          %v1567 = vadd.f32 %v1503, %v1535
          %v1568 = vadd.f32 %v1504, %v1536
          %v1569 = vadd.f32 %v1505, %v1537
          %v1570 = vadd.f32 %v1506, %v1538
          %v1571 = vadd.f32 %v1507, %v1539
          %v1572 = vadd.f32 %v1508, %v1540
          %v1573 = vadd.f32 %v1509, %v1541
          %v1574 = vadd.f32 %v1510, %v1542
          %v1575 = vadd.f32 %v1511, %v1543
          %v1576 = vadd.f32 %v1512, %v1544
          %v1577 = vadd.f32 %v1513, %v1545
          %v1578 = vadd.f32 %v1514, %v1546
          %v1579 = vadd.f32 %v1515, %v1547
          %v1580 = vadd.f32 %v1516, %v1548
          %v1581 = vadd.f32 %v1517, %v1549
          %v1582 = vadd.f32 %v1518, %v1550
          %v1583 = vadd.f32 %v1519, %v1551
          %v1584 = vadd.f32 %v1520, %v1552
          %v1585 = vadd.f32 %v1521, %v1553
          %v1586 = vadd.f32 %v1522, %v1554
          %v1587 = vadd.f32 %v1523, %v1555
          %v1588 = vadd.f32 %v1524, %v1556
          %v1589 = vadd.f32 %v1525, %v1557
          %v1590 = vadd.f32 %v1526, %v1558
          %v1591 = vadd.f32 %v1527, %v1559
          %v1592 = vadd.f32 %v1528, %v1560
          %v1593 = vadd.f32 %v1529, %v1561
          %v1594 = vld [vmem:[%s5] sm:$0x1]
          %v1596 = vlaneseq
          %v1597 = vshrl.u32 %v1596, 7
          %v1598 = vsub.s32 0, %v1597
          %v1599 = vrot.slane %v1594, %v1598
          %v1601 = vadd.f32 %v1562, %v1599
          %v1602 = vadd.f32 %v1563, %v1599
          %v1603 = vadd.f32 %v1564, %v1599
          %v1604 = vadd.f32 %v1565, %v1599
          %v1605 = vadd.f32 %v1566, %v1599
          %v1606 = vadd.f32 %v1567, %v1599
          %v1607 = vadd.f32 %v1568, %v1599
          %v1608 = vadd.f32 %v1569, %v1599
          %v1609 = vadd.f32 %v1570, %v1599
          %v1610 = vadd.f32 %v1571, %v1599
          %v1611 = vadd.f32 %v1572, %v1599
          %v1612 = vadd.f32 %v1573, %v1599
          %v1613 = vadd.f32 %v1574, %v1599
          %v1614 = vadd.f32 %v1575, %v1599
          %v1615 = vadd.f32 %v1576, %v1599
          %v1616 = vadd.f32 %v1577, %v1599
          %v1617 = vadd.f32 %v1578, %v1599
          %v1618 = vadd.f32 %v1579, %v1599
          %v1619 = vadd.f32 %v1580, %v1599
          %v1620 = vadd.f32 %v1581, %v1599
          %v1621 = vadd.f32 %v1582, %v1599
          %v1622 = vadd.f32 %v1583, %v1599
          %v1623 = vadd.f32 %v1584, %v1599
          %v1624 = vadd.f32 %v1585, %v1599
          %v1625 = vadd.f32 %v1586, %v1599
          %v1626 = vadd.f32 %v1587, %v1599
          %v1627 = vadd.f32 %v1588, %v1599
          %v1628 = vadd.f32 %v1589, %v1599
          %v1629 = vadd.f32 %v1590, %v1599
          %v1630 = vadd.f32 %v1591, %v1599
          %v1631 = vadd.f32 %v1592, %v1599
          %v1632 = vadd.f32 %v1593, %v1599
          %1633 = vst [vmem:[%s638 + $0x8] sm:$0xff] %v1601
          %1634 = vst [vmem:[%s638 + $0x18] sm:$0xff] %v1602
          %1635 = vst [vmem:[%s638 + $0x28] sm:$0xff] %v1603
          %1636 = vst [vmem:[%s638 + $0x38] sm:$0xff] %v1604
          %1637 = vst [vmem:[%s638 + $0x48] sm:$0xff] %v1605
          %1638 = vst [vmem:[%s638 + $0x58] sm:$0xff] %v1606
          %1639 = vst [vmem:[%s638 + $0x68] sm:$0xff] %v1607
          %1640 = vst [vmem:[%s638 + $0x78] sm:$0xff] %v1608
          %1641 = vst [vmem:[%s638 + $0x88] sm:$0xff] %v1609
          %1642 = vst [vmem:[%s638 + $0x98] sm:$0xff] %v1610
          %1643 = vst [vmem:[%s638 + $0xa8] sm:$0xff] %v1611
          %1644 = vst [vmem:[%s638 + $0xb8] sm:$0xff] %v1612
          %1645 = vst [vmem:[%s638 + $0xc8] sm:$0xff] %v1613
          %1646 = vst [vmem:[%s638 + $0xd8] sm:$0xff] %v1614
          %1647 = vst [vmem:[%s638 + $0xe8] sm:$0xff] %v1615
          %1648 = vst [vmem:[%s638 + $0xf8] sm:$0xff] %v1616
          %1649 = vst [vmem:[%s638 + $0x108] sm:$0xff] %v1617
          %1650 = vst [vmem:[%s638 + $0x118] sm:$0xff] %v1618
          %1651 = vst [vmem:[%s638 + $0x128] sm:$0xff] %v1619
          %1652 = vst [vmem:[%s638 + $0x138] sm:$0xff] %v1620
          %1653 = vst [vmem:[%s638 + $0x148] sm:$0xff] %v1621
          %1654 = vst [vmem:[%s638 + $0x158] sm:$0xff] %v1622
          %1655 = vst [vmem:[%s638 + $0x168] sm:$0xff] %v1623
          %1656 = vst [vmem:[%s638 + $0x178] sm:$0xff] %v1624
          %1657 = vst [vmem:[%s638 + $0x188] sm:$0xff] %v1625
          %1658 = vst [vmem:[%s638 + $0x198] sm:$0xff] %v1626
          %1659 = vst [vmem:[%s638 + $0x1a8] sm:$0xff] %v1627
          %1660 = vst [vmem:[%s638 + $0x1b8] sm:$0xff] %v1628
          %1661 = vst [vmem:[%s638 + $0x1c8] sm:$0xff] %v1629
          %1662 = vst [vmem:[%s638 + $0x1d8] sm:$0xff] %v1630
          %1663 = vst [vmem:[%s638 + $0x1e8] sm:$0xff] %v1631
          %1664 = vst [vmem:[%s638 + $0x1f8] sm:$0xff] %v1632
        $region128: #{additive_coupling_forward.3} parent=111 // pred_fallthru
          _
        %s1665 = sand.u32 %s188, 1
        %s1666 = scalar_lea.sflag [#allocation6], %s1665
        %s1667 = sand.u32 %s188, 1
        %s1668 = smul.addr %s1667, 512
        %s1669 = scalar_lea.vmem [#allocation5], %s1668
        // Predicated region
        $region129: #{additive_coupling_forward.3} parent=111 // pred_check
          %p1670 = pneg %p198
        $region130: #{additive_coupling_forward.3} parent=111 // pred_check_branch
          %1672 = sbr.rel (%p1670) target = $region132
        $region131: #{additive_coupling_forward.3} parent=111 // pred_region
          %s1673 = smul.u32 32, %s24
          %s1675 = ssub.s32 8192, 8192
          %1676 = vsyncadd %s1666, %s1675
          %s1677 = smul.addr %s1673, 2
          %s1678 = smul.addr %s1677, 128
          %s1679 = scalar_lea.hbm %s6, %s1678
          %s1680 = sshll.u32 %s1669, 4
          %s1681 = int_to_ptr.vmem [resolvable:$true] %s1680
          %1686 = dma.vmem_to_hbm [thread:$0]  %s1681, 8192, %s1679, %s1666, 256, 256, 16
        $region132: #{additive_coupling_forward.3} parent=111 // pred_fallthru
          _
      $region112: #{additive_coupling_forward.3} parent=5 // pred_fallthru
        _
      %p1687 = scmp.le.s32.totalorder 2, %s15
      // Predicated region
      $region133: #{additive_coupling_forward.3} parent=5 // pred_check
        %p1688 = pneg %p1687
      $region134: #{additive_coupling_forward.3} parent=5 // pred_check_branch
        %1690 = sbr.rel (%p1688) target = $region136
      $region135: #{additive_coupling_forward.3} parent=5 // pred_region
        %s1691 = ssub.s32 %s15, 2
        // Predicated region
        $region137: #{additive_coupling_forward.3} parent=135 // pred_check
          %p1692 = pneg %p204
        $region138: #{additive_coupling_forward.3} parent=135 // pred_check_branch
          %1694 = sbr.rel (%p1692) target = $region140
        $region139: #{additive_coupling_forward.3} parent=135 // pred_region
          %s1695 = sand.u32 %s189, 1
          %s1696 = scalar_lea.sflag [#allocation6], %s1695
          %s1697 = sand.u32 %s189, 1
          %s1698 = smul.addr %s1697, 512
          %s1699 = scalar_lea.vmem [#allocation5], %s1698
          %1700 = dma.done %s1696, 8192
        $region140: #{additive_coupling_forward.3} parent=135 // pred_fallthru
          _
      $region136: #{additive_coupling_forward.3} parent=5 // pred_fallthru
        _
    $region6: #{additive_coupling_forward.3} parent=1 // loop_footer
      %s19 = sadd.s32 1, %s15
    $region7: #{additive_coupling_forward.3} parent=1 // loop_footer_branch
      %14 = sbr.rel target = $region3
    $region8: #{additive_coupling_forward.3} parent=1 // loop_exit
      _
    %1701 = vsyncpa [#allocation6], 1
    %s1702 = scalar_lea.sflag [#allocation6], 1
    %1703 = vsyncpa %s1702, 1

</llo_original>
